<compile_context>
chip_gen: v6e
topology: v6e:2x2x1
jax: 0.10.0
libtpu: 0.0.40
codegen_flags: <defaults>
</compile_context>

<pallas_src>
import functools
import numpy as np

import jax
import jax.numpy as jnp
from jax import lax
from jax.experimental import pallas as pl
from jax.experimental.pallas import tpu as pltpu


# -----------------------------------------------------------------------------
# Fused bidirectional GRU recurrence kernel.
# Inputs are laid out time-major (T, B, F) so each timestep is a leading-axis
# (static) index.  gi_* = x @ Wih^T + bih is precomputed outside (one big matmul);
# only h @ Whh^T stays in the serial loop.  Hidden states live in VMEM scratch.
# -----------------------------------------------------------------------------
def _bigru_kernel(gi_f_ref, gi_b_ref, len_ref, whh_f_ref, whh_b_ref,
                  bhh_f_ref, bhh_b_ref, out_f_ref, out_b_ref, hf_ref, hb_ref):
    T = gi_f_ref.shape[0]
    H = hf_ref.shape[1]

    hf_ref[...] = jnp.zeros_like(hf_ref)
    hb_ref[...] = jnp.zeros_like(hb_ref)

    lens = len_ref[...]                                   # (B, 1) int32
    whh_f = whh_f_ref[...]                                # (H, 3H)
    whh_b = whh_b_ref[...]
    bhh_f = bhh_f_ref[...]                                # (1, 3H)
    bhh_b = bhh_b_ref[...]

    def gru_cell(gi, h, whh, bhh):
        gh = jnp.dot(h, whh, preferred_element_type=jnp.float32) + bhh
        r = jax.nn.sigmoid(gi[:, 0:H] + gh[:, 0:H])
        z = jax.nn.sigmoid(gi[:, H:2 * H] + gh[:, H:2 * H])
        n = jnp.tanh(gi[:, 2 * H:3 * H] + r * gh[:, 2 * H:3 * H])
        return (1.0 - z) * n + z * h

    # Static (unrolled) loop over time; both directions share each iteration.
    for t in range(T):
        # forward direction, time t
        h = hf_ref[...]
        h_new = gru_cell(gi_f_ref[t], h, whh_f, bhh_f)
        m = (lens > t).astype(jnp.float32)                # (B, 1)
        hf_ref[...] = m * h_new + (1.0 - m) * h           # freeze past length
        out_f_ref[t] = m * h_new                          # zeros past length

        # backward direction, time T-1-t (starts at last valid step per row)
        tb = T - 1 - t
        hb = hb_ref[...]
        hb_new = gru_cell(gi_b_ref[tb], hb, whh_b, bhh_b)
        mb = (lens > tb).astype(jnp.float32)
        hb_ref[...] = mb * hb_new + (1.0 - mb) * hb
        out_b_ref[tb] = mb * hb_new


def bigru(x, lengths, p):
    """Bidirectional GRU with packed-sequence semantics.

    x: (B, T, I) -> flattened states (T*B, 2H) with row r = t*B + b.
    """
    B, T, I = x.shape
    H = p['whh_f'].shape[1]

    # Hoisted input projections: one batched matmul per direction (plain XLA),
    # produced directly in time-major layout for the kernel.
    gi_f = jnp.einsum('bti,gi->tbg', x, p['wih_f']) + p['bih_f']     # (T, B, 3H)
    gi_b = jnp.einsum('bti,gi->tbg', x, p['wih_b']) + p['bih_b']     # (T, B, 3H)
    lens2d = lengths.astype(jnp.int32).reshape(B, 1)

    out_f, out_b = pl.pallas_call(
        _bigru_kernel,
        out_shape=(jax.ShapeDtypeStruct((T, B, H), jnp.float32),
                   jax.ShapeDtypeStruct((T, B, H), jnp.float32)),
        grid=(1,),
        in_specs=[
            pl.BlockSpec((T, B, 3 * H), lambda i: (0, 0, 0)),
            pl.BlockSpec((T, B, 3 * H), lambda i: (0, 0, 0)),
            pl.BlockSpec((B, 1), lambda i: (0, 0)),
            pl.BlockSpec((H, 3 * H), lambda i: (0, 0)),
            pl.BlockSpec((H, 3 * H), lambda i: (0, 0)),
            pl.BlockSpec((1, 3 * H), lambda i: (0, 0)),
            pl.BlockSpec((1, 3 * H), lambda i: (0, 0)),
        ],
        out_specs=(pl.BlockSpec((T, B, H), lambda i: (0, 0, 0)),
                   pl.BlockSpec((T, B, H), lambda i: (0, 0, 0))),
        scratch_shapes=[pltpu.VMEM((B, H), jnp.float32),
                        pltpu.VMEM((B, H), jnp.float32)],
        compiler_params=pltpu.CompilerParams(dimension_semantics=("arbitrary",)),
    )(gi_f, gi_b, lens2d, p['whh_f'].T, p['whh_b'].T,
      p['bhh_f'][None, :], p['bhh_b'][None, :])

    # (T, B, 2H) -> (T*B, 2H); contiguous reshape, row r = t*B + b
    states_flat = jnp.concatenate([out_f, out_b], axis=-1).reshape(T * B, 2 * H)
    return states_flat


# -----------------------------------------------------------------------------
# Fused attention pooling kernel over the WHOLE batch in one grid step:
#   pre    = tanh(S @ W^T + b)                      (one (T*B, D) x (D, D) matmul)
#   logits = sum(pre * ctx, axis=-1), masked by length
#   e      = exp(logits - global_max)               (masked rows -> 0)
#   out    = (seg @ (e * [S | 1]))[:, :D] / (seg @ (e * [S | 1]))[:, D]
# seg is a (B, T*B) 0/1 segment matrix selecting each document's rows, so the
# per-document softmax denominator and weighted sum come from one matmul.
# -----------------------------------------------------------------------------
def _attn_kernel(saug_ref, trow_ref, lens_ref, seg_ref, w_ref, b_ref, ctx_ref, out_ref):
    D = w_ref.shape[0]
    s_aug = saug_ref[...]                                             # (TB, D+1)
    s = s_aug[:, 0:D]                                                 # (TB, D)

    pre = jnp.tanh(jnp.dot(s, w_ref[...], preferred_element_type=jnp.float32)
                   + b_ref[...])
    logits = jnp.sum(pre * ctx_ref[...], axis=-1, keepdims=True)      # (TB, 1)

    valid = trow_ref[...] < lens_ref[...]                             # (TB, 1) bool
    logits = jnp.where(valid, logits, jnp.float32(-1e30))

    gmax = jnp.max(logits, axis=0, keepdims=True)                     # (1, 1) global max
    e = jnp.exp(logits - gmax)                                        # masked rows -> 0

    pooled = jnp.dot(seg_ref[...], e * s_aug,
                     preferred_element_type=jnp.float32)              # (B, D+1)
    num = pooled[:, 0:D]
    den = pooled[:, D:D + 1]
    out_ref[...] = num * pl.reciprocal(den, approx=True)


def masked_attention_pool(states_flat, lengths, T, B, w, bias, ctx):
    """states_flat: (T*B, D) with row r = t*B + b; returns (B, D)."""
    TB, D = states_flat.shape

    # Augment with a ones column so the segment matmul yields num and denom together.
    s_aug = jnp.concatenate([states_flat, jnp.ones((TB, 1), jnp.float32)], axis=1)

    t_rows = jnp.asarray(np.repeat(np.arange(T, dtype=np.int32), B)).reshape(TB, 1)
    lens_rows = jnp.tile(lengths.astype(jnp.int32), T).reshape(TB, 1)
    r = np.arange(TB)
    seg = jnp.asarray((r[None, :] % B == np.arange(B)[:, None]).astype(np.float32))  # (B, TB)

    out = pl.pallas_call(
        _attn_kernel,
        out_shape=jax.ShapeDtypeStruct((B, D), jnp.float32),
        grid=(1,),
        in_specs=[
            pl.BlockSpec((TB, D + 1), lambda i: (0, 0)),
            pl.BlockSpec((TB, 1), lambda i: (0, 0)),
            pl.BlockSpec((TB, 1), lambda i: (0, 0)),
            pl.BlockSpec((B, TB), lambda i: (0, 0)),
            pl.BlockSpec((D, D), lambda i: (0, 0)),
            pl.BlockSpec((1, D), lambda i: (0, 0)),
            pl.BlockSpec((1, D), lambda i: (0, 0)),
        ],
        out_specs=pl.BlockSpec((B, D), lambda i: (0, 0)),
        compiler_params=pltpu.CompilerParams(dimension_semantics=("arbitrary",)),
    )(s_aug, t_rows, lens_rows, seg, w.T, bias[None, :], ctx.reshape(1, D))
    return out


def gru_attn_level(x, lengths, gru_p, proj_w, proj_b, ctx):
    """One HAN level: masked BiGRU over the sequence, then attention pooling."""
    B, T, _ = x.shape
    states_flat = bigru(x, lengths, gru_p)                  # (T*B, 2H), row = t*B + b
    return masked_attention_pool(states_flat, lengths, T, B, proj_w, proj_b, ctx)


# -----------------------------------------------------------------------------
# HAN forward (single-GPU path semantics of _forward_single, eval mode).
# -----------------------------------------------------------------------------
def han_forward(params, inp, sent_lengths, num_sent_per_document):
    # ---- word level ----
    sent_emb = gru_attn_level(inp, sent_lengths, params['word_gru'],
                              params['word_proj_w'], params['word_proj_b'],
                              params['word_ctx'])                       # (N_sent, 2Hw)

    # ---- regroup flat sentence embeddings into (batch, max_num_sent, 2Hw):
    #      single gather with precomputed indices + validity mask ----
    nums = [int(n) for n in num_sent_per_document]
    batch, max_ns = len(nums), max(nums)
    D = sent_emb.shape[1]
    idx = np.zeros((batch * max_ns,), np.int32)
    valid = np.zeros((batch * max_ns, 1), np.float32)
    off = 0
    for i, ns in enumerate(nums):
        idx[i * max_ns:i * max_ns + ns] = np.arange(off, off + ns)
        valid[i * max_ns:i * max_ns + ns, 0] = 1.0
        off += ns
    sent3d = (jnp.take(sent_emb, jnp.asarray(idx), axis=0)
              * jnp.asarray(valid)).reshape(batch, max_ns, D)

    # ---- sentence level ----
    doc_lengths = jnp.asarray(nums, jnp.int32)
    doc_emb = gru_attn_level(sent3d, doc_lengths, params['sent_gru'],
                             params['sent_proj_w'], params['sent_proj_b'],
                             params['sent_ctx'])                        # (batch, 2Hs)
    return doc_emb


# -----------------------------------------------------------------------------
# Deterministic parameter initialization (shapes match nn.GRU / nn.Linear / Parameter).
# -----------------------------------------------------------------------------
def _gru_params(key, input_dim, hidden):
    ks = jax.random.split(key, 8)
    s = 1.0 / np.sqrt(hidden)
    u = lambda kk, shape: jax.random.uniform(kk, shape, jnp.float32, -s, s)
    return {
        'wih_f': u(ks[0], (3 * hidden, input_dim)), 'whh_f': u(ks[1], (3 * hidden, hidden)),
        'bih_f': u(ks[2], (3 * hidden,)),           'bhh_f': u(ks[3], (3 * hidden,)),
        'wih_b': u(ks[4], (3 * hidden, input_dim)), 'whh_b': u(ks[5], (3 * hidden, hidden)),
        'bih_b': u(ks[6], (3 * hidden,)),           'bhh_b': u(ks[7], (3 * hidden,)),
    }


def init_params(key, embed_dim, word_hidden, sent_hidden):
    k = jax.random.split(key, 10)
    Dw, Ds = 2 * word_hidden, 2 * sent_hidden
    sw = 1.0 / np.sqrt(Dw)
    ss = 1.0 / np.sqrt(Ds)
    return {
        'word_gru': _gru_params(k[0], 2 * embed_dim, word_hidden),
        'sent_gru': _gru_params(k[1], 2 * word_hidden, sent_hidden),
        'word_proj_w': jax.random.uniform(k[2], (Dw, Dw), jnp.float32, -sw, sw),
        'word_proj_b': jax.random.uniform(k[3], (Dw,), jnp.float32, -sw, sw),
        'sent_proj_w': jax.random.uniform(k[4], (Ds, Ds), jnp.float32, -ss, ss),
        'sent_proj_b': jax.random.uniform(k[5], (Ds,), jnp.float32, -ss, ss),
        'word_ctx': jax.random.normal(k[6], (Dw, 1), jnp.float32) * sw,
        'sent_ctx': jax.random.normal(k[7], (Ds, 1), jnp.float32) * ss,
    }


if __name__ == "__main__":
    config = dict(word_lstm_dim=32, sent_lstm_dim=32, embed_dim=16, n_classes=4,
                  dropout=0.1, fc_dim=64, parallel_computing=False)

    key = jax.random.PRNGKey(0)
    k_inp, k_par = jax.random.split(key)

    # 2 documents: doc0 has 3 sentences, doc1 has 2 sentences -> 5 sentences total,
    # max 8 words per sentence, word features of size 2*embed_dim = 32.
    num_sent_per_document = [3, 2]
    sent_lengths = jnp.array([8, 5, 3, 6, 2], jnp.int32)
    N_sent, Tw, F = 5, 8, 2 * config['embed_dim']
    inp = jax.random.normal(k_inp, (N_sent, Tw, F), jnp.float32)

    params = init_params(k_par, config['embed_dim'],
                         config['word_lstm_dim'], config['sent_lstm_dim'])

    doc_embedding = han_forward(params, inp, sent_lengths, num_sent_per_document)
    doc_embedding = jax.block_until_ready(doc_embedding)

    assert doc_embedding.shape == (len(num_sent_per_document), 2 * config['sent_lstm_dim'])
    assert bool(jnp.all(jnp.isfinite(doc_embedding)))
    print("KERNEL_OK")
</pallas_src>

<mosaic_0001>
module attributes {stable_mosaic.version = 11 : i64} {
  func.func @_bigru_kernel(%arg0: i32, %arg1: memref<8x5x96xf32, #tpu.memory_space<vmem>>, %arg2: memref<8x5x96xf32, #tpu.memory_space<vmem>>, %arg3: memref<5x1xi32, #tpu.memory_space<vmem>>, %arg4: memref<32x96xf32, #tpu.memory_space<vmem>>, %arg5: memref<32x96xf32, #tpu.memory_space<vmem>>, %arg6: memref<1x96xf32, #tpu.memory_space<vmem>>, %arg7: memref<1x96xf32, #tpu.memory_space<vmem>>, %arg8: memref<8x5x32xf32, #tpu.memory_space<vmem>>, %arg9: memref<8x5x32xf32, #tpu.memory_space<vmem>>, %arg10: memref<5x32xf32, #tpu.memory_space<vmem>>, %arg11: memref<5x32xf32, #tpu.memory_space<vmem>>) attributes {dimension_semantics = [#tpu.dimension_semantics<arbitrary>], iteration_bounds = array<i64: 1>, scalar_prefetch = 0 : i64, scratch_operands = 2 : i64, tpu.core_type = #tpu.core_type<tc>, window_params = [{pipeline_mode = #tpu.pipeline_mode<synchronous>, transform_indices = @transform_0, window_bounds = array<i64: 8, 5, 96>}, {pipeline_mode = #tpu.pipeline_mode<synchronous>, transform_indices = @transform_1, window_bounds = array<i64: 8, 5, 96>}, {pipeline_mode = #tpu.pipeline_mode<synchronous>, transform_indices = @transform_2, window_bounds = array<i64: 5, 1>}, {pipeline_mode = #tpu.pipeline_mode<synchronous>, transform_indices = @transform_3, window_bounds = array<i64: 32, 96>}, {pipeline_mode = #tpu.pipeline_mode<synchronous>, transform_indices = @transform_4, window_bounds = array<i64: 32, 96>}, {pipeline_mode = #tpu.pipeline_mode<synchronous>, transform_indices = @transform_5, window_bounds = array<i64: 1, 96>}, {pipeline_mode = #tpu.pipeline_mode<synchronous>, transform_indices = @transform_6, window_bounds = array<i64: 1, 96>}, {pipeline_mode = #tpu.pipeline_mode<synchronous>, transform_indices = @transform_7, window_bounds = array<i64: 8, 5, 32>}, {pipeline_mode = #tpu.pipeline_mode<synchronous>, transform_indices = @transform_8, window_bounds = array<i64: 8, 5, 32>}]} {
    %cst = arith.constant 0.000000e+00 : f32
    %0 = vector.broadcast %cst : f32 to vector<5x32xf32>
    %c0 = arith.constant 0 : index
    %c0_0 = arith.constant 0 : index
    %1 = vector.load %arg10[%c0, %c0_0] : memref<5x32xf32, #tpu.memory_space<vmem>>, vector<5x32xf32>
    tpu.vector_store %arg10[%c0, %c0_0], %0 {strides = array<i32>} : memref<5x32xf32, #tpu.memory_space<vmem>>, vector<5x32xf32>,
    %cst_1 = arith.constant 0.000000e+00 : f32
    %2 = vector.broadcast %cst_1 : f32 to vector<5x32xf32>
    %c0_2 = arith.constant 0 : index
    %c0_3 = arith.constant 0 : index
    %3 = vector.load %arg11[%c0_2, %c0_3] : memref<5x32xf32, #tpu.memory_space<vmem>>, vector<5x32xf32>
    tpu.vector_store %arg11[%c0_2, %c0_3], %2 {strides = array<i32>} : memref<5x32xf32, #tpu.memory_space<vmem>>, vector<5x32xf32>,
    %c0_4 = arith.constant 0 : index
    %c0_5 = arith.constant 0 : index
    %4 = vector.load %arg3[%c0_4, %c0_5] : memref<5x1xi32, #tpu.memory_space<vmem>>, vector<5x1xi32>
    %c0_6 = arith.constant 0 : index
    %c0_7 = arith.constant 0 : index
    %5 = vector.load %arg4[%c0_6, %c0_7] : memref<32x96xf32, #tpu.memory_space<vmem>>, vector<32x96xf32>
    %c0_8 = arith.constant 0 : index
    %c0_9 = arith.constant 0 : index
    %6 = vector.load %arg5[%c0_8, %c0_9] : memref<32x96xf32, #tpu.memory_space<vmem>>, vector<32x96xf32>
    %c0_10 = arith.constant 0 : index
    %c0_11 = arith.constant 0 : index
    %7 = vector.load %arg6[%c0_10, %c0_11] : memref<1x96xf32, #tpu.memory_space<vmem>>, vector<1x96xf32>
    %c0_12 = arith.constant 0 : index
    %c0_13 = arith.constant 0 : index
    %8 = vector.load %arg7[%c0_12, %c0_13] : memref<1x96xf32, #tpu.memory_space<vmem>>, vector<1x96xf32>
    %c0_14 = arith.constant 0 : index
    %c0_15 = arith.constant 0 : index
    %9 = vector.load %arg10[%c0_14, %c0_15] : memref<5x32xf32, #tpu.memory_space<vmem>>, vector<5x32xf32>
    %c0_16 = arith.constant 0 : index
    %c0_17 = arith.constant 0 : index
    %c0_18 = arith.constant 0 : index
    %10 = vector.load %arg1[%c0_16, %c0_17, %c0_18] : memref<8x5x96xf32, #tpu.memory_space<vmem>>, vector<1x5x96xf32>
    %11 = vector.shape_cast %10 : vector<1x5x96xf32> to vector<5x96xf32>
    %cst_19 = arith.constant dense<0.000000e+00> : vector<5x96xf32>
    %12 = tpu.matmul %9, %5, %cst_19 {dimension_numbers = #tpu.dot_dimension_numbers<[1], [0], [0], [1], [0, 0, 1, 1], [], []>} : vector<5x32xf32>, vector<32x96xf32>, vector<5x96xf32> -> vector<5x96xf32>
    %13 = vector.broadcast %7 : vector<1x96xf32> to vector<5x96xf32>
    %14 = arith.addf %12, %13 : vector<5x96xf32>
    %15 = vector.extract_strided_slice %11 {offsets = [0, 0], sizes = [5, 32], strides = [1, 1]} : vector<5x96xf32> to vector<5x32xf32>
    %16 = vector.extract_strided_slice %14 {offsets = [0, 0], sizes = [5, 32], strides = [1, 1]} : vector<5x96xf32> to vector<5x32xf32>
    %17 = arith.addf %15, %16 : vector<5x32xf32>
    %18 = arith.negf %17 : vector<5x32xf32>
    %19 = math.exp %18 : vector<5x32xf32>
    %cst_20 = arith.constant 1.000000e+00 : f32
    %20 = vector.broadcast %cst_20 : f32 to vector<5x32xf32>
    %21 = arith.addf %20, %19 : vector<5x32xf32>
    %22 = arith.divf %20, %21 : vector<5x32xf32>
    %23 = vector.extract_strided_slice %11 {offsets = [0, 32], sizes = [5, 32], strides = [1, 1]} : vector<5x96xf32> to vector<5x32xf32>
    %24 = vector.extract_strided_slice %14 {offsets = [0, 32], sizes = [5, 32], strides = [1, 1]} : vector<5x96xf32> to vector<5x32xf32>
    %25 = arith.addf %23, %24 : vector<5x32xf32>
    %26 = arith.negf %25 : vector<5x32xf32>
    %27 = math.exp %26 : vector<5x32xf32>
    %cst_21 = arith.constant 1.000000e+00 : f32
    %28 = vector.broadcast %cst_21 : f32 to vector<5x32xf32>
    %29 = arith.addf %28, %27 : vector<5x32xf32>
    %30 = arith.divf %28, %29 : vector<5x32xf32>
    %31 = vector.extract_strided_slice %11 {offsets = [0, 64], sizes = [5, 32], strides = [1, 1]} : vector<5x96xf32> to vector<5x32xf32>
    %32 = vector.extract_strided_slice %14 {offsets = [0, 64], sizes = [5, 32], strides = [1, 1]} : vector<5x96xf32> to vector<5x32xf32>
    %33 = arith.mulf %22, %32 : vector<5x32xf32>
    %34 = arith.addf %31, %33 : vector<5x32xf32>
    %35 = math.tanh %34 : vector<5x32xf32>
    %cst_22 = arith.constant 1.000000e+00 : f32
    %36 = vector.broadcast %cst_22 : f32 to vector<5x32xf32>
    %37 = arith.subf %36, %30 : vector<5x32xf32>
    %38 = arith.mulf %37, %35 : vector<5x32xf32>
    %39 = arith.mulf %30, %9 : vector<5x32xf32>
    %40 = arith.addf %38, %39 : vector<5x32xf32>
    %c0_i32 = arith.constant 0 : i32
    %41 = vector.broadcast %c0_i32 : i32 to vector<5x1xi32>
    %42 = arith.cmpi sgt, %4, %41 : vector<5x1xi32>
    %43 = arith.extui %42 : vector<5x1xi1> to vector<5x1xi32>
    %44 = arith.sitofp %43 : vector<5x1xi32> to vector<5x1xf32>
    %45 = vector.broadcast %44 : vector<5x1xf32> to vector<5x32xf32>
    %46 = arith.mulf %45, %40 : vector<5x32xf32>
    %cst_23 = arith.constant 1.000000e+00 : f32
    %47 = vector.broadcast %cst_23 : f32 to vector<5x1xf32>
    %48 = arith.subf %47, %44 : vector<5x1xf32>
    %49 = vector.broadcast %48 : vector<5x1xf32> to vector<5x32xf32>
    %50 = arith.mulf %49, %9 : vector<5x32xf32>
    %51 = arith.addf %46, %50 : vector<5x32xf32>
    %c0_24 = arith.constant 0 : index
    %c0_25 = arith.constant 0 : index
    %52 = vector.load %arg10[%c0_24, %c0_25] : memref<5x32xf32, #tpu.memory_space<vmem>>, vector<5x32xf32>
    tpu.vector_store %arg10[%c0_24, %c0_25], %51 {strides = array<i32>} : memref<5x32xf32, #tpu.memory_space<vmem>>, vector<5x32xf32>,
    %53 = vector.broadcast %44 : vector<5x1xf32> to vector<5x32xf32>
    %54 = arith.mulf %53, %40 : vector<5x32xf32>
    %c0_26 = arith.constant 0 : index
    %c0_27 = arith.constant 0 : index
    %c0_28 = arith.constant 0 : index
    %55 = vector.load %arg8[%c0_26, %c0_27, %c0_28] : memref<8x5x32xf32, #tpu.memory_space<vmem>>, vector<1x5x32xf32>
    %56 = vector.shape_cast %55 : vector<1x5x32xf32> to vector<5x32xf32>
    %57 = vector.shape_cast %54 : vector<5x32xf32> to vector<1x5x32xf32>
    tpu.vector_store %arg8[%c0_26, %c0_27, %c0_28], %57 {strides = array<i32>} : memref<8x5x32xf32, #tpu.memory_space<vmem>>, vector<1x5x32xf32>,
    %c0_29 = arith.constant 0 : index
    %c0_30 = arith.constant 0 : index
    %58 = vector.load %arg11[%c0_29, %c0_30] : memref<5x32xf32, #tpu.memory_space<vmem>>, vector<5x32xf32>
    %c7 = arith.constant 7 : index
    %c0_31 = arith.constant 0 : index
    %c0_32 = arith.constant 0 : index
    %59 = vector.load %arg2[%c7, %c0_31, %c0_32] : memref<8x5x96xf32, #tpu.memory_space<vmem>>, vector<1x5x96xf32>
    %60 = vector.shape_cast %59 : vector<1x5x96xf32> to vector<5x96xf32>
    %cst_33 = arith.constant dense<0.000000e+00> : vector<5x96xf32>
    %61 = tpu.matmul %58, %6, %cst_33 {dimension_numbers = #tpu.dot_dimension_numbers<[1], [0], [0], [1], [0, 0, 1, 1], [], []>} : vector<5x32xf32>, vector<32x96xf32>, vector<5x96xf32> -> vector<5x96xf32>
    %62 = vector.broadcast %8 : vector<1x96xf32> to vector<5x96xf32>
    %63 = arith.addf %61, %62 : vector<5x96xf32>
    %64 = vector.extract_strided_slice %60 {offsets = [0, 0], sizes = [5, 32], strides = [1, 1]} : vector<5x96xf32> to vector<5x32xf32>
    %65 = vector.extract_strided_slice %63 {offsets = [0, 0], sizes = [5, 32], strides = [1, 1]} : vector<5x96xf32> to vector<5x32xf32>
    %66 = arith.addf %64, %65 : vector<5x32xf32>
    %67 = arith.negf %66 : vector<5x32xf32>
    %68 = math.exp %67 : vector<5x32xf32>
    %cst_34 = arith.constant 1.000000e+00 : f32
    %69 = vector.broadcast %cst_34 : f32 to vector<5x32xf32>
    %70 = arith.addf %69, %68 : vector<5x32xf32>
    %71 = arith.divf %69, %70 : vector<5x32xf32>
    %72 = vector.extract_strided_slice %60 {offsets = [0, 32], sizes = [5, 32], strides = [1, 1]} : vector<5x96xf32> to vector<5x32xf32>
    %73 = vector.extract_strided_slice %63 {offsets = [0, 32], sizes = [5, 32], strides = [1, 1]} : vector<5x96xf32> to vector<5x32xf32>
    %74 = arith.addf %72, %73 : vector<5x32xf32>
    %75 = arith.negf %74 : vector<5x32xf32>
    %76 = math.exp %75 : vector<5x32xf32>
    %cst_35 = arith.constant 1.000000e+00 : f32
    %77 = vector.broadcast %cst_35 : f32 to vector<5x32xf32>
    %78 = arith.addf %77, %76 : vector<5x32xf32>
    %79 = arith.divf %77, %78 : vector<5x32xf32>
    %80 = vector.extract_strided_slice %60 {offsets = [0, 64], sizes = [5, 32], strides = [1, 1]} : vector<5x96xf32> to vector<5x32xf32>
    %81 = vector.extract_strided_slice %63 {offsets = [0, 64], sizes = [5, 32], strides = [1, 1]} : vector<5x96xf32> to vector<5x32xf32>
    %82 = arith.mulf %71, %81 : vector<5x32xf32>
    %83 = arith.addf %80, %82 : vector<5x32xf32>
    %84 = math.tanh %83 : vector<5x32xf32>
    %cst_36 = arith.constant 1.000000e+00 : f32
    %85 = vector.broadcast %cst_36 : f32 to vector<5x32xf32>
    %86 = arith.subf %85, %79 : vector<5x32xf32>
    %87 = arith.mulf %86, %84 : vector<5x32xf32>
    %88 = arith.mulf %79, %58 : vector<5x32xf32>
    %89 = arith.addf %87, %88 : vector<5x32xf32>
    %c7_i32 = arith.constant 7 : i32
    %90 = vector.broadcast %c7_i32 : i32 to vector<5x1xi32>
    %91 = arith.cmpi sgt, %4, %90 : vector<5x1xi32>
    %92 = arith.extui %91 : vector<5x1xi1> to vector<5x1xi32>
    %93 = arith.sitofp %92 : vector<5x1xi32> to vector<5x1xf32>
    %94 = vector.broadcast %93 : vector<5x1xf32> to vector<5x32xf32>
    %95 = arith.mulf %94, %89 : vector<5x32xf32>
    %cst_37 = arith.constant 1.000000e+00 : f32
    %96 = vector.broadcast %cst_37 : f32 to vector<5x1xf32>
    %97 = arith.subf %96, %93 : vector<5x1xf32>
    %98 = vector.broadcast %97 : vector<5x1xf32> to vector<5x32xf32>
    %99 = arith.mulf %98, %58 : vector<5x32xf32>
    %100 = arith.addf %95, %99 : vector<5x32xf32>
    %c0_38 = arith.constant 0 : index
    %c0_39 = arith.constant 0 : index
    %101 = vector.load %arg11[%c0_38, %c0_39] : memref<5x32xf32, #tpu.memory_space<vmem>>, vector<5x32xf32>
    tpu.vector_store %arg11[%c0_38, %c0_39], %100 {strides = array<i32>} : memref<5x32xf32, #tpu.memory_space<vmem>>, vector<5x32xf32>,
    %102 = vector.broadcast %93 : vector<5x1xf32> to vector<5x32xf32>
    %103 = arith.mulf %102, %89 : vector<5x32xf32>
    %c7_40 = arith.constant 7 : index
    %c0_41 = arith.constant 0 : index
    %c0_42 = arith.constant 0 : index
    %104 = vector.load %arg9[%c7_40, %c0_41, %c0_42] : memref<8x5x32xf32, #tpu.memory_space<vmem>>, vector<1x5x32xf32>
    %105 = vector.shape_cast %104 : vector<1x5x32xf32> to vector<5x32xf32>
    %106 = vector.shape_cast %103 : vector<5x32xf32> to vector<1x5x32xf32>
    tpu.vector_store %arg9[%c7_40, %c0_41, %c0_42], %106 {strides = array<i32>} : memref<8x5x32xf32, #tpu.memory_space<vmem>>, vector<1x5x32xf32>,
    %c0_43 = arith.constant 0 : index
    %c0_44 = arith.constant 0 : index
    %107 = vector.load %arg10[%c0_43, %c0_44] : memref<5x32xf32, #tpu.memory_space<vmem>>, vector<5x32xf32>
    %c1 = arith.constant 1 : index
    %c0_45 = arith.constant 0 : index
    %c0_46 = arith.constant 0 : index
    %108 = vector.load %arg1[%c1, %c0_45, %c0_46] : memref<8x5x96xf32, #tpu.memory_space<vmem>>, vector<1x5x96xf32>
    %109 = vector.shape_cast %108 : vector<1x5x96xf32> to vector<5x96xf32>
    %cst_47 = arith.constant dense<0.000000e+00> : vector<5x96xf32>
    %110 = tpu.matmul %107, %5, %cst_47 {dimension_numbers = #tpu.dot_dimension_numbers<[1], [0], [0], [1], [0, 0, 1, 1], [], []>} : vector<5x32xf32>, vector<32x96xf32>, vector<5x96xf32> -> vector<5x96xf32>
    %111 = vector.broadcast %7 : vector<1x96xf32> to vector<5x96xf32>
    %112 = arith.addf %110, %111 : vector<5x96xf32>
    %113 = vector.extract_strided_slice %109 {offsets = [0, 0], sizes = [5, 32], strides = [1, 1]} : vector<5x96xf32> to vector<5x32xf32>
    %114 = vector.extract_strided_slice %112 {offsets = [0, 0], sizes = [5, 32], strides = [1, 1]} : vector<5x96xf32> to vector<5x32xf32>
    %115 = arith.addf %113, %114 : vector<5x32xf32>
    %116 = arith.negf %115 : vector<5x32xf32>
    %117 = math.exp %116 : vector<5x32xf32>
    %cst_48 = arith.constant 1.000000e+00 : f32
    %118 = vector.broadcast %cst_48 : f32 to vector<5x32xf32>
    %119 = arith.addf %118, %117 : vector<5x32xf32>
    %120 = arith.divf %118, %119 : vector<5x32xf32>
    %121 = vector.extract_strided_slice %109 {offsets = [0, 32], sizes = [5, 32], strides = [1, 1]} : vector<5x96xf32> to vector<5x32xf32>
    %122 = vector.extract_strided_slice %112 {offsets = [0, 32], sizes = [5, 32], strides = [1, 1]} : vector<5x96xf32> to vector<5x32xf32>
    %123 = arith.addf %121, %122 : vector<5x32xf32>
    %124 = arith.negf %123 : vector<5x32xf32>
    %125 = math.exp %124 : vector<5x32xf32>
    %cst_49 = arith.constant 1.000000e+00 : f32
    %126 = vector.broadcast %cst_49 : f32 to vector<5x32xf32>
    %127 = arith.addf %126, %125 : vector<5x32xf32>
    %128 = arith.divf %126, %127 : vector<5x32xf32>
    %129 = vector.extract_strided_slice %109 {offsets = [0, 64], sizes = [5, 32], strides = [1, 1]} : vector<5x96xf32> to vector<5x32xf32>
    %130 = vector.extract_strided_slice %112 {offsets = [0, 64], sizes = [5, 32], strides = [1, 1]} : vector<5x96xf32> to vector<5x32xf32>
    %131 = arith.mulf %120, %130 : vector<5x32xf32>
    %132 = arith.addf %129, %131 : vector<5x32xf32>
    %133 = math.tanh %132 : vector<5x32xf32>
    %cst_50 = arith.constant 1.000000e+00 : f32
    %134 = vector.broadcast %cst_50 : f32 to vector<5x32xf32>
    %135 = arith.subf %134, %128 : vector<5x32xf32>
    %136 = arith.mulf %135, %133 : vector<5x32xf32>
    %137 = arith.mulf %128, %107 : vector<5x32xf32>
    %138 = arith.addf %136, %137 : vector<5x32xf32>
    %c1_i32 = arith.constant 1 : i32
    %139 = vector.broadcast %c1_i32 : i32 to vector<5x1xi32>
    %140 = arith.cmpi sgt, %4, %139 : vector<5x1xi32>
    %141 = arith.extui %140 : vector<5x1xi1> to vector<5x1xi32>
    %142 = arith.sitofp %141 : vector<5x1xi32> to vector<5x1xf32>
    %143 = vector.broadcast %142 : vector<5x1xf32> to vector<5x32xf32>
    %144 = arith.mulf %143, %138 : vector<5x32xf32>
    %cst_51 = arith.constant 1.000000e+00 : f32
    %145 = vector.broadcast %cst_51 : f32 to vector<5x1xf32>
    %146 = arith.subf %145, %142 : vector<5x1xf32>
    %147 = vector.broadcast %146 : vector<5x1xf32> to vector<5x32xf32>
    %148 = arith.mulf %147, %107 : vector<5x32xf32>
    %149 = arith.addf %144, %148 : vector<5x32xf32>
    %c0_52 = arith.constant 0 : index
    %c0_53 = arith.constant 0 : index
    %150 = vector.load %arg10[%c0_52, %c0_53] : memref<5x32xf32, #tpu.memory_space<vmem>>, vector<5x32xf32>
    tpu.vector_store %arg10[%c0_52, %c0_53], %149 {strides = array<i32>} : memref<5x32xf32, #tpu.memory_space<vmem>>, vector<5x32xf32>,
    %151 = vector.broadcast %142 : vector<5x1xf32> to vector<5x32xf32>
    %152 = arith.mulf %151, %138 : vector<5x32xf32>
    %c1_54 = arith.constant 1 : index
    %c0_55 = arith.constant 0 : index
    %c0_56 = arith.constant 0 : index
    %153 = vector.load %arg8[%c1_54, %c0_55, %c0_56] : memref<8x5x32xf32, #tpu.memory_space<vmem>>, vector<1x5x32xf32>
    %154 = vector.shape_cast %153 : vector<1x5x32xf32> to vector<5x32xf32>
    %155 = vector.shape_cast %152 : vector<5x32xf32> to vector<1x5x32xf32>
    tpu.vector_store %arg8[%c1_54, %c0_55, %c0_56], %155 {strides = array<i32>} : memref<8x5x32xf32, #tpu.memory_space<vmem>>, vector<1x5x32xf32>,
    %c0_57 = arith.constant 0 : index
    %c0_58 = arith.constant 0 : index
    %156 = vector.load %arg11[%c0_57, %c0_58] : memref<5x32xf32, #tpu.memory_space<vmem>>, vector<5x32xf32>
    %c6 = arith.constant 6 : index
    %c0_59 = arith.constant 0 : index
    %c0_60 = arith.constant 0 : index
    %157 = vector.load %arg2[%c6, %c0_59, %c0_60] : memref<8x5x96xf32, #tpu.memory_space<vmem>>, vector<1x5x96xf32>
    %158 = vector.shape_cast %157 : vector<1x5x96xf32> to vector<5x96xf32>
    %cst_61 = arith.constant dense<0.000000e+00> : vector<5x96xf32>
    %159 = tpu.matmul %156, %6, %cst_61 {dimension_numbers = #tpu.dot_dimension_numbers<[1], [0], [0], [1], [0, 0, 1, 1], [], []>} : vector<5x32xf32>, vector<32x96xf32>, vector<5x96xf32> -> vector<5x96xf32>
    %160 = vector.broadcast %8 : vector<1x96xf32> to vector<5x96xf32>
    %161 = arith.addf %159, %160 : vector<5x96xf32>
    %162 = vector.extract_strided_slice %158 {offsets = [0, 0], sizes = [5, 32], strides = [1, 1]} : vector<5x96xf32> to vector<5x32xf32>
    %163 = vector.extract_strided_slice %161 {offsets = [0, 0], sizes = [5, 32], strides = [1, 1]} : vector<5x96xf32> to vector<5x32xf32>
    %164 = arith.addf %162, %163 : vector<5x32xf32>
    %165 = arith.negf %164 : vector<5x32xf32>
    %166 = math.exp %165 : vector<5x32xf32>
    %cst_62 = arith.constant 1.000000e+00 : f32
    %167 = vector.broadcast %cst_62 : f32 to vector<5x32xf32>
    %168 = arith.addf %167, %166 : vector<5x32xf32>
    %169 = arith.divf %167, %168 : vector<5x32xf32>
    %170 = vector.extract_strided_slice %158 {offsets = [0, 32], sizes = [5, 32], strides = [1, 1]} : vector<5x96xf32> to vector<5x32xf32>
    %171 = vector.extract_strided_slice %161 {offsets = [0, 32], sizes = [5, 32], strides = [1, 1]} : vector<5x96xf32> to vector<5x32xf32>
    %172 = arith.addf %170, %171 : vector<5x32xf32>
    %173 = arith.negf %172 : vector<5x32xf32>
    %174 = math.exp %173 : vector<5x32xf32>
    %cst_63 = arith.constant 1.000000e+00 : f32
    %175 = vector.broadcast %cst_63 : f32 to vector<5x32xf32>
    %176 = arith.addf %175, %174 : vector<5x32xf32>
    %177 = arith.divf %175, %176 : vector<5x32xf32>
    %178 = vector.extract_strided_slice %158 {offsets = [0, 64], sizes = [5, 32], strides = [1, 1]} : vector<5x96xf32> to vector<5x32xf32>
    %179 = vector.extract_strided_slice %161 {offsets = [0, 64], sizes = [5, 32], strides = [1, 1]} : vector<5x96xf32> to vector<5x32xf32>
    %180 = arith.mulf %169, %179 : vector<5x32xf32>
    %181 = arith.addf %178, %180 : vector<5x32xf32>
    %182 = math.tanh %181 : vector<5x32xf32>
    %cst_64 = arith.constant 1.000000e+00 : f32
    %183 = vector.broadcast %cst_64 : f32 to vector<5x32xf32>
    %184 = arith.subf %183, %177 : vector<5x32xf32>
    %185 = arith.mulf %184, %182 : vector<5x32xf32>
    %186 = arith.mulf %177, %156 : vector<5x32xf32>
    %187 = arith.addf %185, %186 : vector<5x32xf32>
    %c6_i32 = arith.constant 6 : i32
    %188 = vector.broadcast %c6_i32 : i32 to vector<5x1xi32>
    %189 = arith.cmpi sgt, %4, %188 : vector<5x1xi32>
    %190 = arith.extui %189 : vector<5x1xi1> to vector<5x1xi32>
    %191 = arith.sitofp %190 : vector<5x1xi32> to vector<5x1xf32>
    %192 = vector.broadcast %191 : vector<5x1xf32> to vector<5x32xf32>
    %193 = arith.mulf %192, %187 : vector<5x32xf32>
    %cst_65 = arith.constant 1.000000e+00 : f32
    %194 = vector.broadcast %cst_65 : f32 to vector<5x1xf32>
    %195 = arith.subf %194, %191 : vector<5x1xf32>
    %196 = vector.broadcast %195 : vector<5x1xf32> to vector<5x32xf32>
    %197 = arith.mulf %196, %156 : vector<5x32xf32>
    %198 = arith.addf %193, %197 : vector<5x32xf32>
    %c0_66 = arith.constant 0 : index
    %c0_67 = arith.constant 0 : index
    %199 = vector.load %arg11[%c0_66, %c0_67] : memref<5x32xf32, #tpu.memory_space<vmem>>, vector<5x32xf32>
    tpu.vector_store %arg11[%c0_66, %c0_67], %198 {strides = array<i32>} : memref<5x32xf32, #tpu.memory_space<vmem>>, vector<5x32xf32>,
    %200 = vector.broadcast %191 : vector<5x1xf32> to vector<5x32xf32>
    %201 = arith.mulf %200, %187 : vector<5x32xf32>
    %c6_68 = arith.constant 6 : index
    %c0_69 = arith.constant 0 : index
    %c0_70 = arith.constant 0 : index
    %202 = vector.load %arg9[%c6_68, %c0_69, %c0_70] : memref<8x5x32xf32, #tpu.memory_space<vmem>>, vector<1x5x32xf32>
    %203 = vector.shape_cast %202 : vector<1x5x32xf32> to vector<5x32xf32>
    %204 = vector.shape_cast %201 : vector<5x32xf32> to vector<1x5x32xf32>
    tpu.vector_store %arg9[%c6_68, %c0_69, %c0_70], %204 {strides = array<i32>} : memref<8x5x32xf32, #tpu.memory_space<vmem>>, vector<1x5x32xf32>,
    %c0_71 = arith.constant 0 : index
    %c0_72 = arith.constant 0 : index
    %205 = vector.load %arg10[%c0_71, %c0_72] : memref<5x32xf32, #tpu.memory_space<vmem>>, vector<5x32xf32>
    %c2 = arith.constant 2 : index
    %c0_73 = arith.constant 0 : index
    %c0_74 = arith.constant 0 : index
    %206 = vector.load %arg1[%c2, %c0_73, %c0_74] : memref<8x5x96xf32, #tpu.memory_space<vmem>>, vector<1x5x96xf32>
    %207 = vector.shape_cast %206 : vector<1x5x96xf32> to vector<5x96xf32>
    %cst_75 = arith.constant dense<0.000000e+00> : vector<5x96xf32>
    %208 = tpu.matmul %205, %5, %cst_75 {dimension_numbers = #tpu.dot_dimension_numbers<[1], [0], [0], [1], [0, 0, 1, 1], [], []>} : vector<5x32xf32>, vector<32x96xf32>, vector<5x96xf32> -> vector<5x96xf32>
    %209 = vector.broadcast %7 : vector<1x96xf32> to vector<5x96xf32>
    %210 = arith.addf %208, %209 : vector<5x96xf32>
    %211 = vector.extract_strided_slice %207 {offsets = [0, 0], sizes = [5, 32], strides = [1, 1]} : vector<5x96xf32> to vector<5x32xf32>
    %212 = vector.extract_strided_slice %210 {offsets = [0, 0], sizes = [5, 32], strides = [1, 1]} : vector<5x96xf32> to vector<5x32xf32>
    %213 = arith.addf %211, %212 : vector<5x32xf32>
    %214 = arith.negf %213 : vector<5x32xf32>
    %215 = math.exp %214 : vector<5x32xf32>
    %cst_76 = arith.constant 1.000000e+00 : f32
    %216 = vector.broadcast %cst_76 : f32 to vector<5x32xf32>
    %217 = arith.addf %216, %215 : vector<5x32xf32>
    %218 = arith.divf %216, %217 : vector<5x32xf32>
    %219 = vector.extract_strided_slice %207 {offsets = [0, 32], sizes = [5, 32], strides = [1, 1]} : vector<5x96xf32> to vector<5x32xf32>
    %220 = vector.extract_strided_slice %210 {offsets = [0, 32], sizes = [5, 32], strides = [1, 1]} : vector<5x96xf32> to vector<5x32xf32>
    %221 = arith.addf %219, %220 : vector<5x32xf32>
    %222 = arith.negf %221 : vector<5x32xf32>
    %223 = math.exp %222 : vector<5x32xf32>
    %cst_77 = arith.constant 1.000000e+00 : f32
    %224 = vector.broadcast %cst_77 : f32 to vector<5x32xf32>
    %225 = arith.addf %224, %223 : vector<5x32xf32>
    %226 = arith.divf %224, %225 : vector<5x32xf32>
    %227 = vector.extract_strided_slice %207 {offsets = [0, 64], sizes = [5, 32], strides = [1, 1]} : vector<5x96xf32> to vector<5x32xf32>
    %228 = vector.extract_strided_slice %210 {offsets = [0, 64], sizes = [5, 32], strides = [1, 1]} : vector<5x96xf32> to vector<5x32xf32>
    %229 = arith.mulf %218, %228 : vector<5x32xf32>
    %230 = arith.addf %227, %229 : vector<5x32xf32>
    %231 = math.tanh %230 : vector<5x32xf32>
    %cst_78 = arith.constant 1.000000e+00 : f32
    %232 = vector.broadcast %cst_78 : f32 to vector<5x32xf32>
    %233 = arith.subf %232, %226 : vector<5x32xf32>
    %234 = arith.mulf %233, %231 : vector<5x32xf32>
    %235 = arith.mulf %226, %205 : vector<5x32xf32>
    %236 = arith.addf %234, %235 : vector<5x32xf32>
    %c2_i32 = arith.constant 2 : i32
    %237 = vector.broadcast %c2_i32 : i32 to vector<5x1xi32>
    %238 = arith.cmpi sgt, %4, %237 : vector<5x1xi32>
    %239 = arith.extui %238 : vector<5x1xi1> to vector<5x1xi32>
    %240 = arith.sitofp %239 : vector<5x1xi32> to vector<5x1xf32>
    %241 = vector.broadcast %240 : vector<5x1xf32> to vector<5x32xf32>
    %242 = arith.mulf %241, %236 : vector<5x32xf32>
    %cst_79 = arith.constant 1.000000e+00 : f32
    %243 = vector.broadcast %cst_79 : f32 to vector<5x1xf32>
    %244 = arith.subf %243, %240 : vector<5x1xf32>
    %245 = vector.broadcast %244 : vector<5x1xf32> to vector<5x32xf32>
    %246 = arith.mulf %245, %205 : vector<5x32xf32>
    %247 = arith.addf %242, %246 : vector<5x32xf32>
    %c0_80 = arith.constant 0 : index
    %c0_81 = arith.constant 0 : index
    %248 = vector.load %arg10[%c0_80, %c0_81] : memref<5x32xf32, #tpu.memory_space<vmem>>, vector<5x32xf32>
    tpu.vector_store %arg10[%c0_80, %c0_81], %247 {strides = array<i32>} : memref<5x32xf32, #tpu.memory_space<vmem>>, vector<5x32xf32>,
    %249 = vector.broadcast %240 : vector<5x1xf32> to vector<5x32xf32>
    %250 = arith.mulf %249, %236 : vector<5x32xf32>
    %c2_82 = arith.constant 2 : index
    %c0_83 = arith.constant 0 : index
    %c0_84 = arith.constant 0 : index
    %251 = vector.load %arg8[%c2_82, %c0_83, %c0_84] : memref<8x5x32xf32, #tpu.memory_space<vmem>>, vector<1x5x32xf32>
    %252 = vector.shape_cast %251 : vector<1x5x32xf32> to vector<5x32xf32>
    %253 = vector.shape_cast %250 : vector<5x32xf32> to vector<1x5x32xf32>
    tpu.vector_store %arg8[%c2_82, %c0_83, %c0_84], %253 {strides = array<i32>} : memref<8x5x32xf32, #tpu.memory_space<vmem>>, vector<1x5x32xf32>,
    %c0_85 = arith.constant 0 : index
    %c0_86 = arith.constant 0 : index
    %254 = vector.load %arg11[%c0_85, %c0_86] : memref<5x32xf32, #tpu.memory_space<vmem>>, vector<5x32xf32>
    %c5 = arith.constant 5 : index
    %c0_87 = arith.constant 0 : index
    %c0_88 = arith.constant 0 : index
    %255 = vector.load %arg2[%c5, %c0_87, %c0_88] : memref<8x5x96xf32, #tpu.memory_space<vmem>>, vector<1x5x96xf32>
    %256 = vector.shape_cast %255 : vector<1x5x96xf32> to vector<5x96xf32>
    %cst_89 = arith.constant dense<0.000000e+00> : vector<5x96xf32>
    %257 = tpu.matmul %254, %6, %cst_89 {dimension_numbers = #tpu.dot_dimension_numbers<[1], [0], [0], [1], [0, 0, 1, 1], [], []>} : vector<5x32xf32>, vector<32x96xf32>, vector<5x96xf32> -> vector<5x96xf32>
    %258 = vector.broadcast %8 : vector<1x96xf32> to vector<5x96xf32>
    %259 = arith.addf %257, %258 : vector<5x96xf32>
    %260 = vector.extract_strided_slice %256 {offsets = [0, 0], sizes = [5, 32], strides = [1, 1]} : vector<5x96xf32> to vector<5x32xf32>
    %261 = vector.extract_strided_slice %259 {offsets = [0, 0], sizes = [5, 32], strides = [1, 1]} : vector<5x96xf32> to vector<5x32xf32>
    %262 = arith.addf %260, %261 : vector<5x32xf32>
    %263 = arith.negf %262 : vector<5x32xf32>
    %264 = math.exp %263 : vector<5x32xf32>
    %cst_90 = arith.constant 1.000000e+00 : f32
    %265 = vector.broadcast %cst_90 : f32 to vector<5x32xf32>
    %266 = arith.addf %265, %264 : vector<5x32xf32>
    %267 = arith.divf %265, %266 : vector<5x32xf32>
    %268 = vector.extract_strided_slice %256 {offsets = [0, 32], sizes = [5, 32], strides = [1, 1]} : vector<5x96xf32> to vector<5x32xf32>
    %269 = vector.extract_strided_slice %259 {offsets = [0, 32], sizes = [5, 32], strides = [1, 1]} : vector<5x96xf32> to vector<5x32xf32>
    %270 = arith.addf %268, %269 : vector<5x32xf32>
    %271 = arith.negf %270 : vector<5x32xf32>
    %272 = math.exp %271 : vector<5x32xf32>
    %cst_91 = arith.constant 1.000000e+00 : f32
    %273 = vector.broadcast %cst_91 : f32 to vector<5x32xf32>
    %274 = arith.addf %273, %272 : vector<5x32xf32>
    %275 = arith.divf %273, %274 : vector<5x32xf32>
    %276 = vector.extract_strided_slice %256 {offsets = [0, 64], sizes = [5, 32], strides = [1, 1]} : vector<5x96xf32> to vector<5x32xf32>
    %277 = vector.extract_strided_slice %259 {offsets = [0, 64], sizes = [5, 32], strides = [1, 1]} : vector<5x96xf32> to vector<5x32xf32>
    %278 = arith.mulf %267, %277 : vector<5x32xf32>
    %279 = arith.addf %276, %278 : vector<5x32xf32>
    %280 = math.tanh %279 : vector<5x32xf32>
    %cst_92 = arith.constant 1.000000e+00 : f32
    %281 = vector.broadcast %cst_92 : f32 to vector<5x32xf32>
    %282 = arith.subf %281, %275 : vector<5x32xf32>
    %283 = arith.mulf %282, %280 : vector<5x32xf32>
    %284 = arith.mulf %275, %254 : vector<5x32xf32>
    %285 = arith.addf %283, %284 : vector<5x32xf32>
    %c5_i32 = arith.constant 5 : i32
    %286 = vector.broadcast %c5_i32 : i32 to vector<5x1xi32>
    %287 = arith.cmpi sgt, %4, %286 : vector<5x1xi32>
    %288 = arith.extui %287 : vector<5x1xi1> to vector<5x1xi32>
    %289 = arith.sitofp %288 : vector<5x1xi32> to vector<5x1xf32>
    %290 = vector.broadcast %289 : vector<5x1xf32> to vector<5x32xf32>
    %291 = arith.mulf %290, %285 : vector<5x32xf32>
    %cst_93 = arith.constant 1.000000e+00 : f32
    %292 = vector.broadcast %cst_93 : f32 to vector<5x1xf32>
    %293 = arith.subf %292, %289 : vector<5x1xf32>
    %294 = vector.broadcast %293 : vector<5x1xf32> to vector<5x32xf32>
    %295 = arith.mulf %294, %254 : vector<5x32xf32>
    %296 = arith.addf %291, %295 : vector<5x32xf32>
    %c0_94 = arith.constant 0 : index
    %c0_95 = arith.constant 0 : index
    %297 = vector.load %arg11[%c0_94, %c0_95] : memref<5x32xf32, #tpu.memory_space<vmem>>, vector<5x32xf32>
    tpu.vector_store %arg11[%c0_94, %c0_95], %296 {strides = array<i32>} : memref<5x32xf32, #tpu.memory_space<vmem>>, vector<5x32xf32>,
    %298 = vector.broadcast %289 : vector<5x1xf32> to vector<5x32xf32>
    %299 = arith.mulf %298, %285 : vector<5x32xf32>
    %c5_96 = arith.constant 5 : index
    %c0_97 = arith.constant 0 : index
    %c0_98 = arith.constant 0 : index
    %300 = vector.load %arg9[%c5_96, %c0_97, %c0_98] : memref<8x5x32xf32, #tpu.memory_space<vmem>>, vector<1x5x32xf32>
    %301 = vector.shape_cast %300 : vector<1x5x32xf32> to vector<5x32xf32>
    %302 = vector.shape_cast %299 : vector<5x32xf32> to vector<1x5x32xf32>
    tpu.vector_store %arg9[%c5_96, %c0_97, %c0_98], %302 {strides = array<i32>} : memref<8x5x32xf32, #tpu.memory_space<vmem>>, vector<1x5x32xf32>,
    %c0_99 = arith.constant 0 : index
    %c0_100 = arith.constant 0 : index
    %303 = vector.load %arg10[%c0_99, %c0_100] : memref<5x32xf32, #tpu.memory_space<vmem>>, vector<5x32xf32>
    %c3 = arith.constant 3 : index
    %c0_101 = arith.constant 0 : index
    %c0_102 = arith.constant 0 : index
    %304 = vector.load %arg1[%c3, %c0_101, %c0_102] : memref<8x5x96xf32, #tpu.memory_space<vmem>>, vector<1x5x96xf32>
    %305 = vector.shape_cast %304 : vector<1x5x96xf32> to vector<5x96xf32>
    %cst_103 = arith.constant dense<0.000000e+00> : vector<5x96xf32>
    %306 = tpu.matmul %303, %5, %cst_103 {dimension_numbers = #tpu.dot_dimension_numbers<[1], [0], [0], [1], [0, 0, 1, 1], [], []>} : vector<5x32xf32>, vector<32x96xf32>, vector<5x96xf32> -> vector<5x96xf32>
    %307 = vector.broadcast %7 : vector<1x96xf32> to vector<5x96xf32>
    %308 = arith.addf %306, %307 : vector<5x96xf32>
    %309 = vector.extract_strided_slice %305 {offsets = [0, 0], sizes = [5, 32], strides = [1, 1]} : vector<5x96xf32> to vector<5x32xf32>
    %310 = vector.extract_strided_slice %308 {offsets = [0, 0], sizes = [5, 32], strides = [1, 1]} : vector<5x96xf32> to vector<5x32xf32>
    %311 = arith.addf %309, %310 : vector<5x32xf32>
    %312 = arith.negf %311 : vector<5x32xf32>
    %313 = math.exp %312 : vector<5x32xf32>
    %cst_104 = arith.constant 1.000000e+00 : f32
    %314 = vector.broadcast %cst_104 : f32 to vector<5x32xf32>
    %315 = arith.addf %314, %313 : vector<5x32xf32>
    %316 = arith.divf %314, %315 : vector<5x32xf32>
    %317 = vector.extract_strided_slice %305 {offsets = [0, 32], sizes = [5, 32], strides = [1, 1]} : vector<5x96xf32> to vector<5x32xf32>
    %318 = vector.extract_strided_slice %308 {offsets = [0, 32], sizes = [5, 32], strides = [1, 1]} : vector<5x96xf32> to vector<5x32xf32>
    %319 = arith.addf %317, %318 : vector<5x32xf32>
    %320 = arith.negf %319 : vector<5x32xf32>
    %321 = math.exp %320 : vector<5x32xf32>
    %cst_105 = arith.constant 1.000000e+00 : f32
    %322 = vector.broadcast %cst_105 : f32 to vector<5x32xf32>
    %323 = arith.addf %322, %321 : vector<5x32xf32>
    %324 = arith.divf %322, %323 : vector<5x32xf32>
    %325 = vector.extract_strided_slice %305 {offsets = [0, 64], sizes = [5, 32], strides = [1, 1]} : vector<5x96xf32> to vector<5x32xf32>
    %326 = vector.extract_strided_slice %308 {offsets = [0, 64], sizes = [5, 32], strides = [1, 1]} : vector<5x96xf32> to vector<5x32xf32>
    %327 = arith.mulf %316, %326 : vector<5x32xf32>
    %328 = arith.addf %325, %327 : vector<5x32xf32>
    %329 = math.tanh %328 : vector<5x32xf32>
    %cst_106 = arith.constant 1.000000e+00 : f32
    %330 = vector.broadcast %cst_106 : f32 to vector<5x32xf32>
    %331 = arith.subf %330, %324 : vector<5x32xf32>
    %332 = arith.mulf %331, %329 : vector<5x32xf32>
    %333 = arith.mulf %324, %303 : vector<5x32xf32>
    %334 = arith.addf %332, %333 : vector<5x32xf32>
    %c3_i32 = arith.constant 3 : i32
    %335 = vector.broadcast %c3_i32 : i32 to vector<5x1xi32>
    %336 = arith.cmpi sgt, %4, %335 : vector<5x1xi32>
    %337 = arith.extui %336 : vector<5x1xi1> to vector<5x1xi32>
    %338 = arith.sitofp %337 : vector<5x1xi32> to vector<5x1xf32>
    %339 = vector.broadcast %338 : vector<5x1xf32> to vector<5x32xf32>
    %340 = arith.mulf %339, %334 : vector<5x32xf32>
    %cst_107 = arith.constant 1.000000e+00 : f32
    %341 = vector.broadcast %cst_107 : f32 to vector<5x1xf32>
    %342 = arith.subf %341, %338 : vector<5x1xf32>
    %343 = vector.broadcast %342 : vector<5x1xf32> to vector<5x32xf32>
    %344 = arith.mulf %343, %303 : vector<5x32xf32>
    %345 = arith.addf %340, %344 : vector<5x32xf32>
    %c0_108 = arith.constant 0 : index
    %c0_109 = arith.constant 0 : index
    %346 = vector.load %arg10[%c0_108, %c0_109] : memref<5x32xf32, #tpu.memory_space<vmem>>, vector<5x32xf32>
    tpu.vector_store %arg10[%c0_108, %c0_109], %345 {strides = array<i32>} : memref<5x32xf32, #tpu.memory_space<vmem>>, vector<5x32xf32>,
    %347 = vector.broadcast %338 : vector<5x1xf32> to vector<5x32xf32>
    %348 = arith.mulf %347, %334 : vector<5x32xf32>
    %c3_110 = arith.constant 3 : index
    %c0_111 = arith.constant 0 : index
    %c0_112 = arith.constant 0 : index
    %349 = vector.load %arg8[%c3_110, %c0_111, %c0_112] : memref<8x5x32xf32, #tpu.memory_space<vmem>>, vector<1x5x32xf32>
    %350 = vector.shape_cast %349 : vector<1x5x32xf32> to vector<5x32xf32>
    %351 = vector.shape_cast %348 : vector<5x32xf32> to vector<1x5x32xf32>
    tpu.vector_store %arg8[%c3_110, %c0_111, %c0_112], %351 {strides = array<i32>} : memref<8x5x32xf32, #tpu.memory_space<vmem>>, vector<1x5x32xf32>,
    %c0_113 = arith.constant 0 : index
    %c0_114 = arith.constant 0 : index
    %352 = vector.load %arg11[%c0_113, %c0_114] : memref<5x32xf32, #tpu.memory_space<vmem>>, vector<5x32xf32>
    %c4 = arith.constant 4 : index
    %c0_115 = arith.constant 0 : index
    %c0_116 = arith.constant 0 : index
    %353 = vector.load %arg2[%c4, %c0_115, %c0_116] : memref<8x5x96xf32, #tpu.memory_space<vmem>>, vector<1x5x96xf32>
    %354 = vector.shape_cast %353 : vector<1x5x96xf32> to vector<5x96xf32>
    %cst_117 = arith.constant dense<0.000000e+00> : vector<5x96xf32>
    %355 = tpu.matmul %352, %6, %cst_117 {dimension_numbers = #tpu.dot_dimension_numbers<[1], [0], [0], [1], [0, 0, 1, 1], [], []>} : vector<5x32xf32>, vector<32x96xf32>, vector<5x96xf32> -> vector<5x96xf32>
    %356 = vector.broadcast %8 : vector<1x96xf32> to vector<5x96xf32>
    %357 = arith.addf %355, %356 : vector<5x96xf32>
    %358 = vector.extract_strided_slice %354 {offsets = [0, 0], sizes = [5, 32], strides = [1, 1]} : vector<5x96xf32> to vector<5x32xf32>
    %359 = vector.extract_strided_slice %357 {offsets = [0, 0], sizes = [5, 32], strides = [1, 1]} : vector<5x96xf32> to vector<5x32xf32>
    %360 = arith.addf %358, %359 : vector<5x32xf32>
    %361 = arith.negf %360 : vector<5x32xf32>
    %362 = math.exp %361 : vector<5x32xf32>
    %cst_118 = arith.constant 1.000000e+00 : f32
    %363 = vector.broadcast %cst_118 : f32 to vector<5x32xf32>
    %364 = arith.addf %363, %362 : vector<5x32xf32>
    %365 = arith.divf %363, %364 : vector<5x32xf32>
    %366 = vector.extract_strided_slice %354 {offsets = [0, 32], sizes = [5, 32], strides = [1, 1]} : vector<5x96xf32> to vector<5x32xf32>
    %367 = vector.extract_strided_slice %357 {offsets = [0, 32], sizes = [5, 32], strides = [1, 1]} : vector<5x96xf32> to vector<5x32xf32>
    %368 = arith.addf %366, %367 : vector<5x32xf32>
    %369 = arith.negf %368 : vector<5x32xf32>
    %370 = math.exp %369 : vector<5x32xf32>
    %cst_119 = arith.constant 1.000000e+00 : f32
    %371 = vector.broadcast %cst_119 : f32 to vector<5x32xf32>
    %372 = arith.addf %371, %370 : vector<5x32xf32>
    %373 = arith.divf %371, %372 : vector<5x32xf32>
    %374 = vector.extract_strided_slice %354 {offsets = [0, 64], sizes = [5, 32], strides = [1, 1]} : vector<5x96xf32> to vector<5x32xf32>
    %375 = vector.extract_strided_slice %357 {offsets = [0, 64], sizes = [5, 32], strides = [1, 1]} : vector<5x96xf32> to vector<5x32xf32>
    %376 = arith.mulf %365, %375 : vector<5x32xf32>
    %377 = arith.addf %374, %376 : vector<5x32xf32>
    %378 = math.tanh %377 : vector<5x32xf32>
    %cst_120 = arith.constant 1.000000e+00 : f32
    %379 = vector.broadcast %cst_120 : f32 to vector<5x32xf32>
    %380 = arith.subf %379, %373 : vector<5x32xf32>
    %381 = arith.mulf %380, %378 : vector<5x32xf32>
    %382 = arith.mulf %373, %352 : vector<5x32xf32>
    %383 = arith.addf %381, %382 : vector<5x32xf32>
    %c4_i32 = arith.constant 4 : i32
    %384 = vector.broadcast %c4_i32 : i32 to vector<5x1xi32>
    %385 = arith.cmpi sgt, %4, %384 : vector<5x1xi32>
    %386 = arith.extui %385 : vector<5x1xi1> to vector<5x1xi32>
    %387 = arith.sitofp %386 : vector<5x1xi32> to vector<5x1xf32>
    %388 = vector.broadcast %387 : vector<5x1xf32> to vector<5x32xf32>
    %389 = arith.mulf %388, %383 : vector<5x32xf32>
    %cst_121 = arith.constant 1.000000e+00 : f32
    %390 = vector.broadcast %cst_121 : f32 to vector<5x1xf32>
    %391 = arith.subf %390, %387 : vector<5x1xf32>
    %392 = vector.broadcast %391 : vector<5x1xf32> to vector<5x32xf32>
    %393 = arith.mulf %392, %352 : vector<5x32xf32>
    %394 = arith.addf %389, %393 : vector<5x32xf32>
    %c0_122 = arith.constant 0 : index
    %c0_123 = arith.constant 0 : index
    %395 = vector.load %arg11[%c0_122, %c0_123] : memref<5x32xf32, #tpu.memory_space<vmem>>, vector<5x32xf32>
    tpu.vector_store %arg11[%c0_122, %c0_123], %394 {strides = array<i32>} : memref<5x32xf32, #tpu.memory_space<vmem>>, vector<5x32xf32>,
    %396 = vector.broadcast %387 : vector<5x1xf32> to vector<5x32xf32>
    %397 = arith.mulf %396, %383 : vector<5x32xf32>
    %c4_124 = arith.constant 4 : index
    %c0_125 = arith.constant 0 : index
    %c0_126 = arith.constant 0 : index
    %398 = vector.load %arg9[%c4_124, %c0_125, %c0_126] : memref<8x5x32xf32, #tpu.memory_space<vmem>>, vector<1x5x32xf32>
    %399 = vector.shape_cast %398 : vector<1x5x32xf32> to vector<5x32xf32>
    %400 = vector.shape_cast %397 : vector<5x32xf32> to vector<1x5x32xf32>
    tpu.vector_store %arg9[%c4_124, %c0_125, %c0_126], %400 {strides = array<i32>} : memref<8x5x32xf32, #tpu.memory_space<vmem>>, vector<1x5x32xf32>,
    %c0_127 = arith.constant 0 : index
    %c0_128 = arith.constant 0 : index
    %401 = vector.load %arg10[%c0_127, %c0_128] : memref<5x32xf32, #tpu.memory_space<vmem>>, vector<5x32xf32>
    %c4_129 = arith.constant 4 : index
    %c0_130 = arith.constant 0 : index
    %c0_131 = arith.constant 0 : index
    %402 = vector.load %arg1[%c4_129, %c0_130, %c0_131] : memref<8x5x96xf32, #tpu.memory_space<vmem>>, vector<1x5x96xf32>
    %403 = vector.shape_cast %402 : vector<1x5x96xf32> to vector<5x96xf32>
    %cst_132 = arith.constant dense<0.000000e+00> : vector<5x96xf32>
    %404 = tpu.matmul %401, %5, %cst_132 {dimension_numbers = #tpu.dot_dimension_numbers<[1], [0], [0], [1], [0, 0, 1, 1], [], []>} : vector<5x32xf32>, vector<32x96xf32>, vector<5x96xf32> -> vector<5x96xf32>
    %405 = vector.broadcast %7 : vector<1x96xf32> to vector<5x96xf32>
    %406 = arith.addf %404, %405 : vector<5x96xf32>
    %407 = vector.extract_strided_slice %403 {offsets = [0, 0], sizes = [5, 32], strides = [1, 1]} : vector<5x96xf32> to vector<5x32xf32>
    %408 = vector.extract_strided_slice %406 {offsets = [0, 0], sizes = [5, 32], strides = [1, 1]} : vector<5x96xf32> to vector<5x32xf32>
    %409 = arith.addf %407, %408 : vector<5x32xf32>
    %410 = arith.negf %409 : vector<5x32xf32>
    %411 = math.exp %410 : vector<5x32xf32>
    %cst_133 = arith.constant 1.000000e+00 : f32
    %412 = vector.broadcast %cst_133 : f32 to vector<5x32xf32>
    %413 = arith.addf %412, %411 : vector<5x32xf32>
    %414 = arith.divf %412, %413 : vector<5x32xf32>
    %415 = vector.extract_strided_slice %403 {offsets = [0, 32], sizes = [5, 32], strides = [1, 1]} : vector<5x96xf32> to vector<5x32xf32>
    %416 = vector.extract_strided_slice %406 {offsets = [0, 32], sizes = [5, 32], strides = [1, 1]} : vector<5x96xf32> to vector<5x32xf32>
    %417 = arith.addf %415, %416 : vector<5x32xf32>
    %418 = arith.negf %417 : vector<5x32xf32>
    %419 = math.exp %418 : vector<5x32xf32>
    %cst_134 = arith.constant 1.000000e+00 : f32
    %420 = vector.broadcast %cst_134 : f32 to vector<5x32xf32>
    %421 = arith.addf %420, %419 : vector<5x32xf32>
    %422 = arith.divf %420, %421 : vector<5x32xf32>
    %423 = vector.extract_strided_slice %403 {offsets = [0, 64], sizes = [5, 32], strides = [1, 1]} : vector<5x96xf32> to vector<5x32xf32>
    %424 = vector.extract_strided_slice %406 {offsets = [0, 64], sizes = [5, 32], strides = [1, 1]} : vector<5x96xf32> to vector<5x32xf32>
    %425 = arith.mulf %414, %424 : vector<5x32xf32>
    %426 = arith.addf %423, %425 : vector<5x32xf32>
    %427 = math.tanh %426 : vector<5x32xf32>
    %cst_135 = arith.constant 1.000000e+00 : f32
    %428 = vector.broadcast %cst_135 : f32 to vector<5x32xf32>
    %429 = arith.subf %428, %422 : vector<5x32xf32>
    %430 = arith.mulf %429, %427 : vector<5x32xf32>
    %431 = arith.mulf %422, %401 : vector<5x32xf32>
    %432 = arith.addf %430, %431 : vector<5x32xf32>
    %c4_i32_136 = arith.constant 4 : i32
    %433 = vector.broadcast %c4_i32_136 : i32 to vector<5x1xi32>
    %434 = arith.cmpi sgt, %4, %433 : vector<5x1xi32>
    %435 = arith.extui %434 : vector<5x1xi1> to vector<5x1xi32>
    %436 = arith.sitofp %435 : vector<5x1xi32> to vector<5x1xf32>
    %437 = vector.broadcast %436 : vector<5x1xf32> to vector<5x32xf32>
    %438 = arith.mulf %437, %432 : vector<5x32xf32>
    %cst_137 = arith.constant 1.000000e+00 : f32
    %439 = vector.broadcast %cst_137 : f32 to vector<5x1xf32>
    %440 = arith.subf %439, %436 : vector<5x1xf32>
    %441 = vector.broadcast %440 : vector<5x1xf32> to vector<5x32xf32>
    %442 = arith.mulf %441, %401 : vector<5x32xf32>
    %443 = arith.addf %438, %442 : vector<5x32xf32>
    %c0_138 = arith.constant 0 : index
    %c0_139 = arith.constant 0 : index
    %444 = vector.load %arg10[%c0_138, %c0_139] : memref<5x32xf32, #tpu.memory_space<vmem>>, vector<5x32xf32>
    tpu.vector_store %arg10[%c0_138, %c0_139], %443 {strides = array<i32>} : memref<5x32xf32, #tpu.memory_space<vmem>>, vector<5x32xf32>,
    %445 = vector.broadcast %436 : vector<5x1xf32> to vector<5x32xf32>
    %446 = arith.mulf %445, %432 : vector<5x32xf32>
    %c4_140 = arith.constant 4 : index
    %c0_141 = arith.constant 0 : index
    %c0_142 = arith.constant 0 : index
    %447 = vector.load %arg8[%c4_140, %c0_141, %c0_142] : memref<8x5x32xf32, #tpu.memory_space<vmem>>, vector<1x5x32xf32>
    %448 = vector.shape_cast %447 : vector<1x5x32xf32> to vector<5x32xf32>
    %449 = vector.shape_cast %446 : vector<5x32xf32> to vector<1x5x32xf32>
    tpu.vector_store %arg8[%c4_140, %c0_141, %c0_142], %449 {strides = array<i32>} : memref<8x5x32xf32, #tpu.memory_space<vmem>>, vector<1x5x32xf32>,
    %c0_143 = arith.constant 0 : index
    %c0_144 = arith.constant 0 : index
    %450 = vector.load %arg11[%c0_143, %c0_144] : memref<5x32xf32, #tpu.memory_space<vmem>>, vector<5x32xf32>
    %c3_145 = arith.constant 3 : index
    %c0_146 = arith.constant 0 : index
    %c0_147 = arith.constant 0 : index
    %451 = vector.load %arg2[%c3_145, %c0_146, %c0_147] : memref<8x5x96xf32, #tpu.memory_space<vmem>>, vector<1x5x96xf32>
    %452 = vector.shape_cast %451 : vector<1x5x96xf32> to vector<5x96xf32>
    %cst_148 = arith.constant dense<0.000000e+00> : vector<5x96xf32>
    %453 = tpu.matmul %450, %6, %cst_148 {dimension_numbers = #tpu.dot_dimension_numbers<[1], [0], [0], [1], [0, 0, 1, 1], [], []>} : vector<5x32xf32>, vector<32x96xf32>, vector<5x96xf32> -> vector<5x96xf32>
    %454 = vector.broadcast %8 : vector<1x96xf32> to vector<5x96xf32>
    %455 = arith.addf %453, %454 : vector<5x96xf32>
    %456 = vector.extract_strided_slice %452 {offsets = [0, 0], sizes = [5, 32], strides = [1, 1]} : vector<5x96xf32> to vector<5x32xf32>
    %457 = vector.extract_strided_slice %455 {offsets = [0, 0], sizes = [5, 32], strides = [1, 1]} : vector<5x96xf32> to vector<5x32xf32>
    %458 = arith.addf %456, %457 : vector<5x32xf32>
    %459 = arith.negf %458 : vector<5x32xf32>
    %460 = math.exp %459 : vector<5x32xf32>
    %cst_149 = arith.constant 1.000000e+00 : f32
    %461 = vector.broadcast %cst_149 : f32 to vector<5x32xf32>
    %462 = arith.addf %461, %460 : vector<5x32xf32>
    %463 = arith.divf %461, %462 : vector<5x32xf32>
    %464 = vector.extract_strided_slice %452 {offsets = [0, 32], sizes = [5, 32], strides = [1, 1]} : vector<5x96xf32> to vector<5x32xf32>
    %465 = vector.extract_strided_slice %455 {offsets = [0, 32], sizes = [5, 32], strides = [1, 1]} : vector<5x96xf32> to vector<5x32xf32>
    %466 = arith.addf %464, %465 : vector<5x32xf32>
    %467 = arith.negf %466 : vector<5x32xf32>
    %468 = math.exp %467 : vector<5x32xf32>
    %cst_150 = arith.constant 1.000000e+00 : f32
    %469 = vector.broadcast %cst_150 : f32 to vector<5x32xf32>
    %470 = arith.addf %469, %468 : vector<5x32xf32>
    %471 = arith.divf %469, %470 : vector<5x32xf32>
    %472 = vector.extract_strided_slice %452 {offsets = [0, 64], sizes = [5, 32], strides = [1, 1]} : vector<5x96xf32> to vector<5x32xf32>
    %473 = vector.extract_strided_slice %455 {offsets = [0, 64], sizes = [5, 32], strides = [1, 1]} : vector<5x96xf32> to vector<5x32xf32>
    %474 = arith.mulf %463, %473 : vector<5x32xf32>
    %475 = arith.addf %472, %474 : vector<5x32xf32>
    %476 = math.tanh %475 : vector<5x32xf32>
    %cst_151 = arith.constant 1.000000e+00 : f32
    %477 = vector.broadcast %cst_151 : f32 to vector<5x32xf32>
    %478 = arith.subf %477, %471 : vector<5x32xf32>
    %479 = arith.mulf %478, %476 : vector<5x32xf32>
    %480 = arith.mulf %471, %450 : vector<5x32xf32>
    %481 = arith.addf %479, %480 : vector<5x32xf32>
    %c3_i32_152 = arith.constant 3 : i32
    %482 = vector.broadcast %c3_i32_152 : i32 to vector<5x1xi32>
    %483 = arith.cmpi sgt, %4, %482 : vector<5x1xi32>
    %484 = arith.extui %483 : vector<5x1xi1> to vector<5x1xi32>
    %485 = arith.sitofp %484 : vector<5x1xi32> to vector<5x1xf32>
    %486 = vector.broadcast %485 : vector<5x1xf32> to vector<5x32xf32>
    %487 = arith.mulf %486, %481 : vector<5x32xf32>
    %cst_153 = arith.constant 1.000000e+00 : f32
    %488 = vector.broadcast %cst_153 : f32 to vector<5x1xf32>
    %489 = arith.subf %488, %485 : vector<5x1xf32>
    %490 = vector.broadcast %489 : vector<5x1xf32> to vector<5x32xf32>
    %491 = arith.mulf %490, %450 : vector<5x32xf32>
    %492 = arith.addf %487, %491 : vector<5x32xf32>
    %c0_154 = arith.constant 0 : index
    %c0_155 = arith.constant 0 : index
    %493 = vector.load %arg11[%c0_154, %c0_155] : memref<5x32xf32, #tpu.memory_space<vmem>>, vector<5x32xf32>
    tpu.vector_store %arg11[%c0_154, %c0_155], %492 {strides = array<i32>} : memref<5x32xf32, #tpu.memory_space<vmem>>, vector<5x32xf32>,
    %494 = vector.broadcast %485 : vector<5x1xf32> to vector<5x32xf32>
    %495 = arith.mulf %494, %481 : vector<5x32xf32>
    %c3_156 = arith.constant 3 : index
    %c0_157 = arith.constant 0 : index
    %c0_158 = arith.constant 0 : index
    %496 = vector.load %arg9[%c3_156, %c0_157, %c0_158] : memref<8x5x32xf32, #tpu.memory_space<vmem>>, vector<1x5x32xf32>
    %497 = vector.shape_cast %496 : vector<1x5x32xf32> to vector<5x32xf32>
    %498 = vector.shape_cast %495 : vector<5x32xf32> to vector<1x5x32xf32>
    tpu.vector_store %arg9[%c3_156, %c0_157, %c0_158], %498 {strides = array<i32>} : memref<8x5x32xf32, #tpu.memory_space<vmem>>, vector<1x5x32xf32>,
    %c0_159 = arith.constant 0 : index
    %c0_160 = arith.constant 0 : index
    %499 = vector.load %arg10[%c0_159, %c0_160] : memref<5x32xf32, #tpu.memory_space<vmem>>, vector<5x32xf32>
    %c5_161 = arith.constant 5 : index
    %c0_162 = arith.constant 0 : index
    %c0_163 = arith.constant 0 : index
    %500 = vector.load %arg1[%c5_161, %c0_162, %c0_163] : memref<8x5x96xf32, #tpu.memory_space<vmem>>, vector<1x5x96xf32>
    %501 = vector.shape_cast %500 : vector<1x5x96xf32> to vector<5x96xf32>
    %cst_164 = arith.constant dense<0.000000e+00> : vector<5x96xf32>
    %502 = tpu.matmul %499, %5, %cst_164 {dimension_numbers = #tpu.dot_dimension_numbers<[1], [0], [0], [1], [0, 0, 1, 1], [], []>} : vector<5x32xf32>, vector<32x96xf32>, vector<5x96xf32> -> vector<5x96xf32>
    %503 = vector.broadcast %7 : vector<1x96xf32> to vector<5x96xf32>
    %504 = arith.addf %502, %503 : vector<5x96xf32>
    %505 = vector.extract_strided_slice %501 {offsets = [0, 0], sizes = [5, 32], strides = [1, 1]} : vector<5x96xf32> to vector<5x32xf32>
    %506 = vector.extract_strided_slice %504 {offsets = [0, 0], sizes = [5, 32], strides = [1, 1]} : vector<5x96xf32> to vector<5x32xf32>
    %507 = arith.addf %505, %506 : vector<5x32xf32>
    %508 = arith.negf %507 : vector<5x32xf32>
    %509 = math.exp %508 : vector<5x32xf32>
    %cst_165 = arith.constant 1.000000e+00 : f32
    %510 = vector.broadcast %cst_165 : f32 to vector<5x32xf32>
    %511 = arith.addf %510, %509 : vector<5x32xf32>
    %512 = arith.divf %510, %511 : vector<5x32xf32>
    %513 = vector.extract_strided_slice %501 {offsets = [0, 32], sizes = [5, 32], strides = [1, 1]} : vector<5x96xf32> to vector<5x32xf32>
    %514 = vector.extract_strided_slice %504 {offsets = [0, 32], sizes = [5, 32], strides = [1, 1]} : vector<5x96xf32> to vector<5x32xf32>
    %515 = arith.addf %513, %514 : vector<5x32xf32>
    %516 = arith.negf %515 : vector<5x32xf32>
    %517 = math.exp %516 : vector<5x32xf32>
    %cst_166 = arith.constant 1.000000e+00 : f32
    %518 = vector.broadcast %cst_166 : f32 to vector<5x32xf32>
    %519 = arith.addf %518, %517 : vector<5x32xf32>
    %520 = arith.divf %518, %519 : vector<5x32xf32>
    %521 = vector.extract_strided_slice %501 {offsets = [0, 64], sizes = [5, 32], strides = [1, 1]} : vector<5x96xf32> to vector<5x32xf32>
    %522 = vector.extract_strided_slice %504 {offsets = [0, 64], sizes = [5, 32], strides = [1, 1]} : vector<5x96xf32> to vector<5x32xf32>
    %523 = arith.mulf %512, %522 : vector<5x32xf32>
    %524 = arith.addf %521, %523 : vector<5x32xf32>
    %525 = math.tanh %524 : vector<5x32xf32>
    %cst_167 = arith.constant 1.000000e+00 : f32
    %526 = vector.broadcast %cst_167 : f32 to vector<5x32xf32>
    %527 = arith.subf %526, %520 : vector<5x32xf32>
    %528 = arith.mulf %527, %525 : vector<5x32xf32>
    %529 = arith.mulf %520, %499 : vector<5x32xf32>
    %530 = arith.addf %528, %529 : vector<5x32xf32>
    %c5_i32_168 = arith.constant 5 : i32
    %531 = vector.broadcast %c5_i32_168 : i32 to vector<5x1xi32>
    %532 = arith.cmpi sgt, %4, %531 : vector<5x1xi32>
    %533 = arith.extui %532 : vector<5x1xi1> to vector<5x1xi32>
    %534 = arith.sitofp %533 : vector<5x1xi32> to vector<5x1xf32>
    %535 = vector.broadcast %534 : vector<5x1xf32> to vector<5x32xf32>
    %536 = arith.mulf %535, %530 : vector<5x32xf32>
    %cst_169 = arith.constant 1.000000e+00 : f32
    %537 = vector.broadcast %cst_169 : f32 to vector<5x1xf32>
    %538 = arith.subf %537, %534 : vector<5x1xf32>
    %539 = vector.broadcast %538 : vector<5x1xf32> to vector<5x32xf32>
    %540 = arith.mulf %539, %499 : vector<5x32xf32>
    %541 = arith.addf %536, %540 : vector<5x32xf32>
    %c0_170 = arith.constant 0 : index
    %c0_171 = arith.constant 0 : index
    %542 = vector.load %arg10[%c0_170, %c0_171] : memref<5x32xf32, #tpu.memory_space<vmem>>, vector<5x32xf32>
    tpu.vector_store %arg10[%c0_170, %c0_171], %541 {strides = array<i32>} : memref<5x32xf32, #tpu.memory_space<vmem>>, vector<5x32xf32>,
    %543 = vector.broadcast %534 : vector<5x1xf32> to vector<5x32xf32>
    %544 = arith.mulf %543, %530 : vector<5x32xf32>
    %c5_172 = arith.constant 5 : index
    %c0_173 = arith.constant 0 : index
    %c0_174 = arith.constant 0 : index
    %545 = vector.load %arg8[%c5_172, %c0_173, %c0_174] : memref<8x5x32xf32, #tpu.memory_space<vmem>>, vector<1x5x32xf32>
    %546 = vector.shape_cast %545 : vector<1x5x32xf32> to vector<5x32xf32>
    %547 = vector.shape_cast %544 : vector<5x32xf32> to vector<1x5x32xf32>
    tpu.vector_store %arg8[%c5_172, %c0_173, %c0_174], %547 {strides = array<i32>} : memref<8x5x32xf32, #tpu.memory_space<vmem>>, vector<1x5x32xf32>,
    %c0_175 = arith.constant 0 : index
    %c0_176 = arith.constant 0 : index
    %548 = vector.load %arg11[%c0_175, %c0_176] : memref<5x32xf32, #tpu.memory_space<vmem>>, vector<5x32xf32>
    %c2_177 = arith.constant 2 : index
    %c0_178 = arith.constant 0 : index
    %c0_179 = arith.constant 0 : index
    %549 = vector.load %arg2[%c2_177, %c0_178, %c0_179] : memref<8x5x96xf32, #tpu.memory_space<vmem>>, vector<1x5x96xf32>
    %550 = vector.shape_cast %549 : vector<1x5x96xf32> to vector<5x96xf32>
    %cst_180 = arith.constant dense<0.000000e+00> : vector<5x96xf32>
    %551 = tpu.matmul %548, %6, %cst_180 {dimension_numbers = #tpu.dot_dimension_numbers<[1], [0], [0], [1], [0, 0, 1, 1], [], []>} : vector<5x32xf32>, vector<32x96xf32>, vector<5x96xf32> -> vector<5x96xf32>
    %552 = vector.broadcast %8 : vector<1x96xf32> to vector<5x96xf32>
    %553 = arith.addf %551, %552 : vector<5x96xf32>
    %554 = vector.extract_strided_slice %550 {offsets = [0, 0], sizes = [5, 32], strides = [1, 1]} : vector<5x96xf32> to vector<5x32xf32>
    %555 = vector.extract_strided_slice %553 {offsets = [0, 0], sizes = [5, 32], strides = [1, 1]} : vector<5x96xf32> to vector<5x32xf32>
    %556 = arith.addf %554, %555 : vector<5x32xf32>
    %557 = arith.negf %556 : vector<5x32xf32>
    %558 = math.exp %557 : vector<5x32xf32>
    %cst_181 = arith.constant 1.000000e+00 : f32
    %559 = vector.broadcast %cst_181 : f32 to vector<5x32xf32>
    %560 = arith.addf %559, %558 : vector<5x32xf32>
    %561 = arith.divf %559, %560 : vector<5x32xf32>
    %562 = vector.extract_strided_slice %550 {offsets = [0, 32], sizes = [5, 32], strides = [1, 1]} : vector<5x96xf32> to vector<5x32xf32>
    %563 = vector.extract_strided_slice %553 {offsets = [0, 32], sizes = [5, 32], strides = [1, 1]} : vector<5x96xf32> to vector<5x32xf32>
    %564 = arith.addf %562, %563 : vector<5x32xf32>
    %565 = arith.negf %564 : vector<5x32xf32>
    %566 = math.exp %565 : vector<5x32xf32>
    %cst_182 = arith.constant 1.000000e+00 : f32
    %567 = vector.broadcast %cst_182 : f32 to vector<5x32xf32>
    %568 = arith.addf %567, %566 : vector<5x32xf32>
    %569 = arith.divf %567, %568 : vector<5x32xf32>
    %570 = vector.extract_strided_slice %550 {offsets = [0, 64], sizes = [5, 32], strides = [1, 1]} : vector<5x96xf32> to vector<5x32xf32>
    %571 = vector.extract_strided_slice %553 {offsets = [0, 64], sizes = [5, 32], strides = [1, 1]} : vector<5x96xf32> to vector<5x32xf32>
    %572 = arith.mulf %561, %571 : vector<5x32xf32>
    %573 = arith.addf %570, %572 : vector<5x32xf32>
    %574 = math.tanh %573 : vector<5x32xf32>
    %cst_183 = arith.constant 1.000000e+00 : f32
    %575 = vector.broadcast %cst_183 : f32 to vector<5x32xf32>
    %576 = arith.subf %575, %569 : vector<5x32xf32>
    %577 = arith.mulf %576, %574 : vector<5x32xf32>
    %578 = arith.mulf %569, %548 : vector<5x32xf32>
    %579 = arith.addf %577, %578 : vector<5x32xf32>
    %c2_i32_184 = arith.constant 2 : i32
    %580 = vector.broadcast %c2_i32_184 : i32 to vector<5x1xi32>
    %581 = arith.cmpi sgt, %4, %580 : vector<5x1xi32>
    %582 = arith.extui %581 : vector<5x1xi1> to vector<5x1xi32>
    %583 = arith.sitofp %582 : vector<5x1xi32> to vector<5x1xf32>
    %584 = vector.broadcast %583 : vector<5x1xf32> to vector<5x32xf32>
    %585 = arith.mulf %584, %579 : vector<5x32xf32>
    %cst_185 = arith.constant 1.000000e+00 : f32
    %586 = vector.broadcast %cst_185 : f32 to vector<5x1xf32>
    %587 = arith.subf %586, %583 : vector<5x1xf32>
    %588 = vector.broadcast %587 : vector<5x1xf32> to vector<5x32xf32>
    %589 = arith.mulf %588, %548 : vector<5x32xf32>
    %590 = arith.addf %585, %589 : vector<5x32xf32>
    %c0_186 = arith.constant 0 : index
    %c0_187 = arith.constant 0 : index
    %591 = vector.load %arg11[%c0_186, %c0_187] : memref<5x32xf32, #tpu.memory_space<vmem>>, vector<5x32xf32>
    tpu.vector_store %arg11[%c0_186, %c0_187], %590 {strides = array<i32>} : memref<5x32xf32, #tpu.memory_space<vmem>>, vector<5x32xf32>,
    %592 = vector.broadcast %583 : vector<5x1xf32> to vector<5x32xf32>
    %593 = arith.mulf %592, %579 : vector<5x32xf32>
    %c2_188 = arith.constant 2 : index
    %c0_189 = arith.constant 0 : index
    %c0_190 = arith.constant 0 : index
    %594 = vector.load %arg9[%c2_188, %c0_189, %c0_190] : memref<8x5x32xf32, #tpu.memory_space<vmem>>, vector<1x5x32xf32>
    %595 = vector.shape_cast %594 : vector<1x5x32xf32> to vector<5x32xf32>
    %596 = vector.shape_cast %593 : vector<5x32xf32> to vector<1x5x32xf32>
    tpu.vector_store %arg9[%c2_188, %c0_189, %c0_190], %596 {strides = array<i32>} : memref<8x5x32xf32, #tpu.memory_space<vmem>>, vector<1x5x32xf32>,
    %c0_191 = arith.constant 0 : index
    %c0_192 = arith.constant 0 : index
    %597 = vector.load %arg10[%c0_191, %c0_192] : memref<5x32xf32, #tpu.memory_space<vmem>>, vector<5x32xf32>
    %c6_193 = arith.constant 6 : index
    %c0_194 = arith.constant 0 : index
    %c0_195 = arith.constant 0 : index
    %598 = vector.load %arg1[%c6_193, %c0_194, %c0_195] : memref<8x5x96xf32, #tpu.memory_space<vmem>>, vector<1x5x96xf32>
    %599 = vector.shape_cast %598 : vector<1x5x96xf32> to vector<5x96xf32>
    %cst_196 = arith.constant dense<0.000000e+00> : vector<5x96xf32>
    %600 = tpu.matmul %597, %5, %cst_196 {dimension_numbers = #tpu.dot_dimension_numbers<[1], [0], [0], [1], [0, 0, 1, 1], [], []>} : vector<5x32xf32>, vector<32x96xf32>, vector<5x96xf32> -> vector<5x96xf32>
    %601 = vector.broadcast %7 : vector<1x96xf32> to vector<5x96xf32>
    %602 = arith.addf %600, %601 : vector<5x96xf32>
    %603 = vector.extract_strided_slice %599 {offsets = [0, 0], sizes = [5, 32], strides = [1, 1]} : vector<5x96xf32> to vector<5x32xf32>
    %604 = vector.extract_strided_slice %602 {offsets = [0, 0], sizes = [5, 32], strides = [1, 1]} : vector<5x96xf32> to vector<5x32xf32>
    %605 = arith.addf %603, %604 : vector<5x32xf32>
    %606 = arith.negf %605 : vector<5x32xf32>
    %607 = math.exp %606 : vector<5x32xf32>
    %cst_197 = arith.constant 1.000000e+00 : f32
    %608 = vector.broadcast %cst_197 : f32 to vector<5x32xf32>
    %609 = arith.addf %608, %607 : vector<5x32xf32>
    %610 = arith.divf %608, %609 : vector<5x32xf32>
    %611 = vector.extract_strided_slice %599 {offsets = [0, 32], sizes = [5, 32], strides = [1, 1]} : vector<5x96xf32> to vector<5x32xf32>
    %612 = vector.extract_strided_slice %602 {offsets = [0, 32], sizes = [5, 32], strides = [1, 1]} : vector<5x96xf32> to vector<5x32xf32>
    %613 = arith.addf %611, %612 : vector<5x32xf32>
    %614 = arith.negf %613 : vector<5x32xf32>
    %615 = math.exp %614 : vector<5x32xf32>
    %cst_198 = arith.constant 1.000000e+00 : f32
    %616 = vector.broadcast %cst_198 : f32 to vector<5x32xf32>
    %617 = arith.addf %616, %615 : vector<5x32xf32>
    %618 = arith.divf %616, %617 : vector<5x32xf32>
    %619 = vector.extract_strided_slice %599 {offsets = [0, 64], sizes = [5, 32], strides = [1, 1]} : vector<5x96xf32> to vector<5x32xf32>
    %620 = vector.extract_strided_slice %602 {offsets = [0, 64], sizes = [5, 32], strides = [1, 1]} : vector<5x96xf32> to vector<5x32xf32>
    %621 = arith.mulf %610, %620 : vector<5x32xf32>
    %622 = arith.addf %619, %621 : vector<5x32xf32>
    %623 = math.tanh %622 : vector<5x32xf32>
    %cst_199 = arith.constant 1.000000e+00 : f32
    %624 = vector.broadcast %cst_199 : f32 to vector<5x32xf32>
    %625 = arith.subf %624, %618 : vector<5x32xf32>
    %626 = arith.mulf %625, %623 : vector<5x32xf32>
    %627 = arith.mulf %618, %597 : vector<5x32xf32>
    %628 = arith.addf %626, %627 : vector<5x32xf32>
    %c6_i32_200 = arith.constant 6 : i32
    %629 = vector.broadcast %c6_i32_200 : i32 to vector<5x1xi32>
    %630 = arith.cmpi sgt, %4, %629 : vector<5x1xi32>
    %631 = arith.extui %630 : vector<5x1xi1> to vector<5x1xi32>
    %632 = arith.sitofp %631 : vector<5x1xi32> to vector<5x1xf32>
    %633 = vector.broadcast %632 : vector<5x1xf32> to vector<5x32xf32>
    %634 = arith.mulf %633, %628 : vector<5x32xf32>
    %cst_201 = arith.constant 1.000000e+00 : f32
    %635 = vector.broadcast %cst_201 : f32 to vector<5x1xf32>
    %636 = arith.subf %635, %632 : vector<5x1xf32>
    %637 = vector.broadcast %636 : vector<5x1xf32> to vector<5x32xf32>
    %638 = arith.mulf %637, %597 : vector<5x32xf32>
    %639 = arith.addf %634, %638 : vector<5x32xf32>
    %c0_202 = arith.constant 0 : index
    %c0_203 = arith.constant 0 : index
    %640 = vector.load %arg10[%c0_202, %c0_203] : memref<5x32xf32, #tpu.memory_space<vmem>>, vector<5x32xf32>
    tpu.vector_store %arg10[%c0_202, %c0_203], %639 {strides = array<i32>} : memref<5x32xf32, #tpu.memory_space<vmem>>, vector<5x32xf32>,
    %641 = vector.broadcast %632 : vector<5x1xf32> to vector<5x32xf32>
    %642 = arith.mulf %641, %628 : vector<5x32xf32>
    %c6_204 = arith.constant 6 : index
    %c0_205 = arith.constant 0 : index
    %c0_206 = arith.constant 0 : index
    %643 = vector.load %arg8[%c6_204, %c0_205, %c0_206] : memref<8x5x32xf32, #tpu.memory_space<vmem>>, vector<1x5x32xf32>
    %644 = vector.shape_cast %643 : vector<1x5x32xf32> to vector<5x32xf32>
    %645 = vector.shape_cast %642 : vector<5x32xf32> to vector<1x5x32xf32>
    tpu.vector_store %arg8[%c6_204, %c0_205, %c0_206], %645 {strides = array<i32>} : memref<8x5x32xf32, #tpu.memory_space<vmem>>, vector<1x5x32xf32>,
    %c0_207 = arith.constant 0 : index
    %c0_208 = arith.constant 0 : index
    %646 = vector.load %arg11[%c0_207, %c0_208] : memref<5x32xf32, #tpu.memory_space<vmem>>, vector<5x32xf32>
    %c1_209 = arith.constant 1 : index
    %c0_210 = arith.constant 0 : index
    %c0_211 = arith.constant 0 : index
    %647 = vector.load %arg2[%c1_209, %c0_210, %c0_211] : memref<8x5x96xf32, #tpu.memory_space<vmem>>, vector<1x5x96xf32>
    %648 = vector.shape_cast %647 : vector<1x5x96xf32> to vector<5x96xf32>
    %cst_212 = arith.constant dense<0.000000e+00> : vector<5x96xf32>
    %649 = tpu.matmul %646, %6, %cst_212 {dimension_numbers = #tpu.dot_dimension_numbers<[1], [0], [0], [1], [0, 0, 1, 1], [], []>} : vector<5x32xf32>, vector<32x96xf32>, vector<5x96xf32> -> vector<5x96xf32>
    %650 = vector.broadcast %8 : vector<1x96xf32> to vector<5x96xf32>
    %651 = arith.addf %649, %650 : vector<5x96xf32>
    %652 = vector.extract_strided_slice %648 {offsets = [0, 0], sizes = [5, 32], strides = [1, 1]} : vector<5x96xf32> to vector<5x32xf32>
    %653 = vector.extract_strided_slice %651 {offsets = [0, 0], sizes = [5, 32], strides = [1, 1]} : vector<5x96xf32> to vector<5x32xf32>
    %654 = arith.addf %652, %653 : vector<5x32xf32>
    %655 = arith.negf %654 : vector<5x32xf32>
    %656 = math.exp %655 : vector<5x32xf32>
    %cst_213 = arith.constant 1.000000e+00 : f32
    %657 = vector.broadcast %cst_213 : f32 to vector<5x32xf32>
    %658 = arith.addf %657, %656 : vector<5x32xf32>
    %659 = arith.divf %657, %658 : vector<5x32xf32>
    %660 = vector.extract_strided_slice %648 {offsets = [0, 32], sizes = [5, 32], strides = [1, 1]} : vector<5x96xf32> to vector<5x32xf32>
    %661 = vector.extract_strided_slice %651 {offsets = [0, 32], sizes = [5, 32], strides = [1, 1]} : vector<5x96xf32> to vector<5x32xf32>
    %662 = arith.addf %660, %661 : vector<5x32xf32>
    %663 = arith.negf %662 : vector<5x32xf32>
    %664 = math.exp %663 : vector<5x32xf32>
    %cst_214 = arith.constant 1.000000e+00 : f32
    %665 = vector.broadcast %cst_214 : f32 to vector<5x32xf32>
    %666 = arith.addf %665, %664 : vector<5x32xf32>
    %667 = arith.divf %665, %666 : vector<5x32xf32>
    %668 = vector.extract_strided_slice %648 {offsets = [0, 64], sizes = [5, 32], strides = [1, 1]} : vector<5x96xf32> to vector<5x32xf32>
    %669 = vector.extract_strided_slice %651 {offsets = [0, 64], sizes = [5, 32], strides = [1, 1]} : vector<5x96xf32> to vector<5x32xf32>
    %670 = arith.mulf %659, %669 : vector<5x32xf32>
    %671 = arith.addf %668, %670 : vector<5x32xf32>
    %672 = math.tanh %671 : vector<5x32xf32>
    %cst_215 = arith.constant 1.000000e+00 : f32
    %673 = vector.broadcast %cst_215 : f32 to vector<5x32xf32>
    %674 = arith.subf %673, %667 : vector<5x32xf32>
    %675 = arith.mulf %674, %672 : vector<5x32xf32>
    %676 = arith.mulf %667, %646 : vector<5x32xf32>
    %677 = arith.addf %675, %676 : vector<5x32xf32>
    %c1_i32_216 = arith.constant 1 : i32
    %678 = vector.broadcast %c1_i32_216 : i32 to vector<5x1xi32>
    %679 = arith.cmpi sgt, %4, %678 : vector<5x1xi32>
    %680 = arith.extui %679 : vector<5x1xi1> to vector<5x1xi32>
    %681 = arith.sitofp %680 : vector<5x1xi32> to vector<5x1xf32>
    %682 = vector.broadcast %681 : vector<5x1xf32> to vector<5x32xf32>
    %683 = arith.mulf %682, %677 : vector<5x32xf32>
    %cst_217 = arith.constant 1.000000e+00 : f32
    %684 = vector.broadcast %cst_217 : f32 to vector<5x1xf32>
    %685 = arith.subf %684, %681 : vector<5x1xf32>
    %686 = vector.broadcast %685 : vector<5x1xf32> to vector<5x32xf32>
    %687 = arith.mulf %686, %646 : vector<5x32xf32>
    %688 = arith.addf %683, %687 : vector<5x32xf32>
    %c0_218 = arith.constant 0 : index
    %c0_219 = arith.constant 0 : index
    %689 = vector.load %arg11[%c0_218, %c0_219] : memref<5x32xf32, #tpu.memory_space<vmem>>, vector<5x32xf32>
    tpu.vector_store %arg11[%c0_218, %c0_219], %688 {strides = array<i32>} : memref<5x32xf32, #tpu.memory_space<vmem>>, vector<5x32xf32>,
    %690 = vector.broadcast %681 : vector<5x1xf32> to vector<5x32xf32>
    %691 = arith.mulf %690, %677 : vector<5x32xf32>
    %c1_220 = arith.constant 1 : index
    %c0_221 = arith.constant 0 : index
    %c0_222 = arith.constant 0 : index
    %692 = vector.load %arg9[%c1_220, %c0_221, %c0_222] : memref<8x5x32xf32, #tpu.memory_space<vmem>>, vector<1x5x32xf32>
    %693 = vector.shape_cast %692 : vector<1x5x32xf32> to vector<5x32xf32>
    %694 = vector.shape_cast %691 : vector<5x32xf32> to vector<1x5x32xf32>
    tpu.vector_store %arg9[%c1_220, %c0_221, %c0_222], %694 {strides = array<i32>} : memref<8x5x32xf32, #tpu.memory_space<vmem>>, vector<1x5x32xf32>,
    %c0_223 = arith.constant 0 : index
    %c0_224 = arith.constant 0 : index
    %695 = vector.load %arg10[%c0_223, %c0_224] : memref<5x32xf32, #tpu.memory_space<vmem>>, vector<5x32xf32>
    %c7_225 = arith.constant 7 : index
    %c0_226 = arith.constant 0 : index
    %c0_227 = arith.constant 0 : index
    %696 = vector.load %arg1[%c7_225, %c0_226, %c0_227] : memref<8x5x96xf32, #tpu.memory_space<vmem>>, vector<1x5x96xf32>
    %697 = vector.shape_cast %696 : vector<1x5x96xf32> to vector<5x96xf32>
    %cst_228 = arith.constant dense<0.000000e+00> : vector<5x96xf32>
    %698 = tpu.matmul %695, %5, %cst_228 {dimension_numbers = #tpu.dot_dimension_numbers<[1], [0], [0], [1], [0, 0, 1, 1], [], []>} : vector<5x32xf32>, vector<32x96xf32>, vector<5x96xf32> -> vector<5x96xf32>
    %699 = vector.broadcast %7 : vector<1x96xf32> to vector<5x96xf32>
    %700 = arith.addf %698, %699 : vector<5x96xf32>
    %701 = vector.extract_strided_slice %697 {offsets = [0, 0], sizes = [5, 32], strides = [1, 1]} : vector<5x96xf32> to vector<5x32xf32>
    %702 = vector.extract_strided_slice %700 {offsets = [0, 0], sizes = [5, 32], strides = [1, 1]} : vector<5x96xf32> to vector<5x32xf32>
    %703 = arith.addf %701, %702 : vector<5x32xf32>
    %704 = arith.negf %703 : vector<5x32xf32>
    %705 = math.exp %704 : vector<5x32xf32>
    %cst_229 = arith.constant 1.000000e+00 : f32
    %706 = vector.broadcast %cst_229 : f32 to vector<5x32xf32>
    %707 = arith.addf %706, %705 : vector<5x32xf32>
    %708 = arith.divf %706, %707 : vector<5x32xf32>
    %709 = vector.extract_strided_slice %697 {offsets = [0, 32], sizes = [5, 32], strides = [1, 1]} : vector<5x96xf32> to vector<5x32xf32>
    %710 = vector.extract_strided_slice %700 {offsets = [0, 32], sizes = [5, 32], strides = [1, 1]} : vector<5x96xf32> to vector<5x32xf32>
    %711 = arith.addf %709, %710 : vector<5x32xf32>
    %712 = arith.negf %711 : vector<5x32xf32>
    %713 = math.exp %712 : vector<5x32xf32>
    %cst_230 = arith.constant 1.000000e+00 : f32
    %714 = vector.broadcast %cst_230 : f32 to vector<5x32xf32>
    %715 = arith.addf %714, %713 : vector<5x32xf32>
    %716 = arith.divf %714, %715 : vector<5x32xf32>
    %717 = vector.extract_strided_slice %697 {offsets = [0, 64], sizes = [5, 32], strides = [1, 1]} : vector<5x96xf32> to vector<5x32xf32>
    %718 = vector.extract_strided_slice %700 {offsets = [0, 64], sizes = [5, 32], strides = [1, 1]} : vector<5x96xf32> to vector<5x32xf32>
    %719 = arith.mulf %708, %718 : vector<5x32xf32>
    %720 = arith.addf %717, %719 : vector<5x32xf32>
    %721 = math.tanh %720 : vector<5x32xf32>
    %cst_231 = arith.constant 1.000000e+00 : f32
    %722 = vector.broadcast %cst_231 : f32 to vector<5x32xf32>
    %723 = arith.subf %722, %716 : vector<5x32xf32>
    %724 = arith.mulf %723, %721 : vector<5x32xf32>
    %725 = arith.mulf %716, %695 : vector<5x32xf32>
    %726 = arith.addf %724, %725 : vector<5x32xf32>
    %c7_i32_232 = arith.constant 7 : i32
    %727 = vector.broadcast %c7_i32_232 : i32 to vector<5x1xi32>
    %728 = arith.cmpi sgt, %4, %727 : vector<5x1xi32>
    %729 = arith.extui %728 : vector<5x1xi1> to vector<5x1xi32>
    %730 = arith.sitofp %729 : vector<5x1xi32> to vector<5x1xf32>
    %731 = vector.broadcast %730 : vector<5x1xf32> to vector<5x32xf32>
    %732 = arith.mulf %731, %726 : vector<5x32xf32>
    %cst_233 = arith.constant 1.000000e+00 : f32
    %733 = vector.broadcast %cst_233 : f32 to vector<5x1xf32>
    %734 = arith.subf %733, %730 : vector<5x1xf32>
    %735 = vector.broadcast %734 : vector<5x1xf32> to vector<5x32xf32>
    %736 = arith.mulf %735, %695 : vector<5x32xf32>
    %737 = arith.addf %732, %736 : vector<5x32xf32>
    %c0_234 = arith.constant 0 : index
    %c0_235 = arith.constant 0 : index
    %738 = vector.load %arg10[%c0_234, %c0_235] : memref<5x32xf32, #tpu.memory_space<vmem>>, vector<5x32xf32>
    tpu.vector_store %arg10[%c0_234, %c0_235], %737 {strides = array<i32>} : memref<5x32xf32, #tpu.memory_space<vmem>>, vector<5x32xf32>,
    %739 = vector.broadcast %730 : vector<5x1xf32> to vector<5x32xf32>
    %740 = arith.mulf %739, %726 : vector<5x32xf32>
    %c7_236 = arith.constant 7 : index
    %c0_237 = arith.constant 0 : index
    %c0_238 = arith.constant 0 : index
    %741 = vector.load %arg8[%c7_236, %c0_237, %c0_238] : memref<8x5x32xf32, #tpu.memory_space<vmem>>, vector<1x5x32xf32>
    %742 = vector.shape_cast %741 : vector<1x5x32xf32> to vector<5x32xf32>
    %743 = vector.shape_cast %740 : vector<5x32xf32> to vector<1x5x32xf32>
    tpu.vector_store %arg8[%c7_236, %c0_237, %c0_238], %743 {strides = array<i32>} : memref<8x5x32xf32, #tpu.memory_space<vmem>>, vector<1x5x32xf32>,
    %c0_239 = arith.constant 0 : index
    %c0_240 = arith.constant 0 : index
    %744 = vector.load %arg11[%c0_239, %c0_240] : memref<5x32xf32, #tpu.memory_space<vmem>>, vector<5x32xf32>
    %c0_241 = arith.constant 0 : index
    %c0_242 = arith.constant 0 : index
    %c0_243 = arith.constant 0 : index
    %745 = vector.load %arg2[%c0_241, %c0_242, %c0_243] : memref<8x5x96xf32, #tpu.memory_space<vmem>>, vector<1x5x96xf32>
    %746 = vector.shape_cast %745 : vector<1x5x96xf32> to vector<5x96xf32>
    %cst_244 = arith.constant dense<0.000000e+00> : vector<5x96xf32>
    %747 = tpu.matmul %744, %6, %cst_244 {dimension_numbers = #tpu.dot_dimension_numbers<[1], [0], [0], [1], [0, 0, 1, 1], [], []>} : vector<5x32xf32>, vector<32x96xf32>, vector<5x96xf32> -> vector<5x96xf32>
    %748 = vector.broadcast %8 : vector<1x96xf32> to vector<5x96xf32>
    %749 = arith.addf %747, %748 : vector<5x96xf32>
    %750 = vector.extract_strided_slice %746 {offsets = [0, 0], sizes = [5, 32], strides = [1, 1]} : vector<5x96xf32> to vector<5x32xf32>
    %751 = vector.extract_strided_slice %749 {offsets = [0, 0], sizes = [5, 32], strides = [1, 1]} : vector<5x96xf32> to vector<5x32xf32>
    %752 = arith.addf %750, %751 : vector<5x32xf32>
    %753 = arith.negf %752 : vector<5x32xf32>
    %754 = math.exp %753 : vector<5x32xf32>
    %cst_245 = arith.constant 1.000000e+00 : f32
    %755 = vector.broadcast %cst_245 : f32 to vector<5x32xf32>
    %756 = arith.addf %755, %754 : vector<5x32xf32>
    %757 = arith.divf %755, %756 : vector<5x32xf32>
    %758 = vector.extract_strided_slice %746 {offsets = [0, 32], sizes = [5, 32], strides = [1, 1]} : vector<5x96xf32> to vector<5x32xf32>
    %759 = vector.extract_strided_slice %749 {offsets = [0, 32], sizes = [5, 32], strides = [1, 1]} : vector<5x96xf32> to vector<5x32xf32>
    %760 = arith.addf %758, %759 : vector<5x32xf32>
    %761 = arith.negf %760 : vector<5x32xf32>
    %762 = math.exp %761 : vector<5x32xf32>
    %cst_246 = arith.constant 1.000000e+00 : f32
    %763 = vector.broadcast %cst_246 : f32 to vector<5x32xf32>
    %764 = arith.addf %763, %762 : vector<5x32xf32>
    %765 = arith.divf %763, %764 : vector<5x32xf32>
    %766 = vector.extract_strided_slice %746 {offsets = [0, 64], sizes = [5, 32], strides = [1, 1]} : vector<5x96xf32> to vector<5x32xf32>
    %767 = vector.extract_strided_slice %749 {offsets = [0, 64], sizes = [5, 32], strides = [1, 1]} : vector<5x96xf32> to vector<5x32xf32>
    %768 = arith.mulf %757, %767 : vector<5x32xf32>
    %769 = arith.addf %766, %768 : vector<5x32xf32>
    %770 = math.tanh %769 : vector<5x32xf32>
    %cst_247 = arith.constant 1.000000e+00 : f32
    %771 = vector.broadcast %cst_247 : f32 to vector<5x32xf32>
    %772 = arith.subf %771, %765 : vector<5x32xf32>
    %773 = arith.mulf %772, %770 : vector<5x32xf32>
    %774 = arith.mulf %765, %744 : vector<5x32xf32>
    %775 = arith.addf %773, %774 : vector<5x32xf32>
    %c0_i32_248 = arith.constant 0 : i32
    %776 = vector.broadcast %c0_i32_248 : i32 to vector<5x1xi32>
    %777 = arith.cmpi sgt, %4, %776 : vector<5x1xi32>
    %778 = arith.extui %777 : vector<5x1xi1> to vector<5x1xi32>
    %779 = arith.sitofp %778 : vector<5x1xi32> to vector<5x1xf32>
    %780 = vector.broadcast %779 : vector<5x1xf32> to vector<5x32xf32>
    %781 = arith.mulf %780, %775 : vector<5x32xf32>
    %cst_249 = arith.constant 1.000000e+00 : f32
    %782 = vector.broadcast %cst_249 : f32 to vector<5x1xf32>
    %783 = arith.subf %782, %779 : vector<5x1xf32>
    %784 = vector.broadcast %783 : vector<5x1xf32> to vector<5x32xf32>
    %785 = arith.mulf %784, %744 : vector<5x32xf32>
    %786 = arith.addf %781, %785 : vector<5x32xf32>
    %c0_250 = arith.constant 0 : index
    %c0_251 = arith.constant 0 : index
    %787 = vector.load %arg11[%c0_250, %c0_251] : memref<5x32xf32, #tpu.memory_space<vmem>>, vector<5x32xf32>
    tpu.vector_store %arg11[%c0_250, %c0_251], %786 {strides = array<i32>} : memref<5x32xf32, #tpu.memory_space<vmem>>, vector<5x32xf32>,
    %788 = vector.broadcast %779 : vector<5x1xf32> to vector<5x32xf32>
    %789 = arith.mulf %788, %775 : vector<5x32xf32>
    %c0_252 = arith.constant 0 : index
    %c0_253 = arith.constant 0 : index
    %c0_254 = arith.constant 0 : index
    %790 = vector.load %arg9[%c0_252, %c0_253, %c0_254] : memref<8x5x32xf32, #tpu.memory_space<vmem>>, vector<1x5x32xf32>
    %791 = vector.shape_cast %790 : vector<1x5x32xf32> to vector<5x32xf32>
    %792 = vector.shape_cast %789 : vector<5x32xf32> to vector<1x5x32xf32>
    tpu.vector_store %arg9[%c0_252, %c0_253, %c0_254], %792 {strides = array<i32>} : memref<8x5x32xf32, #tpu.memory_space<vmem>>, vector<1x5x32xf32>,
    return
  }
  func.func @transform_0(%arg0: i32) -> (i32, i32, i32) {
    %c0_i32 = arith.constant 0 : i32
    %c0_i32_0 = arith.constant 0 : i32
    %c0_i32_1 = arith.constant 0 : i32
    %c0_i32_2 = arith.constant 0 : i32
    return %c0_i32, %c0_i32_0, %c0_i32_1 : i32, i32, i32
  }
  func.func @transform_1(%arg0: i32) -> (i32, i32, i32) {
    %c0_i32 = arith.constant 0 : i32
    %c0_i32_0 = arith.constant 0 : i32
    %c0_i32_1 = arith.constant 0 : i32
    %c0_i32_2 = arith.constant 0 : i32
    return %c0_i32, %c0_i32_0, %c0_i32_1 : i32, i32, i32
  }
  func.func @transform_2(%arg0: i32) -> (i32, i32) {
    %c0_i32 = arith.constant 0 : i32
    %c0_i32_0 = arith.constant 0 : i32
    %c0_i32_1 = arith.constant 0 : i32
    return %c0_i32, %c0_i32_0 : i32, i32
  }
  func.func @transform_3(%arg0: i32) -> (i32, i32) {
    %c0_i32 = arith.constant 0 : i32
    %c0_i32_0 = arith.constant 0 : i32
    %c0_i32_1 = arith.constant 0 : i32
    return %c0_i32, %c0_i32_0 : i32, i32
  }
  func.func @transform_4(%arg0: i32) -> (i32, i32) {
    %c0_i32 = arith.constant 0 : i32
    %c0_i32_0 = arith.constant 0 : i32
    %c0_i32_1 = arith.constant 0 : i32
    return %c0_i32, %c0_i32_0 : i32, i32
  }
  func.func @transform_5(%arg0: i32) -> (i32, i32) {
    %c0_i32 = arith.constant 0 : i32
    %c0_i32_0 = arith.constant 0 : i32
    %c0_i32_1 = arith.constant 0 : i32
    return %c0_i32, %c0_i32_0 : i32, i32
  }
  func.func @transform_6(%arg0: i32) -> (i32, i32) {
    %c0_i32 = arith.constant 0 : i32
    %c0_i32_0 = arith.constant 0 : i32
    %c0_i32_1 = arith.constant 0 : i32
    return %c0_i32, %c0_i32_0 : i32, i32
  }
  func.func @transform_7(%arg0: i32) -> (i32, i32, i32) {
    %c0_i32 = arith.constant 0 : i32
    %c0_i32_0 = arith.constant 0 : i32
    %c0_i32_1 = arith.constant 0 : i32
    %c0_i32_2 = arith.constant 0 : i32
    return %c0_i32, %c0_i32_0, %c0_i32_1 : i32, i32, i32
  }
  func.func @transform_8(%arg0: i32) -> (i32, i32, i32) {
    %c0_i32 = arith.constant 0 : i32
    %c0_i32_0 = arith.constant 0 : i32
    %c0_i32_1 = arith.constant 0 : i32
    %c0_i32_2 = arith.constant 0 : i32
    return %c0_i32, %c0_i32_0, %c0_i32_1 : i32, i32, i32
  }
}

</mosaic_0001>

<llo_original>
// kernel: tpu_custom_call.1
$region0: #{tpu_custom_call.1}
  #allocation0 [shape = 'u32[]', space=smem, size = 0x4, offset = 0x4, fixed_abs, tag = 'smem constant byte address 0x4 - core index']
  #allocation1 [shape = 'u32[144,128]{1,0:T(1,128)}', space=vmem, size = 0x12000, scoped, tag = 'internal scratch']
  #allocation2 [shape = 'f32[5,32]{1,0:T(8,128)}', space=vmem, size = 0x1000, scoped, tag = 'scratch operand']
  #allocation3 [shape = 'f32[5,32]{1,0:T(8,128)}', space=vmem, size = 0x1000, scoped, tag = 'scratch operand']
  %s0 = inlined_call_operand.vmem [shape: f32[8,5,96], index: 0, kind: input, shape index: {}]
  %s1 = inlined_call_operand.vmem [shape: f32[8,5,96], index: 1, kind: input, shape index: {}]
  %s2 = inlined_call_operand.vmem [shape: s32[5,1], index: 2, kind: input, shape index: {}]
  %s3 = inlined_call_operand.vmem [shape: f32[32,96], index: 3, kind: input, shape index: {}]
  %s4 = inlined_call_operand.vmem [shape: f32[32,96], index: 4, kind: input, shape index: {}]
  %s5 = inlined_call_operand.vmem [shape: f32[1,96], index: 5, kind: input, shape index: {}]
  %s6 = inlined_call_operand.vmem [shape: f32[1,96], index: 6, kind: input, shape index: {}]
  %s7 = inlined_call_operand.vmem [shape: f32[8,5,32], index: 7, kind: output, shape index: {0}]
  %s8 = inlined_call_operand.vmem [shape: f32[8,5,32], index: 8, kind: output, shape index: {1}]
  %9 = xla_tuple %s7, %s8
  %s10 = sld [smem:[#allocation0]]
  $region46: #{tpu_custom_call.1} parent=0
    _
  %s12 = ssub.s32 1, %s10
  %s13 = scalar_select 0, %s12, %s10
  // Predicated region
  $region2: #{tpu_custom_call.1} parent=0 // pred_check
    _
  $region3: #{tpu_custom_call.1} parent=0 // pred_check_branch
    %15 = sbr.rel (0) target = $region5
  $region4: #{tpu_custom_call.1} parent=0 // pred_region
    _
  $region5: #{tpu_custom_call.1} parent=0 // pred_fallthru
    _
  // Predicated region
  $region6: #{tpu_custom_call.1} parent=0 // pred_check
    _
  $region7: #{tpu_custom_call.1} parent=0 // pred_check_branch
    %17 = sbr.rel (0) target = $region9
  $region8: #{tpu_custom_call.1} parent=0 // pred_region
    _
  $region9: #{tpu_custom_call.1} parent=0 // pred_fallthru
    _
  // Predicated region
  $region10: #{tpu_custom_call.1} parent=0 // pred_check
    _
  $region11: #{tpu_custom_call.1} parent=0 // pred_check_branch
    %19 = sbr.rel (0) target = $region13
  $region12: #{tpu_custom_call.1} parent=0 // pred_region
    _
  $region13: #{tpu_custom_call.1} parent=0 // pred_fallthru
    _
  // Predicated region
  $region14: #{tpu_custom_call.1} parent=0 // pred_check
    _
  $region15: #{tpu_custom_call.1} parent=0 // pred_check_branch
    %21 = sbr.rel (0) target = $region17
  $region16: #{tpu_custom_call.1} parent=0 // pred_region
    _
  $region17: #{tpu_custom_call.1} parent=0 // pred_fallthru
    _
  // Predicated region
  $region18: #{tpu_custom_call.1} parent=0 // pred_check
    _
  $region19: #{tpu_custom_call.1} parent=0 // pred_check_branch
    %23 = sbr.rel (0) target = $region21
  $region20: #{tpu_custom_call.1} parent=0 // pred_region
    _
  $region21: #{tpu_custom_call.1} parent=0 // pred_fallthru
    _
  // Predicated region
  $region22: #{tpu_custom_call.1} parent=0 // pred_check
    _
  $region23: #{tpu_custom_call.1} parent=0 // pred_check_branch
    %25 = sbr.rel (0) target = $region25
  $region24: #{tpu_custom_call.1} parent=0 // pred_region
    _
  $region25: #{tpu_custom_call.1} parent=0 // pred_fallthru
    _
  // Predicated region
  $region26: #{tpu_custom_call.1} parent=0 // pred_check
    _
  $region27: #{tpu_custom_call.1} parent=0 // pred_check_branch
    %27 = sbr.rel (0) target = $region29
  $region28: #{tpu_custom_call.1} parent=0 // pred_region
    _
  $region29: #{tpu_custom_call.1} parent=0 // pred_fallthru
    _
  %vm28 = vcmask 258048
  %29 = vst.msk [vmem:[#allocation2] sm:$0x1f] %vm28, 0.0
  %30 = vst.msk [vmem:[#allocation3] sm:$0x1f] %vm28, 0.0
  %v31 = vld [vmem:[%s2] sm:$0x1f]
  %v32 = vld [vmem:[%s3] sm:$0xff]
  %v33 = vld [vmem:[%s3 + $0x8] sm:$0xff]
  %v34 = vld [vmem:[%s3 + $0x10] sm:$0xff]
  %v35 = vld [vmem:[%s3 + $0x18] sm:$0xff]
  %v36 = vld [vmem:[%s4] sm:$0xff]
  %v37 = vld [vmem:[%s4 + $0x8] sm:$0xff]
  %v38 = vld [vmem:[%s4 + $0x10] sm:$0xff]
  %v39 = vld [vmem:[%s4 + $0x18] sm:$0xff]
  %v40 = vld [vmem:[%s5] sm:$0x1]
  %v41 = vld [vmem:[%s6] sm:$0x1]
  %v42 = vld [vmem:[#allocation2] sm:$0x1f]
  %v43 = vld [vmem:[%s0] sm:$0x1f]
  %v45 = vlaneseq
  %v46 = vshrl.u32 %v45, 7
  %v47 = vsub.s32 0, %v46
  %v48 = vrot.slane %v40, %v47
  %vm50 = vcmask 261120
  %v52 = vsel %vm50, %v42, 0
  %54 = vmatprep.subr.mxu0 0.0
  %55 = vmatpush1.msra.mxu0 0.0
  %56 = vmatprep.subr.mxu0 0.0
  %57 = vmatpush1.msra.mxu0 0.0
  %58 = vmatprep.subr.mxu0 0.0
  %59 = vmatpush1.msra.mxu0 0.0
  %60 = vmatprep.subr.mxu0 0.0
  %61 = vmatpush1.msra.mxu0 0.0
  %62 = vmatprep.subr.mxu0 0.0
  %63 = vmatpush1.msra.mxu0 0.0
  %64 = vmatprep.subr.mxu0 0.0
  %65 = vmatpush1.msra.mxu0 0.0
  %66 = vmatprep.subr.mxu0 0.0
  %67 = vmatpush1.msra.mxu0 0.0
  %68 = vmatprep.subr.mxu0 0.0
  %69 = vmatpush1.msra.mxu0 0.0
  %70 = vmatprep.subr.mxu0 0.0
  %71 = vmatpush1.msra.mxu0 0.0
  %72 = vmatprep.subr.mxu0 0.0
  %73 = vmatpush1.msra.mxu0 0.0
  %74 = vmatprep.subr.mxu0 0.0
  %75 = vmatpush1.msra.mxu0 0.0
  %76 = vmatprep.subr.mxu0 0.0
  %77 = vmatpush1.msra.mxu0 0.0
  %78 = vmatprep.subr.mxu0 0.0
  %79 = vmatpush1.msra.mxu0 %v35
  %80 = vmatprep.subr.mxu0 0.0
  %81 = vmatpush1.msra.mxu0 %v34
  %82 = vmatprep.subr.mxu0 0.0
  %83 = vmatpush1.msra.mxu0 %v33
  %84 = vmatprep.subr.mxu0 0.0
  %85 = vmatpush1.msra.mxu0 %v32
  %86 = vmatprep.subr.mxu0 0.0
  %87 = vmatpush2.msra.mxu0 0.0
  %88 = vmatprep.subr.mxu0 0.0
  %89 = vmatpush2.msra.mxu0 0.0
  %90 = vmatprep.subr.mxu0 0.0
  %91 = vmatpush2.msra.mxu0 0.0
  %92 = vmatprep.subr.mxu0 0.0
  %93 = vmatpush2.msra.mxu0 0.0
  %94 = vmatprep.subr.mxu0 0.0
  %95 = vmatpush2.msra.mxu0 0.0
  %96 = vmatprep.subr.mxu0 0.0
  %97 = vmatpush2.msra.mxu0 0.0
  %98 = vmatprep.subr.mxu0 0.0
  %99 = vmatpush2.msra.mxu0 0.0
  %100 = vmatprep.subr.mxu0 0.0
  %101 = vmatpush2.msra.mxu0 0.0
  %102 = vmatprep.subr.mxu0 0.0
  %103 = vmatpush2.msra.mxu0 0.0
  %104 = vmatprep.subr.mxu0 0.0
  %105 = vmatpush2.msra.mxu0 0.0
  %106 = vmatprep.subr.mxu0 0.0
  %107 = vmatpush2.msra.mxu0 0.0
  %108 = vmatprep.subr.mxu0 0.0
  %109 = vmatpush2.msra.mxu0 0.0
  %110 = vmatprep.subr.mxu0 0.0
  %111 = vmatpush2.msra.mxu0 0.0
  %112 = vmatprep.subr.mxu0 0.0
  %113 = vmatpush2.msra.mxu0 0.0
  %114 = vmatprep.subr.mxu0 0.0
  %115 = vmatpush2.msra.mxu0 0.0
  %116 = vmatprep.subr.mxu0 0.0
  %117 = vmatpush2.msra.mxu0 0.0
  %118 = vmatprep.mubr.f32.mxu0 0.0
  %119 = vmatmul.mubr.f32.gmra.mxu0 %v52
  %v120 = vpop.f32.mrf.mxu0
  %v121 = vadd.f32 %v48, %v120
  %v122 = vpop.f32.mrf.mxu0
  %123 = vdwg.mxu0
  %v124 = vadd.f32 %v43, %v121
  %v125 = vxor.u32 %v124, 2147483648
  %v126 = vmul.f32 %v125, 1.442695
  %v127 = vpow.pop %v126
  %v128 = vadd.f32 %v127, 1.0
  %v129 = vrcp.pop %v128
  %v130 = vmul.f32 1.0, %v129
  %132 = vrot.lane.b32.xlu0 %v121, 64
  %v133 = vpop.permute.xlu0 %132
  %v135 = vmul.f32 %v130, %v133
  %137 = vrot.lane.b32.xlu0 %v135, 64
  %v138 = vpop.permute.xlu0 %137
  %v140 = vadd.f32 %v43, %v138
  %v141 = vtanh.pop %v140
  %v142 = vsub.f32 1.0, %v130
  %144 = vrot.lane.b32.xlu0 %v141, 96
  %v145 = vpop.permute.xlu0 %144
  %v147 = vmul.f32 %v142, %v145
  %148 = vrot.lane.b32.xlu0 %v42, 32
  %v149 = vpop.permute.xlu0 %148
  %v151 = vmul.f32 %v130, %v149
  %v152 = vadd.f32 %v147, %v151
  %vm153 = vcmp.gt.s32.totalorder %v31, 0
  %v154 = vsel %vm153, 1, 0
  %v155 = vcvt.s32.f32 %v154
  %157 = vset.pattern.permute.xlu0 0
  %158 = vperm.xlu0 %157, %v155
  %v159 = vpop.permute.xlu0 %158
  %v161 = vmul.f32 %v159, %v152
  %v162 = vsub.f32 1.0, %v155
  %164 = vset.pattern.permute.xlu0 0
  %165 = vperm.xlu0 %164, %v162
  %v166 = vpop.permute.xlu0 %165
  %v168 = vmul.f32 %v166, %v42
  %170 = vrot.lane.b32.xlu0 %v168, 32
  %v171 = vpop.permute.xlu0 %170
  %v173 = vadd.f32 %v161, %v171
  %175 = vrot.lane.b32.xlu0 %v173, 96
  %v176 = vpop.permute.xlu0 %175
  %178 = vst.msk [vmem:[#allocation2] sm:$0x1f] %vm28, %v176
  %180 = vrot.lane.b32.xlu0 %v161, 96
  %v181 = vpop.permute.xlu0 %180
  %183 = vst.msk [vmem:[%s7] sm:$0x1f] %vm28, %v181
  %v184 = vld [vmem:[#allocation3] sm:$0x1f]
  %s185 = scalar_lea.vmem %s1, 56
  %v186 = vld [vmem:[%s185] sm:$0x1f]
  %v188 = vlaneseq
  %v189 = vshrl.u32 %v188, 7
  %v190 = vsub.s32 0, %v189
  %v191 = vrot.slane %v41, %v190
  %v194 = vsel %vm50, %v184, 0
  %196 = vmatprep.subr.mxu0 0.0
  %197 = vmatpush1.msra.mxu0 0.0
  %198 = vmatprep.subr.mxu0 0.0
  %199 = vmatpush1.msra.mxu0 0.0
  %200 = vmatprep.subr.mxu0 0.0
  %201 = vmatpush1.msra.mxu0 0.0
  %202 = vmatprep.subr.mxu0 0.0
  %203 = vmatpush1.msra.mxu0 0.0
  %204 = vmatprep.subr.mxu0 0.0
  %205 = vmatpush1.msra.mxu0 0.0
  %206 = vmatprep.subr.mxu0 0.0
  %207 = vmatpush1.msra.mxu0 0.0
  %208 = vmatprep.subr.mxu0 0.0
  %209 = vmatpush1.msra.mxu0 0.0
  %210 = vmatprep.subr.mxu0 0.0
  %211 = vmatpush1.msra.mxu0 0.0
  %212 = vmatprep.subr.mxu0 0.0
  %213 = vmatpush1.msra.mxu0 0.0
  %214 = vmatprep.subr.mxu0 0.0
  %215 = vmatpush1.msra.mxu0 0.0
  %216 = vmatprep.subr.mxu0 0.0
  %217 = vmatpush1.msra.mxu0 0.0
  %218 = vmatprep.subr.mxu0 0.0
  %219 = vmatpush1.msra.mxu0 0.0
  %220 = vmatprep.subr.mxu0 0.0
  %221 = vmatpush1.msra.mxu0 %v39
  %222 = vmatprep.subr.mxu0 0.0
  %223 = vmatpush1.msra.mxu0 %v38
  %224 = vmatprep.subr.mxu0 0.0
  %225 = vmatpush1.msra.mxu0 %v37
  %226 = vmatprep.subr.mxu0 0.0
  %227 = vmatpush1.msra.mxu0 %v36
  %228 = vmatprep.subr.mxu0 0.0
  %229 = vmatpush2.msra.mxu0 0.0
  %230 = vmatprep.subr.mxu0 0.0
  %231 = vmatpush2.msra.mxu0 0.0
  %232 = vmatprep.subr.mxu0 0.0
  %233 = vmatpush2.msra.mxu0 0.0
  %234 = vmatprep.subr.mxu0 0.0
  %235 = vmatpush2.msra.mxu0 0.0
  %236 = vmatprep.subr.mxu0 0.0
  %237 = vmatpush2.msra.mxu0 0.0
  %238 = vmatprep.subr.mxu0 0.0
  %239 = vmatpush2.msra.mxu0 0.0
  %240 = vmatprep.subr.mxu0 0.0
  %241 = vmatpush2.msra.mxu0 0.0
  %242 = vmatprep.subr.mxu0 0.0
  %243 = vmatpush2.msra.mxu0 0.0
  %244 = vmatprep.subr.mxu0 0.0
  %245 = vmatpush2.msra.mxu0 0.0
  %246 = vmatprep.subr.mxu0 0.0
  %247 = vmatpush2.msra.mxu0 0.0
  %248 = vmatprep.subr.mxu0 0.0
  %249 = vmatpush2.msra.mxu0 0.0
  %250 = vmatprep.subr.mxu0 0.0
  %251 = vmatpush2.msra.mxu0 0.0
  %252 = vmatprep.subr.mxu0 0.0
  %253 = vmatpush2.msra.mxu0 0.0
  %254 = vmatprep.subr.mxu0 0.0
  %255 = vmatpush2.msra.mxu0 0.0
  %256 = vmatprep.subr.mxu0 0.0
  %257 = vmatpush2.msra.mxu0 0.0
  %258 = vmatprep.subr.mxu0 0.0
  %259 = vmatpush2.msra.mxu0 0.0
  %260 = vmatprep.mubr.f32.mxu0 0.0
  %261 = vmatmul.mubr.f32.gmra.mxu0 %v194
  %v262 = vpop.f32.mrf.mxu0
  %v263 = vadd.f32 %v191, %v262
  %v264 = vpop.f32.mrf.mxu0
  %265 = vdwg.mxu0
  %v266 = vadd.f32 %v186, %v263
  %v267 = vxor.u32 %v266, 2147483648
  %v268 = vmul.f32 %v267, 1.442695
  %v269 = vpow.pop %v268
  %v270 = vadd.f32 %v269, 1.0
  %v271 = vrcp.pop %v270
  %v272 = vmul.f32 1.0, %v271
  %274 = vrot.lane.b32.xlu0 %v263, 64
  %v275 = vpop.permute.xlu0 %274
  %v277 = vmul.f32 %v272, %v275
  %279 = vrot.lane.b32.xlu0 %v277, 64
  %v280 = vpop.permute.xlu0 %279
  %v282 = vadd.f32 %v186, %v280
  %v283 = vtanh.pop %v282
  %v284 = vsub.f32 1.0, %v272
  %286 = vrot.lane.b32.xlu0 %v283, 96
  %v287 = vpop.permute.xlu0 %286
  %v289 = vmul.f32 %v284, %v287
  %290 = vrot.lane.b32.xlu0 %v184, 32
  %v291 = vpop.permute.xlu0 %290
  %v293 = vmul.f32 %v272, %v291
  %v294 = vadd.f32 %v289, %v293
  %vm295 = vcmp.gt.s32.totalorder %v31, 7
  %v296 = vsel %vm295, 1, 0
  %v297 = vcvt.s32.f32 %v296
  %299 = vset.pattern.permute.xlu0 0
  %300 = vperm.xlu0 %299, %v297
  %v301 = vpop.permute.xlu0 %300
  %v303 = vmul.f32 %v301, %v294
  %v304 = vsub.f32 1.0, %v297
  %306 = vset.pattern.permute.xlu0 0
  %307 = vperm.xlu0 %306, %v304
  %v308 = vpop.permute.xlu0 %307
  %v310 = vmul.f32 %v308, %v184
  %312 = vrot.lane.b32.xlu0 %v310, 32
  %v313 = vpop.permute.xlu0 %312
  %v315 = vadd.f32 %v303, %v313
  %317 = vrot.lane.b32.xlu0 %v315, 96
  %v318 = vpop.permute.xlu0 %317
  %320 = vst.msk [vmem:[#allocation3] sm:$0x1f] %vm28, %v318
  %322 = vrot.lane.b32.xlu0 %v303, 96
  %v323 = vpop.permute.xlu0 %322
  %s325 = scalar_lea.vmem %s8, 56
  %326 = vst.msk [vmem:[%s325] sm:$0x1f] %vm28, %v323
  %v327 = vld [vmem:[#allocation2] sm:$0x1f]
  %s328 = scalar_lea.vmem %s0, 8
  %v329 = vld [vmem:[%s328] sm:$0x1f]
  %v331 = vsel %vm50, %v327, 0
  %333 = vmatprep.subr.mxu0 0.0
  %334 = vmatpush1.msra.mxu0 0.0
  %335 = vmatprep.subr.mxu0 0.0
  %336 = vmatpush1.msra.mxu0 0.0
  %337 = vmatprep.subr.mxu0 0.0
  %338 = vmatpush1.msra.mxu0 0.0
  %339 = vmatprep.subr.mxu0 0.0
  %340 = vmatpush1.msra.mxu0 0.0
  %341 = vmatprep.subr.mxu0 0.0
  %342 = vmatpush1.msra.mxu0 0.0
  %343 = vmatprep.subr.mxu0 0.0
  %344 = vmatpush1.msra.mxu0 0.0
  %345 = vmatprep.subr.mxu0 0.0
  %346 = vmatpush1.msra.mxu0 0.0
  %347 = vmatprep.subr.mxu0 0.0
  %348 = vmatpush1.msra.mxu0 0.0
  %349 = vmatprep.subr.mxu0 0.0
  %350 = vmatpush1.msra.mxu0 0.0
  %351 = vmatprep.subr.mxu0 0.0
  %352 = vmatpush1.msra.mxu0 0.0
  %353 = vmatprep.subr.mxu0 0.0
  %354 = vmatpush1.msra.mxu0 0.0
  %355 = vmatprep.subr.mxu0 0.0
  %356 = vmatpush1.msra.mxu0 0.0
  %357 = vmatprep.subr.mxu0 0.0
  %358 = vmatpush1.msra.mxu0 %v35
  %359 = vmatprep.subr.mxu0 0.0
  %360 = vmatpush1.msra.mxu0 %v34
  %361 = vmatprep.subr.mxu0 0.0
  %362 = vmatpush1.msra.mxu0 %v33
  %363 = vmatprep.subr.mxu0 0.0
  %364 = vmatpush1.msra.mxu0 %v32
  %365 = vmatprep.subr.mxu0 0.0
  %366 = vmatpush2.msra.mxu0 0.0
  %367 = vmatprep.subr.mxu0 0.0
  %368 = vmatpush2.msra.mxu0 0.0
  %369 = vmatprep.subr.mxu0 0.0
  %370 = vmatpush2.msra.mxu0 0.0
  %371 = vmatprep.subr.mxu0 0.0
  %372 = vmatpush2.msra.mxu0 0.0
  %373 = vmatprep.subr.mxu0 0.0
  %374 = vmatpush2.msra.mxu0 0.0
  %375 = vmatprep.subr.mxu0 0.0
  %376 = vmatpush2.msra.mxu0 0.0
  %377 = vmatprep.subr.mxu0 0.0
  %378 = vmatpush2.msra.mxu0 0.0
  %379 = vmatprep.subr.mxu0 0.0
  %380 = vmatpush2.msra.mxu0 0.0
  %381 = vmatprep.subr.mxu0 0.0
  %382 = vmatpush2.msra.mxu0 0.0
  %383 = vmatprep.subr.mxu0 0.0
  %384 = vmatpush2.msra.mxu0 0.0
  %385 = vmatprep.subr.mxu0 0.0
  %386 = vmatpush2.msra.mxu0 0.0
  %387 = vmatprep.subr.mxu0 0.0
  %388 = vmatpush2.msra.mxu0 0.0
  %389 = vmatprep.subr.mxu0 0.0
  %390 = vmatpush2.msra.mxu0 0.0
  %391 = vmatprep.subr.mxu0 0.0
  %392 = vmatpush2.msra.mxu0 0.0
  %393 = vmatprep.subr.mxu0 0.0
  %394 = vmatpush2.msra.mxu0 0.0
  %395 = vmatprep.subr.mxu0 0.0
  %396 = vmatpush2.msra.mxu0 0.0
  %397 = vmatprep.mubr.f32.mxu0 0.0
  %398 = vmatmul.mubr.f32.gmra.mxu0 %v331
  %v399 = vpop.f32.mrf.mxu0
  %v400 = vadd.f32 %v48, %v399
  %v401 = vpop.f32.mrf.mxu0
  %402 = vdwg.mxu0
  %v403 = vadd.f32 %v329, %v400
  %v404 = vxor.u32 %v403, 2147483648
  %v405 = vmul.f32 %v404, 1.442695
  %v406 = vpow.pop %v405
  %v407 = vadd.f32 %v406, 1.0
  %v408 = vrcp.pop %v407
  %v409 = vmul.f32 1.0, %v408
  %411 = vrot.lane.b32.xlu0 %v400, 64
  %v412 = vpop.permute.xlu0 %411
  %v414 = vmul.f32 %v409, %v412
  %416 = vrot.lane.b32.xlu0 %v414, 64
  %v417 = vpop.permute.xlu0 %416
  %v419 = vadd.f32 %v329, %v417
  %v420 = vtanh.pop %v419
  %v421 = vsub.f32 1.0, %v409
  %423 = vrot.lane.b32.xlu0 %v420, 96
  %v424 = vpop.permute.xlu0 %423
  %v426 = vmul.f32 %v421, %v424
  %427 = vrot.lane.b32.xlu0 %v327, 32
  %v428 = vpop.permute.xlu0 %427
  %v430 = vmul.f32 %v409, %v428
  %v431 = vadd.f32 %v426, %v430
  %vm432 = vcmp.gt.s32.totalorder %v31, 1
  %v433 = vsel %vm432, 1, 0
  %v434 = vcvt.s32.f32 %v433
  %436 = vset.pattern.permute.xlu0 0
  %437 = vperm.xlu0 %436, %v434
  %v438 = vpop.permute.xlu0 %437
  %v440 = vmul.f32 %v438, %v431
  %v441 = vsub.f32 1.0, %v434
  %443 = vset.pattern.permute.xlu0 0
  %444 = vperm.xlu0 %443, %v441
  %v445 = vpop.permute.xlu0 %444
  %v447 = vmul.f32 %v445, %v327
  %449 = vrot.lane.b32.xlu0 %v447, 32
  %v450 = vpop.permute.xlu0 %449
  %v452 = vadd.f32 %v440, %v450
  %454 = vrot.lane.b32.xlu0 %v452, 96
  %v455 = vpop.permute.xlu0 %454
  %457 = vst.msk [vmem:[#allocation2] sm:$0x1f] %vm28, %v455
  %459 = vrot.lane.b32.xlu0 %v440, 96
  %v460 = vpop.permute.xlu0 %459
  %s462 = scalar_lea.vmem %s7, 8
  %463 = vst.msk [vmem:[%s462] sm:$0x1f] %vm28, %v460
  %v464 = vld [vmem:[#allocation3] sm:$0x1f]
  %s465 = scalar_lea.vmem %s1, 48
  %v466 = vld [vmem:[%s465] sm:$0x1f]
  %v468 = vsel %vm50, %v464, 0
  %470 = vmatprep.subr.mxu0 0.0
  %471 = vmatpush1.msra.mxu0 0.0
  %472 = vmatprep.subr.mxu0 0.0
  %473 = vmatpush1.msra.mxu0 0.0
  %474 = vmatprep.subr.mxu0 0.0
  %475 = vmatpush1.msra.mxu0 0.0
  %476 = vmatprep.subr.mxu0 0.0
  %477 = vmatpush1.msra.mxu0 0.0
  %478 = vmatprep.subr.mxu0 0.0
  %479 = vmatpush1.msra.mxu0 0.0
  %480 = vmatprep.subr.mxu0 0.0
  %481 = vmatpush1.msra.mxu0 0.0
  %482 = vmatprep.subr.mxu0 0.0
  %483 = vmatpush1.msra.mxu0 0.0
  %484 = vmatprep.subr.mxu0 0.0
  %485 = vmatpush1.msra.mxu0 0.0
  %486 = vmatprep.subr.mxu0 0.0
  %487 = vmatpush1.msra.mxu0 0.0
  %488 = vmatprep.subr.mxu0 0.0
  %489 = vmatpush1.msra.mxu0 0.0
  %490 = vmatprep.subr.mxu0 0.0
  %491 = vmatpush1.msra.mxu0 0.0
  %492 = vmatprep.subr.mxu0 0.0
  %493 = vmatpush1.msra.mxu0 0.0
  %494 = vmatprep.subr.mxu0 0.0
  %495 = vmatpush1.msra.mxu0 %v39
  %496 = vmatprep.subr.mxu0 0.0
  %497 = vmatpush1.msra.mxu0 %v38
  %498 = vmatprep.subr.mxu0 0.0
  %499 = vmatpush1.msra.mxu0 %v37
  %500 = vmatprep.subr.mxu0 0.0
  %501 = vmatpush1.msra.mxu0 %v36
  %502 = vmatprep.subr.mxu0 0.0
  %503 = vmatpush2.msra.mxu0 0.0
  %504 = vmatprep.subr.mxu0 0.0
  %505 = vmatpush2.msra.mxu0 0.0
  %506 = vmatprep.subr.mxu0 0.0
  %507 = vmatpush2.msra.mxu0 0.0
  %508 = vmatprep.subr.mxu0 0.0
  %509 = vmatpush2.msra.mxu0 0.0
  %510 = vmatprep.subr.mxu0 0.0
  %511 = vmatpush2.msra.mxu0 0.0
  %512 = vmatprep.subr.mxu0 0.0
  %513 = vmatpush2.msra.mxu0 0.0
  %514 = vmatprep.subr.mxu0 0.0
  %515 = vmatpush2.msra.mxu0 0.0
  %516 = vmatprep.subr.mxu0 0.0
  %517 = vmatpush2.msra.mxu0 0.0
  %518 = vmatprep.subr.mxu0 0.0
  %519 = vmatpush2.msra.mxu0 0.0
  %520 = vmatprep.subr.mxu0 0.0
  %521 = vmatpush2.msra.mxu0 0.0
  %522 = vmatprep.subr.mxu0 0.0
  %523 = vmatpush2.msra.mxu0 0.0
  %524 = vmatprep.subr.mxu0 0.0
  %525 = vmatpush2.msra.mxu0 0.0
  %526 = vmatprep.subr.mxu0 0.0
  %527 = vmatpush2.msra.mxu0 0.0
  %528 = vmatprep.subr.mxu0 0.0
  %529 = vmatpush2.msra.mxu0 0.0
  %530 = vmatprep.subr.mxu0 0.0
  %531 = vmatpush2.msra.mxu0 0.0
  %532 = vmatprep.subr.mxu0 0.0
  %533 = vmatpush2.msra.mxu0 0.0
  %534 = vmatprep.mubr.f32.mxu0 0.0
  %535 = vmatmul.mubr.f32.gmra.mxu0 %v468
  %v536 = vpop.f32.mrf.mxu0
  %v537 = vadd.f32 %v191, %v536
  %v538 = vpop.f32.mrf.mxu0
  %539 = vdwg.mxu0
  %v540 = vadd.f32 %v466, %v537
  %v541 = vxor.u32 %v540, 2147483648
  %v542 = vmul.f32 %v541, 1.442695
  %v543 = vpow.pop %v542
  %v544 = vadd.f32 %v543, 1.0
  %v545 = vrcp.pop %v544
  %v546 = vmul.f32 1.0, %v545
  %548 = vrot.lane.b32.xlu0 %v537, 64
  %v549 = vpop.permute.xlu0 %548
  %v551 = vmul.f32 %v546, %v549
  %553 = vrot.lane.b32.xlu0 %v551, 64
  %v554 = vpop.permute.xlu0 %553
  %v556 = vadd.f32 %v466, %v554
  %v557 = vtanh.pop %v556
  %v558 = vsub.f32 1.0, %v546
  %560 = vrot.lane.b32.xlu0 %v557, 96
  %v561 = vpop.permute.xlu0 %560
  %v563 = vmul.f32 %v558, %v561
  %564 = vrot.lane.b32.xlu0 %v464, 32
  %v565 = vpop.permute.xlu0 %564
  %v567 = vmul.f32 %v546, %v565
  %v568 = vadd.f32 %v563, %v567
  %vm569 = vcmp.gt.s32.totalorder %v31, 6
  %v570 = vsel %vm569, 1, 0
  %v571 = vcvt.s32.f32 %v570
  %573 = vset.pattern.permute.xlu0 0
  %574 = vperm.xlu0 %573, %v571
  %v575 = vpop.permute.xlu0 %574
  %v577 = vmul.f32 %v575, %v568
  %v578 = vsub.f32 1.0, %v571
  %580 = vset.pattern.permute.xlu0 0
  %581 = vperm.xlu0 %580, %v578
  %v582 = vpop.permute.xlu0 %581
  %v584 = vmul.f32 %v582, %v464
  %586 = vrot.lane.b32.xlu0 %v584, 32
  %v587 = vpop.permute.xlu0 %586
  %v589 = vadd.f32 %v577, %v587
  %591 = vrot.lane.b32.xlu0 %v589, 96
  %v592 = vpop.permute.xlu0 %591
  %594 = vst.msk [vmem:[#allocation3] sm:$0x1f] %vm28, %v592
  %596 = vrot.lane.b32.xlu0 %v577, 96
  %v597 = vpop.permute.xlu0 %596
  %s599 = scalar_lea.vmem %s8, 48
  %600 = vst.msk [vmem:[%s599] sm:$0x1f] %vm28, %v597
  %v601 = vld [vmem:[#allocation2] sm:$0x1f]
  %s602 = scalar_lea.vmem %s0, 16
  %v603 = vld [vmem:[%s602] sm:$0x1f]
  %v605 = vsel %vm50, %v601, 0
  %607 = vmatprep.subr.mxu0 0.0
  %608 = vmatpush1.msra.mxu0 0.0
  %609 = vmatprep.subr.mxu0 0.0
  %610 = vmatpush1.msra.mxu0 0.0
  %611 = vmatprep.subr.mxu0 0.0
  %612 = vmatpush1.msra.mxu0 0.0
  %613 = vmatprep.subr.mxu0 0.0
  %614 = vmatpush1.msra.mxu0 0.0
  %615 = vmatprep.subr.mxu0 0.0
  %616 = vmatpush1.msra.mxu0 0.0
  %617 = vmatprep.subr.mxu0 0.0
  %618 = vmatpush1.msra.mxu0 0.0
  %619 = vmatprep.subr.mxu0 0.0
  %620 = vmatpush1.msra.mxu0 0.0
  %621 = vmatprep.subr.mxu0 0.0
  %622 = vmatpush1.msra.mxu0 0.0
  %623 = vmatprep.subr.mxu0 0.0
  %624 = vmatpush1.msra.mxu0 0.0
  %625 = vmatprep.subr.mxu0 0.0
  %626 = vmatpush1.msra.mxu0 0.0
  %627 = vmatprep.subr.mxu0 0.0
  %628 = vmatpush1.msra.mxu0 0.0
  %629 = vmatprep.subr.mxu0 0.0
  %630 = vmatpush1.msra.mxu0 0.0
  %631 = vmatprep.subr.mxu0 0.0
  %632 = vmatpush1.msra.mxu0 %v35
  %633 = vmatprep.subr.mxu0 0.0
  %634 = vmatpush1.msra.mxu0 %v34
  %635 = vmatprep.subr.mxu0 0.0
  %636 = vmatpush1.msra.mxu0 %v33
  %637 = vmatprep.subr.mxu0 0.0
  %638 = vmatpush1.msra.mxu0 %v32
  %639 = vmatprep.subr.mxu0 0.0
  %640 = vmatpush2.msra.mxu0 0.0
  %641 = vmatprep.subr.mxu0 0.0
  %642 = vmatpush2.msra.mxu0 0.0
  %643 = vmatprep.subr.mxu0 0.0
  %644 = vmatpush2.msra.mxu0 0.0
  %645 = vmatprep.subr.mxu0 0.0
  %646 = vmatpush2.msra.mxu0 0.0
  %647 = vmatprep.subr.mxu0 0.0
  %648 = vmatpush2.msra.mxu0 0.0
  %649 = vmatprep.subr.mxu0 0.0
  %650 = vmatpush2.msra.mxu0 0.0
  %651 = vmatprep.subr.mxu0 0.0
  %652 = vmatpush2.msra.mxu0 0.0
  %653 = vmatprep.subr.mxu0 0.0
  %654 = vmatpush2.msra.mxu0 0.0
  %655 = vmatprep.subr.mxu0 0.0
  %656 = vmatpush2.msra.mxu0 0.0
  %657 = vmatprep.subr.mxu0 0.0
  %658 = vmatpush2.msra.mxu0 0.0
  %659 = vmatprep.subr.mxu0 0.0
  %660 = vmatpush2.msra.mxu0 0.0
  %661 = vmatprep.subr.mxu0 0.0
  %662 = vmatpush2.msra.mxu0 0.0
  %663 = vmatprep.subr.mxu0 0.0
  %664 = vmatpush2.msra.mxu0 0.0
  %665 = vmatprep.subr.mxu0 0.0
  %666 = vmatpush2.msra.mxu0 0.0
  %667 = vmatprep.subr.mxu0 0.0
  %668 = vmatpush2.msra.mxu0 0.0
  %669 = vmatprep.subr.mxu0 0.0
  %670 = vmatpush2.msra.mxu0 0.0
  %671 = vmatprep.mubr.f32.mxu0 0.0
  %672 = vmatmul.mubr.f32.gmra.mxu0 %v605
  %v673 = vpop.f32.mrf.mxu0
  %v674 = vadd.f32 %v48, %v673
  %v675 = vpop.f32.mrf.mxu0
  %676 = vdwg.mxu0
  %v677 = vadd.f32 %v603, %v674
  %v678 = vxor.u32 %v677, 2147483648
  %v679 = vmul.f32 %v678, 1.442695
  %v680 = vpow.pop %v679
  %v681 = vadd.f32 %v680, 1.0
  %v682 = vrcp.pop %v681
  %v683 = vmul.f32 1.0, %v682
  %685 = vrot.lane.b32.xlu0 %v674, 64
  %v686 = vpop.permute.xlu0 %685
  %v688 = vmul.f32 %v683, %v686
  %690 = vrot.lane.b32.xlu0 %v688, 64
  %v691 = vpop.permute.xlu0 %690
  %v693 = vadd.f32 %v603, %v691
  %v694 = vtanh.pop %v693
  %v695 = vsub.f32 1.0, %v683
  %697 = vrot.lane.b32.xlu0 %v694, 96
  %v698 = vpop.permute.xlu0 %697
  %v700 = vmul.f32 %v695, %v698
  %701 = vrot.lane.b32.xlu0 %v601, 32
  %v702 = vpop.permute.xlu0 %701
  %v704 = vmul.f32 %v683, %v702
  %v705 = vadd.f32 %v700, %v704
  %vm706 = vcmp.gt.s32.totalorder %v31, 2
  %v707 = vsel %vm706, 1, 0
  %v708 = vcvt.s32.f32 %v707
  %710 = vset.pattern.permute.xlu0 0
  %711 = vperm.xlu0 %710, %v708
  %v712 = vpop.permute.xlu0 %711
  %v714 = vmul.f32 %v712, %v705
  %v715 = vsub.f32 1.0, %v708
  %717 = vset.pattern.permute.xlu0 0
  %718 = vperm.xlu0 %717, %v715
  %v719 = vpop.permute.xlu0 %718
  %v721 = vmul.f32 %v719, %v601
  %723 = vrot.lane.b32.xlu0 %v721, 32
  %v724 = vpop.permute.xlu0 %723
  %v726 = vadd.f32 %v714, %v724
  %728 = vrot.lane.b32.xlu0 %v726, 96
  %v729 = vpop.permute.xlu0 %728
  %731 = vst.msk [vmem:[#allocation2] sm:$0x1f] %vm28, %v729
  %733 = vrot.lane.b32.xlu0 %v714, 96
  %v734 = vpop.permute.xlu0 %733
  %s736 = scalar_lea.vmem %s7, 16
  %737 = vst.msk [vmem:[%s736] sm:$0x1f] %vm28, %v734
  %v738 = vld [vmem:[#allocation3] sm:$0x1f]
  %s739 = scalar_lea.vmem %s1, 40
  %v740 = vld [vmem:[%s739] sm:$0x1f]
  %v742 = vsel %vm50, %v738, 0
  %744 = vmatprep.subr.mxu0 0.0
  %745 = vmatpush1.msra.mxu0 0.0
  %746 = vmatprep.subr.mxu0 0.0
  %747 = vmatpush1.msra.mxu0 0.0
  %748 = vmatprep.subr.mxu0 0.0
  %749 = vmatpush1.msra.mxu0 0.0
  %750 = vmatprep.subr.mxu0 0.0
  %751 = vmatpush1.msra.mxu0 0.0
  %752 = vmatprep.subr.mxu0 0.0
  %753 = vmatpush1.msra.mxu0 0.0
  %754 = vmatprep.subr.mxu0 0.0
  %755 = vmatpush1.msra.mxu0 0.0
  %756 = vmatprep.subr.mxu0 0.0
  %757 = vmatpush1.msra.mxu0 0.0
  %758 = vmatprep.subr.mxu0 0.0
  %759 = vmatpush1.msra.mxu0 0.0
  %760 = vmatprep.subr.mxu0 0.0
  %761 = vmatpush1.msra.mxu0 0.0
  %762 = vmatprep.subr.mxu0 0.0
  %763 = vmatpush1.msra.mxu0 0.0
  %764 = vmatprep.subr.mxu0 0.0
  %765 = vmatpush1.msra.mxu0 0.0
  %766 = vmatprep.subr.mxu0 0.0
  %767 = vmatpush1.msra.mxu0 0.0
  %768 = vmatprep.subr.mxu0 0.0
  %769 = vmatpush1.msra.mxu0 %v39
  %770 = vmatprep.subr.mxu0 0.0
  %771 = vmatpush1.msra.mxu0 %v38
  %772 = vmatprep.subr.mxu0 0.0
  %773 = vmatpush1.msra.mxu0 %v37
  %774 = vmatprep.subr.mxu0 0.0
  %775 = vmatpush1.msra.mxu0 %v36
  %776 = vmatprep.subr.mxu0 0.0
  %777 = vmatpush2.msra.mxu0 0.0
  %778 = vmatprep.subr.mxu0 0.0
  %779 = vmatpush2.msra.mxu0 0.0
  %780 = vmatprep.subr.mxu0 0.0
  %781 = vmatpush2.msra.mxu0 0.0
  %782 = vmatprep.subr.mxu0 0.0
  %783 = vmatpush2.msra.mxu0 0.0
  %784 = vmatprep.subr.mxu0 0.0
  %785 = vmatpush2.msra.mxu0 0.0
  %786 = vmatprep.subr.mxu0 0.0
  %787 = vmatpush2.msra.mxu0 0.0
  %788 = vmatprep.subr.mxu0 0.0
  %789 = vmatpush2.msra.mxu0 0.0
  %790 = vmatprep.subr.mxu0 0.0
  %791 = vmatpush2.msra.mxu0 0.0
  %792 = vmatprep.subr.mxu0 0.0
  %793 = vmatpush2.msra.mxu0 0.0
  %794 = vmatprep.subr.mxu0 0.0
  %795 = vmatpush2.msra.mxu0 0.0
  %796 = vmatprep.subr.mxu0 0.0
  %797 = vmatpush2.msra.mxu0 0.0
  %798 = vmatprep.subr.mxu0 0.0
  %799 = vmatpush2.msra.mxu0 0.0
  %800 = vmatprep.subr.mxu0 0.0
  %801 = vmatpush2.msra.mxu0 0.0
  %802 = vmatprep.subr.mxu0 0.0
  %803 = vmatpush2.msra.mxu0 0.0
  %804 = vmatprep.subr.mxu0 0.0
  %805 = vmatpush2.msra.mxu0 0.0
  %806 = vmatprep.subr.mxu0 0.0
  %807 = vmatpush2.msra.mxu0 0.0
  %808 = vmatprep.mubr.f32.mxu0 0.0
  %809 = vmatmul.mubr.f32.gmra.mxu0 %v742
  %v810 = vpop.f32.mrf.mxu0
  %v811 = vadd.f32 %v191, %v810
  %v812 = vpop.f32.mrf.mxu0
  %813 = vdwg.mxu0
  %v814 = vadd.f32 %v740, %v811
  %v815 = vxor.u32 %v814, 2147483648
  %v816 = vmul.f32 %v815, 1.442695
  %v817 = vpow.pop %v816
  %v818 = vadd.f32 %v817, 1.0
  %v819 = vrcp.pop %v818
  %v820 = vmul.f32 1.0, %v819
  %822 = vrot.lane.b32.xlu0 %v811, 64
  %v823 = vpop.permute.xlu0 %822
  %v825 = vmul.f32 %v820, %v823
  %827 = vrot.lane.b32.xlu0 %v825, 64
  %v828 = vpop.permute.xlu0 %827
  %v830 = vadd.f32 %v740, %v828
  %v831 = vtanh.pop %v830
  %v832 = vsub.f32 1.0, %v820
  %834 = vrot.lane.b32.xlu0 %v831, 96
  %v835 = vpop.permute.xlu0 %834
  %v837 = vmul.f32 %v832, %v835
  %838 = vrot.lane.b32.xlu0 %v738, 32
  %v839 = vpop.permute.xlu0 %838
  %v841 = vmul.f32 %v820, %v839
  %v842 = vadd.f32 %v837, %v841
  %vm843 = vcmp.gt.s32.totalorder %v31, 5
  %v844 = vsel %vm843, 1, 0
  %v845 = vcvt.s32.f32 %v844
  %847 = vset.pattern.permute.xlu0 0
  %848 = vperm.xlu0 %847, %v845
  %v849 = vpop.permute.xlu0 %848
  %v851 = vmul.f32 %v849, %v842
  %v852 = vsub.f32 1.0, %v845
  %854 = vset.pattern.permute.xlu0 0
  %855 = vperm.xlu0 %854, %v852
  %v856 = vpop.permute.xlu0 %855
  %v858 = vmul.f32 %v856, %v738
  %860 = vrot.lane.b32.xlu0 %v858, 32
  %v861 = vpop.permute.xlu0 %860
  %v863 = vadd.f32 %v851, %v861
  %865 = vrot.lane.b32.xlu0 %v863, 96
  %v866 = vpop.permute.xlu0 %865
  %868 = vst.msk [vmem:[#allocation3] sm:$0x1f] %vm28, %v866
  %870 = vrot.lane.b32.xlu0 %v851, 96
  %v871 = vpop.permute.xlu0 %870
  %s873 = scalar_lea.vmem %s8, 40
  %874 = vst.msk [vmem:[%s873] sm:$0x1f] %vm28, %v871
  %v875 = vld [vmem:[#allocation2] sm:$0x1f]
  %s876 = scalar_lea.vmem %s0, 24
  %v877 = vld [vmem:[%s876] sm:$0x1f]
  %v879 = vsel %vm50, %v875, 0
  %881 = vmatprep.subr.mxu0 0.0
  %882 = vmatpush1.msra.mxu0 0.0
  %883 = vmatprep.subr.mxu0 0.0
  %884 = vmatpush1.msra.mxu0 0.0
  %885 = vmatprep.subr.mxu0 0.0
  %886 = vmatpush1.msra.mxu0 0.0
  %887 = vmatprep.subr.mxu0 0.0
  %888 = vmatpush1.msra.mxu0 0.0
  %889 = vmatprep.subr.mxu0 0.0
  %890 = vmatpush1.msra.mxu0 0.0
  %891 = vmatprep.subr.mxu0 0.0
  %892 = vmatpush1.msra.mxu0 0.0
  %893 = vmatprep.subr.mxu0 0.0
  %894 = vmatpush1.msra.mxu0 0.0
  %895 = vmatprep.subr.mxu0 0.0
  %896 = vmatpush1.msra.mxu0 0.0
  %897 = vmatprep.subr.mxu0 0.0
  %898 = vmatpush1.msra.mxu0 0.0
  %899 = vmatprep.subr.mxu0 0.0
  %900 = vmatpush1.msra.mxu0 0.0
  %901 = vmatprep.subr.mxu0 0.0
  %902 = vmatpush1.msra.mxu0 0.0
  %903 = vmatprep.subr.mxu0 0.0
  %904 = vmatpush1.msra.mxu0 0.0
  %905 = vmatprep.subr.mxu0 0.0
  %906 = vmatpush1.msra.mxu0 %v35
  %907 = vmatprep.subr.mxu0 0.0
  %908 = vmatpush1.msra.mxu0 %v34
  %909 = vmatprep.subr.mxu0 0.0
  %910 = vmatpush1.msra.mxu0 %v33
  %911 = vmatprep.subr.mxu0 0.0
  %912 = vmatpush1.msra.mxu0 %v32
  %913 = vmatprep.subr.mxu0 0.0
  %914 = vmatpush2.msra.mxu0 0.0
  %915 = vmatprep.subr.mxu0 0.0
  %916 = vmatpush2.msra.mxu0 0.0
  %917 = vmatprep.subr.mxu0 0.0
  %918 = vmatpush2.msra.mxu0 0.0
  %919 = vmatprep.subr.mxu0 0.0
  %920 = vmatpush2.msra.mxu0 0.0
  %921 = vmatprep.subr.mxu0 0.0
  %922 = vmatpush2.msra.mxu0 0.0
  %923 = vmatprep.subr.mxu0 0.0
  %924 = vmatpush2.msra.mxu0 0.0
  %925 = vmatprep.subr.mxu0 0.0
  %926 = vmatpush2.msra.mxu0 0.0
  %927 = vmatprep.subr.mxu0 0.0
  %928 = vmatpush2.msra.mxu0 0.0
  %929 = vmatprep.subr.mxu0 0.0
  %930 = vmatpush2.msra.mxu0 0.0
  %931 = vmatprep.subr.mxu0 0.0
  %932 = vmatpush2.msra.mxu0 0.0
  %933 = vmatprep.subr.mxu0 0.0
  %934 = vmatpush2.msra.mxu0 0.0
  %935 = vmatprep.subr.mxu0 0.0
  %936 = vmatpush2.msra.mxu0 0.0
  %937 = vmatprep.subr.mxu0 0.0
  %938 = vmatpush2.msra.mxu0 0.0
  %939 = vmatprep.subr.mxu0 0.0
  %940 = vmatpush2.msra.mxu0 0.0
  %941 = vmatprep.subr.mxu0 0.0
  %942 = vmatpush2.msra.mxu0 0.0
  %943 = vmatprep.subr.mxu0 0.0
  %944 = vmatpush2.msra.mxu0 0.0
  %945 = vmatprep.mubr.f32.mxu0 0.0
  %946 = vmatmul.mubr.f32.gmra.mxu0 %v879
  %v947 = vpop.f32.mrf.mxu0
  %v948 = vadd.f32 %v48, %v947
  %v949 = vpop.f32.mrf.mxu0
  %950 = vdwg.mxu0
  %v951 = vadd.f32 %v877, %v948
  %v952 = vxor.u32 %v951, 2147483648
  %v953 = vmul.f32 %v952, 1.442695
  %v954 = vpow.pop %v953
  %v955 = vadd.f32 %v954, 1.0
  %v956 = vrcp.pop %v955
  %v957 = vmul.f32 1.0, %v956
  %959 = vrot.lane.b32.xlu0 %v948, 64
  %v960 = vpop.permute.xlu0 %959
  %v962 = vmul.f32 %v957, %v960
  %964 = vrot.lane.b32.xlu0 %v962, 64
  %v965 = vpop.permute.xlu0 %964
  %v967 = vadd.f32 %v877, %v965
  %v968 = vtanh.pop %v967
  %v969 = vsub.f32 1.0, %v957
  %971 = vrot.lane.b32.xlu0 %v968, 96
  %v972 = vpop.permute.xlu0 %971
  %v974 = vmul.f32 %v969, %v972
  %975 = vrot.lane.b32.xlu0 %v875, 32
  %v976 = vpop.permute.xlu0 %975
  %v978 = vmul.f32 %v957, %v976
  %v979 = vadd.f32 %v974, %v978
  %vm980 = vcmp.gt.s32.totalorder %v31, 3
  %v981 = vsel %vm980, 1, 0
  %v982 = vcvt.s32.f32 %v981
  %984 = vset.pattern.permute.xlu0 0
  %985 = vperm.xlu0 %984, %v982
  %v986 = vpop.permute.xlu0 %985
  %v988 = vmul.f32 %v986, %v979
  %v989 = vsub.f32 1.0, %v982
  %991 = vset.pattern.permute.xlu0 0
  %992 = vperm.xlu0 %991, %v989
  %v993 = vpop.permute.xlu0 %992
  %v995 = vmul.f32 %v993, %v875
  %997 = vrot.lane.b32.xlu0 %v995, 32
  %v998 = vpop.permute.xlu0 %997
  %v1000 = vadd.f32 %v988, %v998
  %1002 = vrot.lane.b32.xlu0 %v1000, 96
  %v1003 = vpop.permute.xlu0 %1002
  %1005 = vst.msk [vmem:[#allocation2] sm:$0x1f] %vm28, %v1003
  %1007 = vrot.lane.b32.xlu0 %v988, 96
  %v1008 = vpop.permute.xlu0 %1007
  %s1010 = scalar_lea.vmem %s7, 24
  %1011 = vst.msk [vmem:[%s1010] sm:$0x1f] %vm28, %v1008
  %v1012 = vld [vmem:[#allocation3] sm:$0x1f]
  %s1013 = scalar_lea.vmem %s1, 32
  %v1014 = vld [vmem:[%s1013] sm:$0x1f]
  %v1016 = vsel %vm50, %v1012, 0
  %1018 = vmatprep.subr.mxu0 0.0
  %1019 = vmatpush1.msra.mxu0 0.0
  %1020 = vmatprep.subr.mxu0 0.0
  %1021 = vmatpush1.msra.mxu0 0.0
  %1022 = vmatprep.subr.mxu0 0.0
  %1023 = vmatpush1.msra.mxu0 0.0
  %1024 = vmatprep.subr.mxu0 0.0
  %1025 = vmatpush1.msra.mxu0 0.0
  %1026 = vmatprep.subr.mxu0 0.0
  %1027 = vmatpush1.msra.mxu0 0.0
  %1028 = vmatprep.subr.mxu0 0.0
  %1029 = vmatpush1.msra.mxu0 0.0
  %1030 = vmatprep.subr.mxu0 0.0
  %1031 = vmatpush1.msra.mxu0 0.0
  %1032 = vmatprep.subr.mxu0 0.0
  %1033 = vmatpush1.msra.mxu0 0.0
  %1034 = vmatprep.subr.mxu0 0.0
  %1035 = vmatpush1.msra.mxu0 0.0
  %1036 = vmatprep.subr.mxu0 0.0
  %1037 = vmatpush1.msra.mxu0 0.0
  %1038 = vmatprep.subr.mxu0 0.0
  %1039 = vmatpush1.msra.mxu0 0.0
  %1040 = vmatprep.subr.mxu0 0.0
  %1041 = vmatpush1.msra.mxu0 0.0
  %1042 = vmatprep.subr.mxu0 0.0
  %1043 = vmatpush1.msra.mxu0 %v39
  %1044 = vmatprep.subr.mxu0 0.0
  %1045 = vmatpush1.msra.mxu0 %v38
  %1046 = vmatprep.subr.mxu0 0.0
  %1047 = vmatpush1.msra.mxu0 %v37
  %1048 = vmatprep.subr.mxu0 0.0
  %1049 = vmatpush1.msra.mxu0 %v36
  %1050 = vmatprep.subr.mxu0 0.0
  %1051 = vmatpush2.msra.mxu0 0.0
  %1052 = vmatprep.subr.mxu0 0.0
  %1053 = vmatpush2.msra.mxu0 0.0
  %1054 = vmatprep.subr.mxu0 0.0
  %1055 = vmatpush2.msra.mxu0 0.0
  %1056 = vmatprep.subr.mxu0 0.0
  %1057 = vmatpush2.msra.mxu0 0.0
  %1058 = vmatprep.subr.mxu0 0.0
  %1059 = vmatpush2.msra.mxu0 0.0
  %1060 = vmatprep.subr.mxu0 0.0
  %1061 = vmatpush2.msra.mxu0 0.0
  %1062 = vmatprep.subr.mxu0 0.0
  %1063 = vmatpush2.msra.mxu0 0.0
  %1064 = vmatprep.subr.mxu0 0.0
  %1065 = vmatpush2.msra.mxu0 0.0
  %1066 = vmatprep.subr.mxu0 0.0
  %1067 = vmatpush2.msra.mxu0 0.0
  %1068 = vmatprep.subr.mxu0 0.0
  %1069 = vmatpush2.msra.mxu0 0.0
  %1070 = vmatprep.subr.mxu0 0.0
  %1071 = vmatpush2.msra.mxu0 0.0
  %1072 = vmatprep.subr.mxu0 0.0
  %1073 = vmatpush2.msra.mxu0 0.0
  %1074 = vmatprep.subr.mxu0 0.0
  %1075 = vmatpush2.msra.mxu0 0.0
  %1076 = vmatprep.subr.mxu0 0.0
  %1077 = vmatpush2.msra.mxu0 0.0
  %1078 = vmatprep.subr.mxu0 0.0
  %1079 = vmatpush2.msra.mxu0 0.0
  %1080 = vmatprep.subr.mxu0 0.0
  %1081 = vmatpush2.msra.mxu0 0.0
  %1082 = vmatprep.mubr.f32.mxu0 0.0
  %1083 = vmatmul.mubr.f32.gmra.mxu0 %v1016
  %v1084 = vpop.f32.mrf.mxu0
  %v1085 = vadd.f32 %v191, %v1084
  %v1086 = vpop.f32.mrf.mxu0
  %1087 = vdwg.mxu0
  %v1088 = vadd.f32 %v1014, %v1085
  %v1089 = vxor.u32 %v1088, 2147483648
  %v1090 = vmul.f32 %v1089, 1.442695
  %v1091 = vpow.pop %v1090
  %v1092 = vadd.f32 %v1091, 1.0
  %v1093 = vrcp.pop %v1092
  %v1094 = vmul.f32 1.0, %v1093
  %1096 = vrot.lane.b32.xlu0 %v1085, 64
  %v1097 = vpop.permute.xlu0 %1096
  %v1099 = vmul.f32 %v1094, %v1097
  %1101 = vrot.lane.b32.xlu0 %v1099, 64
  %v1102 = vpop.permute.xlu0 %1101
  %v1104 = vadd.f32 %v1014, %v1102
  %v1105 = vtanh.pop %v1104
  %v1106 = vsub.f32 1.0, %v1094
  %1108 = vrot.lane.b32.xlu0 %v1105, 96
  %v1109 = vpop.permute.xlu0 %1108
  %v1111 = vmul.f32 %v1106, %v1109
  %1112 = vrot.lane.b32.xlu0 %v1012, 32
  %v1113 = vpop.permute.xlu0 %1112
  %v1115 = vmul.f32 %v1094, %v1113
  %v1116 = vadd.f32 %v1111, %v1115
  %vm1117 = vcmp.gt.s32.totalorder %v31, 4
  %v1118 = vsel %vm1117, 1, 0
  %v1119 = vcvt.s32.f32 %v1118
  %1121 = vset.pattern.permute.xlu0 0
  %1122 = vperm.xlu0 %1121, %v1119
  %v1123 = vpop.permute.xlu0 %1122
  %v1125 = vmul.f32 %v1123, %v1116
  %v1126 = vsub.f32 1.0, %v1119
  %1128 = vset.pattern.permute.xlu0 0
  %1129 = vperm.xlu0 %1128, %v1126
  %v1130 = vpop.permute.xlu0 %1129
  %v1132 = vmul.f32 %v1130, %v1012
  %1134 = vrot.lane.b32.xlu0 %v1132, 32
  %v1135 = vpop.permute.xlu0 %1134
  %v1137 = vadd.f32 %v1125, %v1135
  %1139 = vrot.lane.b32.xlu0 %v1137, 96
  %v1140 = vpop.permute.xlu0 %1139
  %1142 = vst.msk [vmem:[#allocation3] sm:$0x1f] %vm28, %v1140
  %1144 = vrot.lane.b32.xlu0 %v1125, 96
  %v1145 = vpop.permute.xlu0 %1144
  %s1147 = scalar_lea.vmem %s8, 32
  %1148 = vst.msk [vmem:[%s1147] sm:$0x1f] %vm28, %v1145
  %v1149 = vld [vmem:[#allocation2] sm:$0x1f]
  %s1150 = scalar_lea.vmem %s0, 32
  %v1151 = vld [vmem:[%s1150] sm:$0x1f]
  %v1153 = vsel %vm50, %v1149, 0
  %1155 = vmatprep.subr.mxu0 0.0
  %1156 = vmatpush1.msra.mxu0 0.0
  %1157 = vmatprep.subr.mxu0 0.0
  %1158 = vmatpush1.msra.mxu0 0.0
  %1159 = vmatprep.subr.mxu0 0.0
  %1160 = vmatpush1.msra.mxu0 0.0
  %1161 = vmatprep.subr.mxu0 0.0
  %1162 = vmatpush1.msra.mxu0 0.0
  %1163 = vmatprep.subr.mxu0 0.0
  %1164 = vmatpush1.msra.mxu0 0.0
  %1165 = vmatprep.subr.mxu0 0.0
  %1166 = vmatpush1.msra.mxu0 0.0
  %1167 = vmatprep.subr.mxu0 0.0
  %1168 = vmatpush1.msra.mxu0 0.0
  %1169 = vmatprep.subr.mxu0 0.0
  %1170 = vmatpush1.msra.mxu0 0.0
  %1171 = vmatprep.subr.mxu0 0.0
  %1172 = vmatpush1.msra.mxu0 0.0
  %1173 = vmatprep.subr.mxu0 0.0
  %1174 = vmatpush1.msra.mxu0 0.0
  %1175 = vmatprep.subr.mxu0 0.0
  %1176 = vmatpush1.msra.mxu0 0.0
  %1177 = vmatprep.subr.mxu0 0.0
  %1178 = vmatpush1.msra.mxu0 0.0
  %1179 = vmatprep.subr.mxu0 0.0
  %1180 = vmatpush1.msra.mxu0 %v35
  %1181 = vmatprep.subr.mxu0 0.0
  %1182 = vmatpush1.msra.mxu0 %v34
  %1183 = vmatprep.subr.mxu0 0.0
  %1184 = vmatpush1.msra.mxu0 %v33
  %1185 = vmatprep.subr.mxu0 0.0
  %1186 = vmatpush1.msra.mxu0 %v32
  %1187 = vmatprep.subr.mxu0 0.0
  %1188 = vmatpush2.msra.mxu0 0.0
  %1189 = vmatprep.subr.mxu0 0.0
  %1190 = vmatpush2.msra.mxu0 0.0
  %1191 = vmatprep.subr.mxu0 0.0
  %1192 = vmatpush2.msra.mxu0 0.0
  %1193 = vmatprep.subr.mxu0 0.0
  %1194 = vmatpush2.msra.mxu0 0.0
  %1195 = vmatprep.subr.mxu0 0.0
  %1196 = vmatpush2.msra.mxu0 0.0
  %1197 = vmatprep.subr.mxu0 0.0
  %1198 = vmatpush2.msra.mxu0 0.0
  %1199 = vmatprep.subr.mxu0 0.0
  %1200 = vmatpush2.msra.mxu0 0.0
  %1201 = vmatprep.subr.mxu0 0.0
  %1202 = vmatpush2.msra.mxu0 0.0
  %1203 = vmatprep.subr.mxu0 0.0
  %1204 = vmatpush2.msra.mxu0 0.0
  %1205 = vmatprep.subr.mxu0 0.0
  %1206 = vmatpush2.msra.mxu0 0.0
  %1207 = vmatprep.subr.mxu0 0.0
  %1208 = vmatpush2.msra.mxu0 0.0
  %1209 = vmatprep.subr.mxu0 0.0
  %1210 = vmatpush2.msra.mxu0 0.0
  %1211 = vmatprep.subr.mxu0 0.0
  %1212 = vmatpush2.msra.mxu0 0.0
  %1213 = vmatprep.subr.mxu0 0.0
  %1214 = vmatpush2.msra.mxu0 0.0
  %1215 = vmatprep.subr.mxu0 0.0
  %1216 = vmatpush2.msra.mxu0 0.0
  %1217 = vmatprep.subr.mxu0 0.0
  %1218 = vmatpush2.msra.mxu0 0.0
  %1219 = vmatprep.mubr.f32.mxu0 0.0
  %1220 = vmatmul.mubr.f32.gmra.mxu0 %v1153
  %v1221 = vpop.f32.mrf.mxu0
  %v1222 = vadd.f32 %v48, %v1221
  %v1223 = vpop.f32.mrf.mxu0
  %1224 = vdwg.mxu0
  %v1225 = vadd.f32 %v1151, %v1222
  %v1226 = vxor.u32 %v1225, 2147483648
  %v1227 = vmul.f32 %v1226, 1.442695
  %v1228 = vpow.pop %v1227
  %v1229 = vadd.f32 %v1228, 1.0
  %v1230 = vrcp.pop %v1229
  %v1231 = vmul.f32 1.0, %v1230
  %1233 = vrot.lane.b32.xlu0 %v1222, 64
  %v1234 = vpop.permute.xlu0 %1233
  %v1236 = vmul.f32 %v1231, %v1234
  %1238 = vrot.lane.b32.xlu0 %v1236, 64
  %v1239 = vpop.permute.xlu0 %1238
  %v1241 = vadd.f32 %v1151, %v1239
  %v1242 = vtanh.pop %v1241
  %v1243 = vsub.f32 1.0, %v1231
  %1245 = vrot.lane.b32.xlu0 %v1242, 96
  %v1246 = vpop.permute.xlu0 %1245
  %v1248 = vmul.f32 %v1243, %v1246
  %1249 = vrot.lane.b32.xlu0 %v1149, 32
  %v1250 = vpop.permute.xlu0 %1249
  %v1252 = vmul.f32 %v1231, %v1250
  %v1253 = vadd.f32 %v1248, %v1252
  %v1254 = vmul.f32 %v1123, %v1253
  %v1255 = vmul.f32 %v1130, %v1149
  %1257 = vrot.lane.b32.xlu0 %v1255, 32
  %v1258 = vpop.permute.xlu0 %1257
  %v1260 = vadd.f32 %v1254, %v1258
  %1262 = vrot.lane.b32.xlu0 %v1260, 96
  %v1263 = vpop.permute.xlu0 %1262
  %1265 = vst.msk [vmem:[#allocation2] sm:$0x1f] %vm28, %v1263
  %1267 = vrot.lane.b32.xlu0 %v1254, 96
  %v1268 = vpop.permute.xlu0 %1267
  %s1270 = scalar_lea.vmem %s7, 32
  %1271 = vst.msk [vmem:[%s1270] sm:$0x1f] %vm28, %v1268
  %v1272 = vld [vmem:[#allocation3] sm:$0x1f]
  %s1273 = scalar_lea.vmem %s1, 24
  %v1274 = vld [vmem:[%s1273] sm:$0x1f]
  %v1276 = vsel %vm50, %v1272, 0
  %1278 = vmatprep.subr.mxu0 0.0
  %1279 = vmatpush1.msra.mxu0 0.0
  %1280 = vmatprep.subr.mxu0 0.0
  %1281 = vmatpush1.msra.mxu0 0.0
  %1282 = vmatprep.subr.mxu0 0.0
  %1283 = vmatpush1.msra.mxu0 0.0
  %1284 = vmatprep.subr.mxu0 0.0
  %1285 = vmatpush1.msra.mxu0 0.0
  %1286 = vmatprep.subr.mxu0 0.0
  %1287 = vmatpush1.msra.mxu0 0.0
  %1288 = vmatprep.subr.mxu0 0.0
  %1289 = vmatpush1.msra.mxu0 0.0
  %1290 = vmatprep.subr.mxu0 0.0
  %1291 = vmatpush1.msra.mxu0 0.0
  %1292 = vmatprep.subr.mxu0 0.0
  %1293 = vmatpush1.msra.mxu0 0.0
  %1294 = vmatprep.subr.mxu0 0.0
  %1295 = vmatpush1.msra.mxu0 0.0
  %1296 = vmatprep.subr.mxu0 0.0
  %1297 = vmatpush1.msra.mxu0 0.0
  %1298 = vmatprep.subr.mxu0 0.0
  %1299 = vmatpush1.msra.mxu0 0.0
  %1300 = vmatprep.subr.mxu0 0.0
  %1301 = vmatpush1.msra.mxu0 0.0
  %1302 = vmatprep.subr.mxu0 0.0
  %1303 = vmatpush1.msra.mxu0 %v39
  %1304 = vmatprep.subr.mxu0 0.0
  %1305 = vmatpush1.msra.mxu0 %v38
  %1306 = vmatprep.subr.mxu0 0.0
  %1307 = vmatpush1.msra.mxu0 %v37
  %1308 = vmatprep.subr.mxu0 0.0
  %1309 = vmatpush1.msra.mxu0 %v36
  %1310 = vmatprep.subr.mxu0 0.0
  %1311 = vmatpush2.msra.mxu0 0.0
  %1312 = vmatprep.subr.mxu0 0.0
  %1313 = vmatpush2.msra.mxu0 0.0
  %1314 = vmatprep.subr.mxu0 0.0
  %1315 = vmatpush2.msra.mxu0 0.0
  %1316 = vmatprep.subr.mxu0 0.0
  %1317 = vmatpush2.msra.mxu0 0.0
  %1318 = vmatprep.subr.mxu0 0.0
  %1319 = vmatpush2.msra.mxu0 0.0
  %1320 = vmatprep.subr.mxu0 0.0
  %1321 = vmatpush2.msra.mxu0 0.0
  %1322 = vmatprep.subr.mxu0 0.0
  %1323 = vmatpush2.msra.mxu0 0.0
  %1324 = vmatprep.subr.mxu0 0.0
  %1325 = vmatpush2.msra.mxu0 0.0
  %1326 = vmatprep.subr.mxu0 0.0
  %1327 = vmatpush2.msra.mxu0 0.0
  %1328 = vmatprep.subr.mxu0 0.0
  %1329 = vmatpush2.msra.mxu0 0.0
  %1330 = vmatprep.subr.mxu0 0.0
  %1331 = vmatpush2.msra.mxu0 0.0
  %1332 = vmatprep.subr.mxu0 0.0
  %1333 = vmatpush2.msra.mxu0 0.0
  %1334 = vmatprep.subr.mxu0 0.0
  %1335 = vmatpush2.msra.mxu0 0.0
  %1336 = vmatprep.subr.mxu0 0.0
  %1337 = vmatpush2.msra.mxu0 0.0
  %1338 = vmatprep.subr.mxu0 0.0
  %1339 = vmatpush2.msra.mxu0 0.0
  %1340 = vmatprep.subr.mxu0 0.0
  %1341 = vmatpush2.msra.mxu0 0.0
  %1342 = vmatprep.mubr.f32.mxu0 0.0
  %1343 = vmatmul.mubr.f32.gmra.mxu0 %v1276
  %v1344 = vpop.f32.mrf.mxu0
  %v1345 = vadd.f32 %v191, %v1344
  %v1346 = vpop.f32.mrf.mxu0
  %1347 = vdwg.mxu0
  %v1348 = vadd.f32 %v1274, %v1345
  %v1349 = vxor.u32 %v1348, 2147483648
  %v1350 = vmul.f32 %v1349, 1.442695
  %v1351 = vpow.pop %v1350
  %v1352 = vadd.f32 %v1351, 1.0
  %v1353 = vrcp.pop %v1352
  %v1354 = vmul.f32 1.0, %v1353
  %1356 = vrot.lane.b32.xlu0 %v1345, 64
  %v1357 = vpop.permute.xlu0 %1356
  %v1359 = vmul.f32 %v1354, %v1357
  %1361 = vrot.lane.b32.xlu0 %v1359, 64
  %v1362 = vpop.permute.xlu0 %1361
  %v1364 = vadd.f32 %v1274, %v1362
  %v1365 = vtanh.pop %v1364
  %v1366 = vsub.f32 1.0, %v1354
  %1368 = vrot.lane.b32.xlu0 %v1365, 96
  %v1369 = vpop.permute.xlu0 %1368
  %v1371 = vmul.f32 %v1366, %v1369
  %1372 = vrot.lane.b32.xlu0 %v1272, 32
  %v1373 = vpop.permute.xlu0 %1372
  %v1375 = vmul.f32 %v1354, %v1373
  %v1376 = vadd.f32 %v1371, %v1375
  %v1377 = vmul.f32 %v986, %v1376
  %v1378 = vmul.f32 %v993, %v1272
  %1380 = vrot.lane.b32.xlu0 %v1378, 32
  %v1381 = vpop.permute.xlu0 %1380
  %v1383 = vadd.f32 %v1377, %v1381
  %1385 = vrot.lane.b32.xlu0 %v1383, 96
  %v1386 = vpop.permute.xlu0 %1385
  %1388 = vst.msk [vmem:[#allocation3] sm:$0x1f] %vm28, %v1386
  %1390 = vrot.lane.b32.xlu0 %v1377, 96
  %v1391 = vpop.permute.xlu0 %1390
  %s1393 = scalar_lea.vmem %s8, 24
  %1394 = vst.msk [vmem:[%s1393] sm:$0x1f] %vm28, %v1391
  %v1395 = vld [vmem:[#allocation2] sm:$0x1f]
  %s1396 = scalar_lea.vmem %s0, 40
  %v1397 = vld [vmem:[%s1396] sm:$0x1f]
  %v1399 = vsel %vm50, %v1395, 0
  %1401 = vmatprep.subr.mxu0 0.0
  %1402 = vmatpush1.msra.mxu0 0.0
  %1403 = vmatprep.subr.mxu0 0.0
  %1404 = vmatpush1.msra.mxu0 0.0
  %1405 = vmatprep.subr.mxu0 0.0
  %1406 = vmatpush1.msra.mxu0 0.0
  %1407 = vmatprep.subr.mxu0 0.0
  %1408 = vmatpush1.msra.mxu0 0.0
  %1409 = vmatprep.subr.mxu0 0.0
  %1410 = vmatpush1.msra.mxu0 0.0
  %1411 = vmatprep.subr.mxu0 0.0
  %1412 = vmatpush1.msra.mxu0 0.0
  %1413 = vmatprep.subr.mxu0 0.0
  %1414 = vmatpush1.msra.mxu0 0.0
  %1415 = vmatprep.subr.mxu0 0.0
  %1416 = vmatpush1.msra.mxu0 0.0
  %1417 = vmatprep.subr.mxu0 0.0
  %1418 = vmatpush1.msra.mxu0 0.0
  %1419 = vmatprep.subr.mxu0 0.0
  %1420 = vmatpush1.msra.mxu0 0.0
  %1421 = vmatprep.subr.mxu0 0.0
  %1422 = vmatpush1.msra.mxu0 0.0
  %1423 = vmatprep.subr.mxu0 0.0
  %1424 = vmatpush1.msra.mxu0 0.0
  %1425 = vmatprep.subr.mxu0 0.0
  %1426 = vmatpush1.msra.mxu0 %v35
  %1427 = vmatprep.subr.mxu0 0.0
  %1428 = vmatpush1.msra.mxu0 %v34
  %1429 = vmatprep.subr.mxu0 0.0
  %1430 = vmatpush1.msra.mxu0 %v33
  %1431 = vmatprep.subr.mxu0 0.0
  %1432 = vmatpush1.msra.mxu0 %v32
  %1433 = vmatprep.subr.mxu0 0.0
  %1434 = vmatpush2.msra.mxu0 0.0
  %1435 = vmatprep.subr.mxu0 0.0
  %1436 = vmatpush2.msra.mxu0 0.0
  %1437 = vmatprep.subr.mxu0 0.0
  %1438 = vmatpush2.msra.mxu0 0.0
  %1439 = vmatprep.subr.mxu0 0.0
  %1440 = vmatpush2.msra.mxu0 0.0
  %1441 = vmatprep.subr.mxu0 0.0
  %1442 = vmatpush2.msra.mxu0 0.0
  %1443 = vmatprep.subr.mxu0 0.0
  %1444 = vmatpush2.msra.mxu0 0.0
  %1445 = vmatprep.subr.mxu0 0.0
  %1446 = vmatpush2.msra.mxu0 0.0
  %1447 = vmatprep.subr.mxu0 0.0
  %1448 = vmatpush2.msra.mxu0 0.0
  %1449 = vmatprep.subr.mxu0 0.0
  %1450 = vmatpush2.msra.mxu0 0.0
  %1451 = vmatprep.subr.mxu0 0.0
  %1452 = vmatpush2.msra.mxu0 0.0
  %1453 = vmatprep.subr.mxu0 0.0
  %1454 = vmatpush2.msra.mxu0 0.0
  %1455 = vmatprep.subr.mxu0 0.0
  %1456 = vmatpush2.msra.mxu0 0.0
  %1457 = vmatprep.subr.mxu0 0.0
  %1458 = vmatpush2.msra.mxu0 0.0
  %1459 = vmatprep.subr.mxu0 0.0
  %1460 = vmatpush2.msra.mxu0 0.0
  %1461 = vmatprep.subr.mxu0 0.0
  %1462 = vmatpush2.msra.mxu0 0.0
  %1463 = vmatprep.subr.mxu0 0.0
  %1464 = vmatpush2.msra.mxu0 0.0
  %1465 = vmatprep.mubr.f32.mxu0 0.0
  %1466 = vmatmul.mubr.f32.gmra.mxu0 %v1399
  %v1467 = vpop.f32.mrf.mxu0
  %v1468 = vadd.f32 %v48, %v1467
  %v1469 = vpop.f32.mrf.mxu0
  %1470 = vdwg.mxu0
  %v1471 = vadd.f32 %v1397, %v1468
  %v1472 = vxor.u32 %v1471, 2147483648
  %v1473 = vmul.f32 %v1472, 1.442695
  %v1474 = vpow.pop %v1473
  %v1475 = vadd.f32 %v1474, 1.0
  %v1476 = vrcp.pop %v1475
  %v1477 = vmul.f32 1.0, %v1476
  %1479 = vrot.lane.b32.xlu0 %v1468, 64
  %v1480 = vpop.permute.xlu0 %1479
  %v1482 = vmul.f32 %v1477, %v1480
  %1484 = vrot.lane.b32.xlu0 %v1482, 64
  %v1485 = vpop.permute.xlu0 %1484
  %v1487 = vadd.f32 %v1397, %v1485
  %v1488 = vtanh.pop %v1487
  %v1489 = vsub.f32 1.0, %v1477
  %1491 = vrot.lane.b32.xlu0 %v1488, 96
  %v1492 = vpop.permute.xlu0 %1491
  %v1494 = vmul.f32 %v1489, %v1492
  %1495 = vrot.lane.b32.xlu0 %v1395, 32
  %v1496 = vpop.permute.xlu0 %1495
  %v1498 = vmul.f32 %v1477, %v1496
  %v1499 = vadd.f32 %v1494, %v1498
  %v1500 = vmul.f32 %v849, %v1499
  %v1501 = vmul.f32 %v856, %v1395
  %1503 = vrot.lane.b32.xlu0 %v1501, 32
  %v1504 = vpop.permute.xlu0 %1503
  %v1506 = vadd.f32 %v1500, %v1504
  %1508 = vrot.lane.b32.xlu0 %v1506, 96
  %v1509 = vpop.permute.xlu0 %1508
  %1511 = vst.msk [vmem:[#allocation2] sm:$0x1f] %vm28, %v1509
  %1513 = vrot.lane.b32.xlu0 %v1500, 96
  %v1514 = vpop.permute.xlu0 %1513
  %s1516 = scalar_lea.vmem %s7, 40
  %1517 = vst.msk [vmem:[%s1516] sm:$0x1f] %vm28, %v1514
  %v1518 = vld [vmem:[#allocation3] sm:$0x1f]
  %s1519 = scalar_lea.vmem %s1, 16
  %v1520 = vld [vmem:[%s1519] sm:$0x1f]
  %v1522 = vsel %vm50, %v1518, 0
  %1524 = vmatprep.subr.mxu0 0.0
  %1525 = vmatpush1.msra.mxu0 0.0
  %1526 = vmatprep.subr.mxu0 0.0
  %1527 = vmatpush1.msra.mxu0 0.0
  %1528 = vmatprep.subr.mxu0 0.0
  %1529 = vmatpush1.msra.mxu0 0.0
  %1530 = vmatprep.subr.mxu0 0.0
  %1531 = vmatpush1.msra.mxu0 0.0
  %1532 = vmatprep.subr.mxu0 0.0
  %1533 = vmatpush1.msra.mxu0 0.0
  %1534 = vmatprep.subr.mxu0 0.0
  %1535 = vmatpush1.msra.mxu0 0.0
  %1536 = vmatprep.subr.mxu0 0.0
  %1537 = vmatpush1.msra.mxu0 0.0
  %1538 = vmatprep.subr.mxu0 0.0
  %1539 = vmatpush1.msra.mxu0 0.0
  %1540 = vmatprep.subr.mxu0 0.0
  %1541 = vmatpush1.msra.mxu0 0.0
  %1542 = vmatprep.subr.mxu0 0.0
  %1543 = vmatpush1.msra.mxu0 0.0
  %1544 = vmatprep.subr.mxu0 0.0
  %1545 = vmatpush1.msra.mxu0 0.0
  %1546 = vmatprep.subr.mxu0 0.0
  %1547 = vmatpush1.msra.mxu0 0.0
  %1548 = vmatprep.subr.mxu0 0.0
  %1549 = vmatpush1.msra.mxu0 %v39
  %1550 = vmatprep.subr.mxu0 0.0
  %1551 = vmatpush1.msra.mxu0 %v38
  %1552 = vmatprep.subr.mxu0 0.0
  %1553 = vmatpush1.msra.mxu0 %v37
  %1554 = vmatprep.subr.mxu0 0.0
  %1555 = vmatpush1.msra.mxu0 %v36
  %1556 = vmatprep.subr.mxu0 0.0
  %1557 = vmatpush2.msra.mxu0 0.0
  %1558 = vmatprep.subr.mxu0 0.0
  %1559 = vmatpush2.msra.mxu0 0.0
  %1560 = vmatprep.subr.mxu0 0.0
  %1561 = vmatpush2.msra.mxu0 0.0
  %1562 = vmatprep.subr.mxu0 0.0
  %1563 = vmatpush2.msra.mxu0 0.0
  %1564 = vmatprep.subr.mxu0 0.0
  %1565 = vmatpush2.msra.mxu0 0.0
  %1566 = vmatprep.subr.mxu0 0.0
  %1567 = vmatpush2.msra.mxu0 0.0
  %1568 = vmatprep.subr.mxu0 0.0
  %1569 = vmatpush2.msra.mxu0 0.0
  %1570 = vmatprep.subr.mxu0 0.0
  %1571 = vmatpush2.msra.mxu0 0.0
  %1572 = vmatprep.subr.mxu0 0.0
  %1573 = vmatpush2.msra.mxu0 0.0
  %1574 = vmatprep.subr.mxu0 0.0
  %1575 = vmatpush2.msra.mxu0 0.0
  %1576 = vmatprep.subr.mxu0 0.0
  %1577 = vmatpush2.msra.mxu0 0.0
  %1578 = vmatprep.subr.mxu0 0.0
  %1579 = vmatpush2.msra.mxu0 0.0
  %1580 = vmatprep.subr.mxu0 0.0
  %1581 = vmatpush2.msra.mxu0 0.0
  %1582 = vmatprep.subr.mxu0 0.0
  %1583 = vmatpush2.msra.mxu0 0.0
  %1584 = vmatprep.subr.mxu0 0.0
  %1585 = vmatpush2.msra.mxu0 0.0
  %1586 = vmatprep.subr.mxu0 0.0
  %1587 = vmatpush2.msra.mxu0 0.0
  %1588 = vmatprep.mubr.f32.mxu0 0.0
  %1589 = vmatmul.mubr.f32.gmra.mxu0 %v1522
  %v1590 = vpop.f32.mrf.mxu0
  %v1591 = vadd.f32 %v191, %v1590
  %v1592 = vpop.f32.mrf.mxu0
  %1593 = vdwg.mxu0
  %v1594 = vadd.f32 %v1520, %v1591
  %v1595 = vxor.u32 %v1594, 2147483648
  %v1596 = vmul.f32 %v1595, 1.442695
  %v1597 = vpow.pop %v1596
  %v1598 = vadd.f32 %v1597, 1.0
  %v1599 = vrcp.pop %v1598
  %v1600 = vmul.f32 1.0, %v1599
  %1602 = vrot.lane.b32.xlu0 %v1591, 64
  %v1603 = vpop.permute.xlu0 %1602
  %v1605 = vmul.f32 %v1600, %v1603
  %1607 = vrot.lane.b32.xlu0 %v1605, 64
  %v1608 = vpop.permute.xlu0 %1607
  %v1610 = vadd.f32 %v1520, %v1608
  %v1611 = vtanh.pop %v1610
  %v1612 = vsub.f32 1.0, %v1600
  %1614 = vrot.lane.b32.xlu0 %v1611, 96
  %v1615 = vpop.permute.xlu0 %1614
  %v1617 = vmul.f32 %v1612, %v1615
  %1618 = vrot.lane.b32.xlu0 %v1518, 32
  %v1619 = vpop.permute.xlu0 %1618
  %v1621 = vmul.f32 %v1600, %v1619
  %v1622 = vadd.f32 %v1617, %v1621
  %v1623 = vmul.f32 %v712, %v1622
  %v1624 = vmul.f32 %v719, %v1518
  %1626 = vrot.lane.b32.xlu0 %v1624, 32
  %v1627 = vpop.permute.xlu0 %1626
  %v1629 = vadd.f32 %v1623, %v1627
  %1631 = vrot.lane.b32.xlu0 %v1629, 96
  %v1632 = vpop.permute.xlu0 %1631
  %1634 = vst.msk [vmem:[#allocation3] sm:$0x1f] %vm28, %v1632
  %1636 = vrot.lane.b32.xlu0 %v1623, 96
  %v1637 = vpop.permute.xlu0 %1636
  %s1639 = scalar_lea.vmem %s8, 16
  %1640 = vst.msk [vmem:[%s1639] sm:$0x1f] %vm28, %v1637
  %v1641 = vld [vmem:[#allocation2] sm:$0x1f]
  %s1642 = scalar_lea.vmem %s0, 48
  %v1643 = vld [vmem:[%s1642] sm:$0x1f]
  %v1645 = vsel %vm50, %v1641, 0
  %1647 = vmatprep.subr.mxu0 0.0
  %1648 = vmatpush1.msra.mxu0 0.0
  %1649 = vmatprep.subr.mxu0 0.0
  %1650 = vmatpush1.msra.mxu0 0.0
  %1651 = vmatprep.subr.mxu0 0.0
  %1652 = vmatpush1.msra.mxu0 0.0
  %1653 = vmatprep.subr.mxu0 0.0
  %1654 = vmatpush1.msra.mxu0 0.0
  %1655 = vmatprep.subr.mxu0 0.0
  %1656 = vmatpush1.msra.mxu0 0.0
  %1657 = vmatprep.subr.mxu0 0.0
  %1658 = vmatpush1.msra.mxu0 0.0
  %1659 = vmatprep.subr.mxu0 0.0
  %1660 = vmatpush1.msra.mxu0 0.0
  %1661 = vmatprep.subr.mxu0 0.0
  %1662 = vmatpush1.msra.mxu0 0.0
  %1663 = vmatprep.subr.mxu0 0.0
  %1664 = vmatpush1.msra.mxu0 0.0
  %1665 = vmatprep.subr.mxu0 0.0
  %1666 = vmatpush1.msra.mxu0 0.0
  %1667 = vmatprep.subr.mxu0 0.0
  %1668 = vmatpush1.msra.mxu0 0.0
  %1669 = vmatprep.subr.mxu0 0.0
  %1670 = vmatpush1.msra.mxu0 0.0
  %1671 = vmatprep.subr.mxu0 0.0
  %1672 = vmatpush1.msra.mxu0 %v35
  %1673 = vmatprep.subr.mxu0 0.0
  %1674 = vmatpush1.msra.mxu0 %v34
  %1675 = vmatprep.subr.mxu0 0.0
  %1676 = vmatpush1.msra.mxu0 %v33
  %1677 = vmatprep.subr.mxu0 0.0
  %1678 = vmatpush1.msra.mxu0 %v32
  %1679 = vmatprep.subr.mxu0 0.0
  %1680 = vmatpush2.msra.mxu0 0.0
  %1681 = vmatprep.subr.mxu0 0.0
  %1682 = vmatpush2.msra.mxu0 0.0
  %1683 = vmatprep.subr.mxu0 0.0
  %1684 = vmatpush2.msra.mxu0 0.0
  %1685 = vmatprep.subr.mxu0 0.0
  %1686 = vmatpush2.msra.mxu0 0.0
  %1687 = vmatprep.subr.mxu0 0.0
  %1688 = vmatpush2.msra.mxu0 0.0
  %1689 = vmatprep.subr.mxu0 0.0
  %1690 = vmatpush2.msra.mxu0 0.0
  %1691 = vmatprep.subr.mxu0 0.0
  %1692 = vmatpush2.msra.mxu0 0.0
  %1693 = vmatprep.subr.mxu0 0.0
  %1694 = vmatpush2.msra.mxu0 0.0
  %1695 = vmatprep.subr.mxu0 0.0
  %1696 = vmatpush2.msra.mxu0 0.0
  %1697 = vmatprep.subr.mxu0 0.0
  %1698 = vmatpush2.msra.mxu0 0.0
  %1699 = vmatprep.subr.mxu0 0.0
  %1700 = vmatpush2.msra.mxu0 0.0
  %1701 = vmatprep.subr.mxu0 0.0
  %1702 = vmatpush2.msra.mxu0 0.0
  %1703 = vmatprep.subr.mxu0 0.0
  %1704 = vmatpush2.msra.mxu0 0.0
  %1705 = vmatprep.subr.mxu0 0.0
  %1706 = vmatpush2.msra.mxu0 0.0
  %1707 = vmatprep.subr.mxu0 0.0
  %1708 = vmatpush2.msra.mxu0 0.0
  %1709 = vmatprep.subr.mxu0 0.0
  %1710 = vmatpush2.msra.mxu0 0.0
  %1711 = vmatprep.mubr.f32.mxu0 0.0
  %1712 = vmatmul.mubr.f32.gmra.mxu0 %v1645
  %v1713 = vpop.f32.mrf.mxu0
  %v1714 = vadd.f32 %v48, %v1713
  %v1715 = vpop.f32.mrf.mxu0
  %1716 = vdwg.mxu0
  %v1717 = vadd.f32 %v1643, %v1714
  %v1718 = vxor.u32 %v1717, 2147483648
  %v1719 = vmul.f32 %v1718, 1.442695
  %v1720 = vpow.pop %v1719
  %v1721 = vadd.f32 %v1720, 1.0
  %v1722 = vrcp.pop %v1721
  %v1723 = vmul.f32 1.0, %v1722
  %1725 = vrot.lane.b32.xlu0 %v1714, 64
  %v1726 = vpop.permute.xlu0 %1725
  %v1728 = vmul.f32 %v1723, %v1726
  %1730 = vrot.lane.b32.xlu0 %v1728, 64
  %v1731 = vpop.permute.xlu0 %1730
  %v1733 = vadd.f32 %v1643, %v1731
  %v1734 = vtanh.pop %v1733
  %v1735 = vsub.f32 1.0, %v1723
  %1737 = vrot.lane.b32.xlu0 %v1734, 96
  %v1738 = vpop.permute.xlu0 %1737
  %v1740 = vmul.f32 %v1735, %v1738
  %1741 = vrot.lane.b32.xlu0 %v1641, 32
  %v1742 = vpop.permute.xlu0 %1741
  %v1744 = vmul.f32 %v1723, %v1742
  %v1745 = vadd.f32 %v1740, %v1744
  %v1746 = vmul.f32 %v575, %v1745
  %v1747 = vmul.f32 %v582, %v1641
  %1749 = vrot.lane.b32.xlu0 %v1747, 32
  %v1750 = vpop.permute.xlu0 %1749
  %v1752 = vadd.f32 %v1746, %v1750
  %1754 = vrot.lane.b32.xlu0 %v1752, 96
  %v1755 = vpop.permute.xlu0 %1754
  %1757 = vst.msk [vmem:[#allocation2] sm:$0x1f] %vm28, %v1755
  %1759 = vrot.lane.b32.xlu0 %v1746, 96
  %v1760 = vpop.permute.xlu0 %1759
  %s1762 = scalar_lea.vmem %s7, 48
  %1763 = vst.msk [vmem:[%s1762] sm:$0x1f] %vm28, %v1760
  %v1764 = vld [vmem:[#allocation3] sm:$0x1f]
  %s1765 = scalar_lea.vmem %s1, 8
  %v1766 = vld [vmem:[%s1765] sm:$0x1f]
  %v1768 = vsel %vm50, %v1764, 0
  %1770 = vmatprep.subr.mxu0 0.0
  %1771 = vmatpush1.msra.mxu0 0.0
  %1772 = vmatprep.subr.mxu0 0.0
  %1773 = vmatpush1.msra.mxu0 0.0
  %1774 = vmatprep.subr.mxu0 0.0
  %1775 = vmatpush1.msra.mxu0 0.0
  %1776 = vmatprep.subr.mxu0 0.0
  %1777 = vmatpush1.msra.mxu0 0.0
  %1778 = vmatprep.subr.mxu0 0.0
  %1779 = vmatpush1.msra.mxu0 0.0
  %1780 = vmatprep.subr.mxu0 0.0
  %1781 = vmatpush1.msra.mxu0 0.0
  %1782 = vmatprep.subr.mxu0 0.0
  %1783 = vmatpush1.msra.mxu0 0.0
  %1784 = vmatprep.subr.mxu0 0.0
  %1785 = vmatpush1.msra.mxu0 0.0
  %1786 = vmatprep.subr.mxu0 0.0
  %1787 = vmatpush1.msra.mxu0 0.0
  %1788 = vmatprep.subr.mxu0 0.0
  %1789 = vmatpush1.msra.mxu0 0.0
  %1790 = vmatprep.subr.mxu0 0.0
  %1791 = vmatpush1.msra.mxu0 0.0
  %1792 = vmatprep.subr.mxu0 0.0
  %1793 = vmatpush1.msra.mxu0 0.0
  %1794 = vmatprep.subr.mxu0 0.0
  %1795 = vmatpush1.msra.mxu0 %v39
  %1796 = vmatprep.subr.mxu0 0.0
  %1797 = vmatpush1.msra.mxu0 %v38
  %1798 = vmatprep.subr.mxu0 0.0
  %1799 = vmatpush1.msra.mxu0 %v37
  %1800 = vmatprep.subr.mxu0 0.0
  %1801 = vmatpush1.msra.mxu0 %v36
  %1802 = vmatprep.subr.mxu0 0.0
  %1803 = vmatpush2.msra.mxu0 0.0
  %1804 = vmatprep.subr.mxu0 0.0
  %1805 = vmatpush2.msra.mxu0 0.0
  %1806 = vmatprep.subr.mxu0 0.0
  %1807 = vmatpush2.msra.mxu0 0.0
  %1808 = vmatprep.subr.mxu0 0.0
  %1809 = vmatpush2.msra.mxu0 0.0
  %1810 = vmatprep.subr.mxu0 0.0
  %1811 = vmatpush2.msra.mxu0 0.0
  %1812 = vmatprep.subr.mxu0 0.0
  %1813 = vmatpush2.msra.mxu0 0.0
  %1814 = vmatprep.subr.mxu0 0.0
  %1815 = vmatpush2.msra.mxu0 0.0
  %1816 = vmatprep.subr.mxu0 0.0
  %1817 = vmatpush2.msra.mxu0 0.0
  %1818 = vmatprep.subr.mxu0 0.0
  %1819 = vmatpush2.msra.mxu0 0.0
  %1820 = vmatprep.subr.mxu0 0.0
  %1821 = vmatpush2.msra.mxu0 0.0
  %1822 = vmatprep.subr.mxu0 0.0
  %1823 = vmatpush2.msra.mxu0 0.0
  %1824 = vmatprep.subr.mxu0 0.0
  %1825 = vmatpush2.msra.mxu0 0.0
  %1826 = vmatprep.subr.mxu0 0.0
  %1827 = vmatpush2.msra.mxu0 0.0
  %1828 = vmatprep.subr.mxu0 0.0
  %1829 = vmatpush2.msra.mxu0 0.0
  %1830 = vmatprep.subr.mxu0 0.0
  %1831 = vmatpush2.msra.mxu0 0.0
  %1832 = vmatprep.subr.mxu0 0.0
  %1833 = vmatpush2.msra.mxu0 0.0
  %1834 = vmatprep.mubr.f32.mxu0 0.0
  %1835 = vmatmul.mubr.f32.gmra.mxu0 %v1768
  %v1836 = vpop.f32.mrf.mxu0
  %v1837 = vadd.f32 %v191, %v1836
  %v1838 = vpop.f32.mrf.mxu0
  %1839 = vdwg.mxu0
  %v1840 = vadd.f32 %v1766, %v1837
  %v1841 = vxor.u32 %v1840, 2147483648
  %v1842 = vmul.f32 %v1841, 1.442695
  %v1843 = vpow.pop %v1842
  %v1844 = vadd.f32 %v1843, 1.0
  %v1845 = vrcp.pop %v1844
  %v1846 = vmul.f32 1.0, %v1845
  %1848 = vrot.lane.b32.xlu0 %v1837, 64
  %v1849 = vpop.permute.xlu0 %1848
  %v1851 = vmul.f32 %v1846, %v1849
  %1853 = vrot.lane.b32.xlu0 %v1851, 64
  %v1854 = vpop.permute.xlu0 %1853
  %v1856 = vadd.f32 %v1766, %v1854
  %v1857 = vtanh.pop %v1856
  %v1858 = vsub.f32 1.0, %v1846
  %1860 = vrot.lane.b32.xlu0 %v1857, 96
  %v1861 = vpop.permute.xlu0 %1860
  %v1863 = vmul.f32 %v1858, %v1861
  %1864 = vrot.lane.b32.xlu0 %v1764, 32
  %v1865 = vpop.permute.xlu0 %1864
  %v1867 = vmul.f32 %v1846, %v1865
  %v1868 = vadd.f32 %v1863, %v1867
  %v1869 = vmul.f32 %v438, %v1868
  %v1870 = vmul.f32 %v445, %v1764
  %1872 = vrot.lane.b32.xlu0 %v1870, 32
  %v1873 = vpop.permute.xlu0 %1872
  %v1875 = vadd.f32 %v1869, %v1873
  %1877 = vrot.lane.b32.xlu0 %v1875, 96
  %v1878 = vpop.permute.xlu0 %1877
  %1880 = vst.msk [vmem:[#allocation3] sm:$0x1f] %vm28, %v1878
  %1882 = vrot.lane.b32.xlu0 %v1869, 96
  %v1883 = vpop.permute.xlu0 %1882
  %s1885 = scalar_lea.vmem %s8, 8
  %1886 = vst.msk [vmem:[%s1885] sm:$0x1f] %vm28, %v1883
  %v1887 = vld [vmem:[#allocation2] sm:$0x1f]
  %s1888 = scalar_lea.vmem %s0, 56
  %v1889 = vld [vmem:[%s1888] sm:$0x1f]
  %v1891 = vsel %vm50, %v1887, 0
  %1893 = vmatprep.subr.mxu0 0.0
  %1894 = vmatpush1.msra.mxu0 0.0
  %1895 = vmatprep.subr.mxu0 0.0
  %1896 = vmatpush1.msra.mxu0 0.0
  %1897 = vmatprep.subr.mxu0 0.0
  %1898 = vmatpush1.msra.mxu0 0.0
  %1899 = vmatprep.subr.mxu0 0.0
  %1900 = vmatpush1.msra.mxu0 0.0
  %1901 = vmatprep.subr.mxu0 0.0
  %1902 = vmatpush1.msra.mxu0 0.0
  %1903 = vmatprep.subr.mxu0 0.0
  %1904 = vmatpush1.msra.mxu0 0.0
  %1905 = vmatprep.subr.mxu0 0.0
  %1906 = vmatpush1.msra.mxu0 0.0
  %1907 = vmatprep.subr.mxu0 0.0
  %1908 = vmatpush1.msra.mxu0 0.0
  %1909 = vmatprep.subr.mxu0 0.0
  %1910 = vmatpush1.msra.mxu0 0.0
  %1911 = vmatprep.subr.mxu0 0.0
  %1912 = vmatpush1.msra.mxu0 0.0
  %1913 = vmatprep.subr.mxu0 0.0
  %1914 = vmatpush1.msra.mxu0 0.0
  %1915 = vmatprep.subr.mxu0 0.0
  %1916 = vmatpush1.msra.mxu0 0.0
  %1917 = vmatprep.subr.mxu0 0.0
  %1918 = vmatpush1.msra.mxu0 %v35
  %1919 = vmatprep.subr.mxu0 0.0
  %1920 = vmatpush1.msra.mxu0 %v34
  %1921 = vmatprep.subr.mxu0 0.0
  %1922 = vmatpush1.msra.mxu0 %v33
  %1923 = vmatprep.subr.mxu0 0.0
  %1924 = vmatpush1.msra.mxu0 %v32
  %1925 = vmatprep.subr.mxu0 0.0
  %1926 = vmatpush2.msra.mxu0 0.0
  %1927 = vmatprep.subr.mxu0 0.0
  %1928 = vmatpush2.msra.mxu0 0.0
  %1929 = vmatprep.subr.mxu0 0.0
  %1930 = vmatpush2.msra.mxu0 0.0
  %1931 = vmatprep.subr.mxu0 0.0
  %1932 = vmatpush2.msra.mxu0 0.0
  %1933 = vmatprep.subr.mxu0 0.0
  %1934 = vmatpush2.msra.mxu0 0.0
  %1935 = vmatprep.subr.mxu0 0.0
  %1936 = vmatpush2.msra.mxu0 0.0
  %1937 = vmatprep.subr.mxu0 0.0
  %1938 = vmatpush2.msra.mxu0 0.0
  %1939 = vmatprep.subr.mxu0 0.0
  %1940 = vmatpush2.msra.mxu0 0.0
  %1941 = vmatprep.subr.mxu0 0.0
  %1942 = vmatpush2.msra.mxu0 0.0
  %1943 = vmatprep.subr.mxu0 0.0
  %1944 = vmatpush2.msra.mxu0 0.0
  %1945 = vmatprep.subr.mxu0 0.0
  %1946 = vmatpush2.msra.mxu0 0.0
  %1947 = vmatprep.subr.mxu0 0.0
  %1948 = vmatpush2.msra.mxu0 0.0
  %1949 = vmatprep.subr.mxu0 0.0
  %1950 = vmatpush2.msra.mxu0 0.0
  %1951 = vmatprep.subr.mxu0 0.0
  %1952 = vmatpush2.msra.mxu0 0.0
  %1953 = vmatprep.subr.mxu0 0.0
  %1954 = vmatpush2.msra.mxu0 0.0
  %1955 = vmatprep.subr.mxu0 0.0
  %1956 = vmatpush2.msra.mxu0 0.0
  %1957 = vmatprep.mubr.f32.mxu0 0.0
  %1958 = vmatmul.mubr.f32.gmra.mxu0 %v1891
  %v1959 = vpop.f32.mrf.mxu0
  %v1960 = vadd.f32 %v48, %v1959
  %v1961 = vpop.f32.mrf.mxu0
  %1962 = vdwg.mxu0
  %v1963 = vadd.f32 %v1889, %v1960
  %v1964 = vxor.u32 %v1963, 2147483648
  %v1965 = vmul.f32 %v1964, 1.442695
  %v1966 = vpow.pop %v1965
  %v1967 = vadd.f32 %v1966, 1.0
  %v1968 = vrcp.pop %v1967
  %v1969 = vmul.f32 1.0, %v1968
  %1971 = vrot.lane.b32.xlu0 %v1960, 64
  %v1972 = vpop.permute.xlu0 %1971
  %v1974 = vmul.f32 %v1969, %v1972
  %1976 = vrot.lane.b32.xlu0 %v1974, 64
  %v1977 = vpop.permute.xlu0 %1976
  %v1979 = vadd.f32 %v1889, %v1977
  %v1980 = vtanh.pop %v1979
  %v1981 = vsub.f32 1.0, %v1969
  %1983 = vrot.lane.b32.xlu0 %v1980, 96
  %v1984 = vpop.permute.xlu0 %1983
  %v1986 = vmul.f32 %v1981, %v1984
  %1987 = vrot.lane.b32.xlu0 %v1887, 32
  %v1988 = vpop.permute.xlu0 %1987
  %v1990 = vmul.f32 %v1969, %v1988
  %v1991 = vadd.f32 %v1986, %v1990
  %v1992 = vmul.f32 %v301, %v1991
  %v1993 = vmul.f32 %v308, %v1887
  %1995 = vrot.lane.b32.xlu0 %v1993, 32
  %v1996 = vpop.permute.xlu0 %1995
  %v1998 = vadd.f32 %v1992, %v1996
  %2000 = vrot.lane.b32.xlu0 %v1998, 96
  %v2001 = vpop.permute.xlu0 %2000
  %2003 = vst.msk [vmem:[#allocation2] sm:$0x1f] %vm28, %v2001
  %2005 = vrot.lane.b32.xlu0 %v1992, 96
  %v2006 = vpop.permute.xlu0 %2005
  %s2008 = scalar_lea.vmem %s7, 56
  %2009 = vst.msk [vmem:[%s2008] sm:$0x1f] %vm28, %v2006
  %v2010 = vld [vmem:[#allocation3] sm:$0x1f]
  %v2011 = vld [vmem:[%s1] sm:$0x1f]
  %v2013 = vsel %vm50, %v2010, 0
  %2015 = vmatprep.subr.mxu0 0.0
  %2016 = vmatpush1.msra.mxu0 0.0
  %2017 = vmatprep.subr.mxu0 0.0
  %2018 = vmatpush1.msra.mxu0 0.0
  %2019 = vmatprep.subr.mxu0 0.0
  %2020 = vmatpush1.msra.mxu0 0.0
  %2021 = vmatprep.subr.mxu0 0.0
  %2022 = vmatpush1.msra.mxu0 0.0
  %2023 = vmatprep.subr.mxu0 0.0
  %2024 = vmatpush1.msra.mxu0 0.0
  %2025 = vmatprep.subr.mxu0 0.0
  %2026 = vmatpush1.msra.mxu0 0.0
  %2027 = vmatprep.subr.mxu0 0.0
  %2028 = vmatpush1.msra.mxu0 0.0
  %2029 = vmatprep.subr.mxu0 0.0
  %2030 = vmatpush1.msra.mxu0 0.0
  %2031 = vmatprep.subr.mxu0 0.0
  %2032 = vmatpush1.msra.mxu0 0.0
  %2033 = vmatprep.subr.mxu0 0.0
  %2034 = vmatpush1.msra.mxu0 0.0
  %2035 = vmatprep.subr.mxu0 0.0
  %2036 = vmatpush1.msra.mxu0 0.0
  %2037 = vmatprep.subr.mxu0 0.0
  %2038 = vmatpush1.msra.mxu0 0.0
  %2039 = vmatprep.subr.mxu0 0.0
  %2040 = vmatpush1.msra.mxu0 %v39
  %2041 = vmatprep.subr.mxu0 0.0
  %2042 = vmatpush1.msra.mxu0 %v38
  %2043 = vmatprep.subr.mxu0 0.0
  %2044 = vmatpush1.msra.mxu0 %v37
  %2045 = vmatprep.subr.mxu0 0.0
  %2046 = vmatpush1.msra.mxu0 %v36
  %2047 = vmatprep.subr.mxu0 0.0
  %2048 = vmatpush2.msra.mxu0 0.0
  %2049 = vmatprep.subr.mxu0 0.0
  %2050 = vmatpush2.msra.mxu0 0.0
  %2051 = vmatprep.subr.mxu0 0.0
  %2052 = vmatpush2.msra.mxu0 0.0
  %2053 = vmatprep.subr.mxu0 0.0
  %2054 = vmatpush2.msra.mxu0 0.0
  %2055 = vmatprep.subr.mxu0 0.0
  %2056 = vmatpush2.msra.mxu0 0.0
  %2057 = vmatprep.subr.mxu0 0.0
  %2058 = vmatpush2.msra.mxu0 0.0
  %2059 = vmatprep.subr.mxu0 0.0
  %2060 = vmatpush2.msra.mxu0 0.0
  %2061 = vmatprep.subr.mxu0 0.0
  %2062 = vmatpush2.msra.mxu0 0.0
  %2063 = vmatprep.subr.mxu0 0.0
  %2064 = vmatpush2.msra.mxu0 0.0
  %2065 = vmatprep.subr.mxu0 0.0
  %2066 = vmatpush2.msra.mxu0 0.0
  %2067 = vmatprep.subr.mxu0 0.0
  %2068 = vmatpush2.msra.mxu0 0.0
  %2069 = vmatprep.subr.mxu0 0.0
  %2070 = vmatpush2.msra.mxu0 0.0
  %2071 = vmatprep.subr.mxu0 0.0
  %2072 = vmatpush2.msra.mxu0 0.0
  %2073 = vmatprep.subr.mxu0 0.0
  %2074 = vmatpush2.msra.mxu0 0.0
  %2075 = vmatprep.subr.mxu0 0.0
  %2076 = vmatpush2.msra.mxu0 0.0
  %2077 = vmatprep.subr.mxu0 0.0
  %2078 = vmatpush2.msra.mxu0 0.0
  %2079 = vmatprep.mubr.f32.mxu0 0.0
  %2080 = vmatmul.mubr.f32.gmra.mxu0 %v2013
  %v2081 = vpop.f32.mrf.mxu0
  %v2082 = vadd.f32 %v191, %v2081
  %v2083 = vpop.f32.mrf.mxu0
  %2084 = vdwg.mxu0
  %v2085 = vadd.f32 %v2011, %v2082
  %v2086 = vxor.u32 %v2085, 2147483648
  %v2087 = vmul.f32 %v2086, 1.442695
  %v2088 = vpow.pop %v2087
  %v2089 = vadd.f32 %v2088, 1.0
  %v2090 = vrcp.pop %v2089
  %v2091 = vmul.f32 1.0, %v2090
  %2093 = vrot.lane.b32.xlu0 %v2082, 64
  %v2094 = vpop.permute.xlu0 %2093
  %v2096 = vmul.f32 %v2091, %v2094
  %2098 = vrot.lane.b32.xlu0 %v2096, 64
  %v2099 = vpop.permute.xlu0 %2098
  %v2101 = vadd.f32 %v2011, %v2099
  %v2102 = vtanh.pop %v2101
  %v2103 = vsub.f32 1.0, %v2091
  %2105 = vrot.lane.b32.xlu0 %v2102, 96
  %v2106 = vpop.permute.xlu0 %2105
  %v2108 = vmul.f32 %v2103, %v2106
  %2109 = vrot.lane.b32.xlu0 %v2010, 32
  %v2110 = vpop.permute.xlu0 %2109
  %v2112 = vmul.f32 %v2091, %v2110
  %v2113 = vadd.f32 %v2108, %v2112
  %v2114 = vmul.f32 %v159, %v2113
  %v2115 = vmul.f32 %v166, %v2010
  %2117 = vrot.lane.b32.xlu0 %v2115, 32
  %v2118 = vpop.permute.xlu0 %2117
  %v2120 = vadd.f32 %v2114, %v2118
  %2122 = vrot.lane.b32.xlu0 %v2120, 96
  %v2123 = vpop.permute.xlu0 %2122
  %2125 = vst.msk [vmem:[#allocation3] sm:$0x1f] %vm28, %v2123
  %2127 = vrot.lane.b32.xlu0 %v2114, 96
  %v2128 = vpop.permute.xlu0 %2127
  %2130 = vst.msk [vmem:[%s8] sm:$0x1f] %vm28, %v2128
  // Predicated region
  $region30: #{tpu_custom_call.1} parent=0 // pred_check
    _
  $region31: #{tpu_custom_call.1} parent=0 // pred_check_branch
    %2132 = sbr.rel (0) target = $region33
  $region32: #{tpu_custom_call.1} parent=0 // pred_region
    _
  $region33: #{tpu_custom_call.1} parent=0 // pred_fallthru
    _
  // Predicated region
  $region34: #{tpu_custom_call.1} parent=0 // pred_check
    _
  $region35: #{tpu_custom_call.1} parent=0 // pred_check_branch
    %2134 = sbr.rel (0) target = $region37
  $region36: #{tpu_custom_call.1} parent=0 // pred_region
    _
  $region37: #{tpu_custom_call.1} parent=0 // pred_fallthru
    _
  // Predicated region
  $region38: #{tpu_custom_call.1} parent=0 // pred_check
    _
  $region39: #{tpu_custom_call.1} parent=0 // pred_check_branch
    %2136 = sbr.rel (0) target = $region41
  $region40: #{tpu_custom_call.1} parent=0 // pred_region
    _
  $region41: #{tpu_custom_call.1} parent=0 // pred_fallthru
    _
  // Predicated region
  $region42: #{tpu_custom_call.1} parent=0 // pred_check
    _
  $region43: #{tpu_custom_call.1} parent=0 // pred_check_branch
    %2138 = sbr.rel (0) target = $region45
  $region44: #{tpu_custom_call.1} parent=0 // pred_region
    _
  $region45: #{tpu_custom_call.1} parent=0 // pred_fallthru
    _

</llo_original>
